<compile_context>
chip_gen: v7x
topology: tpu7x:2x2x1
jax: 0.10.0
libtpu: 0.0.40
codegen_flags: <defaults>
</compile_context>

<pallas_src>
import math

import jax
import jax.numpy as jnp
from jax.experimental import pallas as pl
from jax.experimental.pallas import tpu as pltpu

# ---- small, TPU-friendly problem sizes (consistent with the module) ----
ROBOT_DIM = 7
OBJECT_DIM = 9
INPUT_DIM = 2 * (ROBOT_DIM + OBJECT_DIM)   # 32
HIDDEN = 32
N_BLOCKS = 2
N_HEADS = 4
HEAD_DIM = HIDDEN // N_HEADS               # 8
N_OBJECT = 8
BATCH = 2
LN_EPS = 1e-5

_VEC_EMBED_ROWS = 3        # be, ge, bbe
_VEC_ROWS_PER_BLOCK = 7    # b_out, b1, b2, g1, bb1, g2, bb2


def _layernorm(x, gamma, beta):
    mu = jnp.mean(x, axis=-1, keepdims=True)
    var = jnp.mean((x - mu) ** 2, axis=-1, keepdims=True)
    return (x - mu) * jax.lax.rsqrt(var + LN_EPS) * gamma + beta


def gcsa_kernel(x_ref, we_ref, wproj_ref, w1_ref, w2_ref, bproj_ref, vecs_ref,
                o_ref):
    """x_ref: [B*N, INPUT_DIM] -> o_ref: [B, HIDDEN]."""
    H, DH, NH = HIDDEN, HEAD_DIM, N_HEADS
    B, N = BATCH, N_OBJECT
    scale = 1.0 / math.sqrt(DH)

    x = x_ref[...]                                            # [BN, Din] (f32)

    # ---- embed: Linear + LayerNorm (one 2-D MXU matmul) ----
    feat = jnp.dot(x, we_ref[...], preferred_element_type=jnp.float32)
    feat = feat + vecs_ref[0][None, :]
    feat = _layernorm(feat, vecs_ref[1][None, :], vecs_ref[2][None, :])

    # ---- attention blocks (statically unrolled) ----
    for i in range(N_BLOCKS):
        base = _VEC_EMBED_ROWS + _VEC_ROWS_PER_BLOCK * i

        # fused projection: [BN, H] x [H, 2H + NH*H]  ->  Q | K | (V.Wd per head)
        proj = jnp.dot(feat, wproj_ref[i], preferred_element_type=jnp.float32)
        proj = proj + bproj_ref[i][None, :]                   # [BN, 192]
        proj3 = proj.reshape(B, N, 2 * H + NH * H)            # [B, N, 192]

        # head-batched layout: leading dim = h * B + b  (head-major)
        q_bh = jnp.concatenate(
            [proj3[:, :, h * DH:(h + 1) * DH] for h in range(NH)], axis=0)
        k_bh = jnp.concatenate(
            [proj3[:, :, H + h * DH: H + (h + 1) * DH] for h in range(NH)], axis=0)
        vd_bh = jnp.concatenate(
            [proj3[:, :, 2 * H + h * H: 2 * H + (h + 1) * H] for h in range(NH)],
            axis=0)                                           # [B*NH, N, H]

        # single batched attention (batch = B*NH = 8): 2 einsums, 2 reductions
        s = jnp.einsum('bnd,bmd->bnm', q_bh, k_bh,
                       preferred_element_type=jnp.float32) * scale
        s = s - jnp.max(s, axis=-1, keepdims=True)
        e = jnp.exp(s)
        a = e / jnp.sum(e, axis=-1, keepdims=True)            # exact softmax
        o_bh = jnp.einsum('bnm,bmf->bnf', a, vd_bh,
                          preferred_element_type=jnp.float32)  # [B*NH, N, H]

        # sum head contributions (cheap batch-axis slices) + fused output bias
        parts = [o_bh[h * B:(h + 1) * B] for h in range(NH)]
        attn3 = parts[0]
        for pth in parts[1:]:
            attn3 = attn3 + pth                               # [B, N, H]
        attn = attn3.reshape(B * N, H) + vecs_ref[base + 0][None, :]

        # residual + LayerNorm
        out1 = _layernorm(feat + attn,
                          vecs_ref[base + 3][None, :], vecs_ref[base + 4][None, :])

        # FFN (Linear -> ReLU -> Linear) + residual + LayerNorm
        ffn = jnp.dot(out1, w1_ref[i],
                      preferred_element_type=jnp.float32) + vecs_ref[base + 1][None, :]
        ffn = jnp.maximum(ffn, 0.0)
        ffn = jnp.dot(ffn, w2_ref[i],
                      preferred_element_type=jnp.float32) + vecs_ref[base + 2][None, :]

        feat = _layernorm(out1 + ffn,
                          vecs_ref[base + 5][None, :], vecs_ref[base + 6][None, :])

    # ---- mean over objects ----
    o_ref[...] = jnp.mean(feat.reshape(B, N, H), axis=1)


# ---------------- parameters ----------------
def _init_linear(key, fan_in, fan_out):
    k1, k2 = jax.random.split(key)
    bound = 1.0 / math.sqrt(fan_in)
    w = jax.random.uniform(k1, (fan_in, fan_out), jnp.float32, -bound, bound)
    b = jax.random.uniform(k2, (fan_out,), jnp.float32, -bound, bound)
    return w, b


def make_params(key):
    keys = jax.random.split(key, 1 + 6 * N_BLOCKS)
    we, be = _init_linear(keys[0], INPUT_DIM, HIDDEN)
    p = {'we': we, 'be': be,
         'ge': jnp.ones((HIDDEN,), jnp.float32),
         'bbe': jnp.zeros((HIDDEN,), jnp.float32)}

    def stack(off):
        ws, bs = [], []
        for blk in range(N_BLOCKS):
            w, b = _init_linear(keys[1 + 6 * blk + off], HIDDEN, HIDDEN)
            ws.append(w)
            bs.append(b)
        return jnp.stack(ws), jnp.stack(bs)

    p['wq'], p['bq'] = stack(0)
    p['wk'], p['bk'] = stack(1)
    p['wv'], p['bv'] = stack(2)
    p['wd'], p['bd'] = stack(3)
    p['w1'], p['b1'] = stack(4)
    p['w2'], p['b2'] = stack(5)
    for n in ('g1', 'g2'):
        p[n] = jnp.ones((N_BLOCKS, HIDDEN), jnp.float32)
    for n in ('bb1', 'bb2'):
        p[n] = jnp.zeros((N_BLOCKS, HIDDEN), jnp.float32)
    return p


def pack_params(p):
    """Pack the 21 per-layer tensors into 6 contiguous slabs.

    Per block, Wv and Wd are algebraically prefused per head:
        W_vd[h] = Wv[:, h*DH:(h+1)*DH] @ Wd[h*DH:(h+1)*DH, :]     -> [H, NH*H]
        b_out   = bd + bv @ Wd
    (Exact because softmax rows sum to 1, so the V bias passes straight
    through the attention average into the dense projection.)
    """
    H, DH, NH = HIDDEN, HEAD_DIM, N_HEADS
    wvd_list, bout_list = [], []
    for i in range(N_BLOCKS):
        wvd_heads = [p['wv'][i][:, h * DH:(h + 1) * DH]
                     @ p['wd'][i][h * DH:(h + 1) * DH, :] for h in range(NH)]
        wvd_list.append(jnp.concatenate(wvd_heads, axis=-1))            # [H, NH*H]
        bout_list.append(p['bd'][i] + p['bv'][i] @ p['wd'][i])          # [H]
    w_vd = jnp.stack(wvd_list)                                          # [NB, H, NH*H]
    w_proj = jnp.concatenate([p['wq'], p['wk'], w_vd], axis=-1)         # [NB, H, 2H+NH*H]
    b_proj = jnp.concatenate(
        [p['bq'], p['bk'], jnp.zeros((N_BLOCKS, NH * H), jnp.float32)],
        axis=-1)                                                        # [NB, 2H+NH*H]

    rows = [p['be'], p['ge'], p['bbe']]
    for i in range(N_BLOCKS):
        rows += [bout_list[i], p['b1'][i], p['b2'][i],
                 p['g1'][i], p['bb1'][i], p['g2'][i], p['bb2'][i]]
    vecs = jnp.stack(rows)                                              # [3+7*NB, H]
    return p['we'], w_proj, p['w1'], p['w2'], b_proj, vecs


# ---------------- forward wrappers ----------------
def _build_concat_obs(robot_obs, object_obs, robot_goals, object_goals):
    n_object = object_obs.shape[1]
    return jnp.concatenate(
        [jnp.repeat(robot_obs[:, None, :], n_object, axis=1),
         object_obs,
         jnp.repeat(robot_goals[:, None, :], n_object, axis=1),
         object_goals], axis=-1)                                        # [B, N, Din]


def gcsa_forward(robot_obs, object_obs, robot_goals, object_goals, p):
    x = _build_concat_obs(robot_obs, object_obs, robot_goals, object_goals)
    B, n_object, din = x.shape
    x2 = x.reshape(B * n_object, din)                                   # flatten (B, N)
    we, w_proj, w1, w2, b_proj, vecs = pack_params(p)
    args = (x2, we, w_proj, w1, w2, b_proj, vecs)

    # Gridless single invocation (B=2): all slabs + activations < 100 KB VMEM.
    # TODO(synk): for large batches, switch to grid=(pl.cdiv(B, Bt),) over the
    # flattened (B, N) axis with dimension_semantics=("parallel",) and constant
    # index_maps on the weight slabs (see header comment).
    return pl.pallas_call(
        gcsa_kernel,
        out_shape=jax.ShapeDtypeStruct((B, HIDDEN), jnp.float32),
        in_specs=[pl.BlockSpec(memory_space=pltpu.MemorySpace.VMEM)] * len(args),
        out_specs=pl.BlockSpec(memory_space=pltpu.MemorySpace.VMEM),
    )(*args)


# ---------------- pure-JAX reference (mirrors the PyTorch forward) ----------------
def gcsa_reference(robot_obs, object_obs, robot_goals, object_goals, p):
    x = _build_concat_obs(robot_obs, object_obs, robot_goals, object_goals)

    def ln(v, g, b):
        mu = jnp.mean(v, -1, keepdims=True)
        var = jnp.mean((v - mu) ** 2, -1, keepdims=True)
        return (v - mu) / jnp.sqrt(var + LN_EPS) * g + b

    feat = ln(x @ p['we'] + p['be'], p['ge'], p['bbe'])
    B, N, H = feat.shape
    dh = H // N_HEADS
    for i in range(N_BLOCKS):
        q = feat @ p['wq'][i] + p['bq'][i]
        k = feat @ p['wk'][i] + p['bk'][i]
        v = feat @ p['wv'][i] + p['bv'][i]
        qh = q.reshape(B, N, N_HEADS, dh).transpose(0, 2, 1, 3)
        kh = k.reshape(B, N, N_HEADS, dh).transpose(0, 2, 1, 3)
        vh = v.reshape(B, N, N_HEADS, dh).transpose(0, 2, 1, 3)
        s = jnp.einsum('bhnd,bhmd->bhnm', qh, kh) / math.sqrt(dh)
        w = jax.nn.softmax(s, axis=-1)
        a = jnp.einsum('bhnm,bhmd->bhnd', w, vh)
        a = a.transpose(0, 2, 1, 3).reshape(B, N, H)
        a = a @ p['wd'][i] + p['bd'][i]
        out1 = ln(feat + a, p['g1'][i], p['bb1'][i])
        ffn = jnp.maximum(out1 @ p['w1'][i] + p['b1'][i], 0.0)
        ffn = ffn @ p['w2'][i] + p['b2'][i]
        feat = ln(out1 + ffn, p['g2'][i], p['bb2'][i])
    return jnp.mean(feat, axis=1)


if __name__ == "__main__":
    key = jax.random.PRNGKey(0)
    kp, k1, k2, k3, k4 = jax.random.split(key, 5)
    params = make_params(kp)

    robot_obs = jax.random.normal(k1, (BATCH, ROBOT_DIM), jnp.float32)
    object_obs = jax.random.normal(k2, (BATCH, N_OBJECT, OBJECT_DIM), jnp.float32)
    robot_goals = jax.random.normal(k3, (BATCH, ROBOT_DIM), jnp.float32)
    object_goals = jax.random.normal(k4, (BATCH, N_OBJECT, OBJECT_DIM), jnp.float32)

    out = gcsa_forward(robot_obs, object_obs, robot_goals, object_goals, params)
    out = jax.block_until_ready(out)

    ref = gcsa_reference(robot_obs, object_obs, robot_goals, object_goals, params)
    assert out.shape == (BATCH, HIDDEN)
    max_err = jnp.max(jnp.abs(out - ref))
    # Exact softmax restored -> tight tolerance again (only f32 rounding /
    # associativity from the Wv.Wd prefusion remains).
    assert jnp.allclose(out, ref, atol=1e-4, rtol=1e-4), f"max abs err {max_err}"

    print("KERNEL_OK")
</pallas_src>

<mosaic_0001>
module attributes {stable_mosaic.version = 11 : i64} {
  func.func @gcsa_kernel(%arg0: memref<16x32xf32, #tpu.memory_space<vmem>>, %arg1: memref<32x32xf32, #tpu.memory_space<vmem>>, %arg2: memref<2x32x192xf32, #tpu.memory_space<vmem>>, %arg3: memref<2x32x32xf32, #tpu.memory_space<vmem>>, %arg4: memref<2x32x32xf32, #tpu.memory_space<vmem>>, %arg5: memref<2x192xf32, #tpu.memory_space<vmem>>, %arg6: memref<17x32xf32, #tpu.memory_space<vmem>>, %arg7: memref<2x32xf32, #tpu.memory_space<vmem>>) attributes {dimension_semantics = [], scalar_prefetch = 0 : i64, scratch_operands = 0 : i64, tpu.core_type = #tpu.core_type<tc>} {
    %c0 = arith.constant 0 : index
    %c0_0 = arith.constant 0 : index
    %0 = vector.load %arg0[%c0, %c0_0] : memref<16x32xf32, #tpu.memory_space<vmem>>, vector<16x32xf32>
    %c0_1 = arith.constant 0 : index
    %c0_2 = arith.constant 0 : index
    %1 = vector.load %arg1[%c0_1, %c0_2] : memref<32x32xf32, #tpu.memory_space<vmem>>, vector<32x32xf32>
    %cst = arith.constant dense<0.000000e+00> : vector<16x32xf32>
    %2 = tpu.matmul %0, %1, %cst {dimension_numbers = #tpu.dot_dimension_numbers<[1], [0], [0], [1], [0, 0, 1, 1], [], []>} : vector<16x32xf32>, vector<32x32xf32>, vector<16x32xf32> -> vector<16x32xf32>
    %c0_3 = arith.constant 0 : index
    %c0_4 = arith.constant 0 : index
    %3 = vector.load %arg6[%c0_3, %c0_4] : memref<17x32xf32, #tpu.memory_space<vmem>>, vector<1x32xf32>
    %4 = vector.shape_cast %3 : vector<1x32xf32> to vector<32xf32>
    %5 = vector.shape_cast %4 : vector<32xf32> to vector<1x32xf32>
    %6 = vector.broadcast %5 : vector<1x32xf32> to vector<16x32xf32>
    %7 = arith.addf %2, %6 : vector<16x32xf32>
    %c1 = arith.constant 1 : index
    %c0_5 = arith.constant 0 : index
    %8 = vector.load %arg6[%c1, %c0_5] : memref<17x32xf32, #tpu.memory_space<vmem>>, vector<1x32xf32>
    %9 = vector.shape_cast %8 : vector<1x32xf32> to vector<32xf32>
    %10 = vector.shape_cast %9 : vector<32xf32> to vector<1x32xf32>
    %c2 = arith.constant 2 : index
    %c0_6 = arith.constant 0 : index
    %11 = vector.load %arg6[%c2, %c0_6] : memref<17x32xf32, #tpu.memory_space<vmem>>, vector<1x32xf32>
    %12 = vector.shape_cast %11 : vector<1x32xf32> to vector<32xf32>
    %13 = vector.shape_cast %12 : vector<32xf32> to vector<1x32xf32>
    %cst_7 = arith.constant dense<0.000000e+00> : vector<16xf32>
    %14 = vector.multi_reduction <add>, %7, %cst_7 [1] : vector<16x32xf32> to vector<16xf32>
    %15 = vector.shape_cast %14 : vector<16xf32> to vector<16x1xf32>
    %cst_8 = arith.constant 3.200000e+01 : f32
    %16 = vector.broadcast %cst_8 : f32 to vector<16x1xf32>
    %17 = arith.divf %15, %16 : vector<16x1xf32>
    %18 = vector.broadcast %17 : vector<16x1xf32> to vector<16x32xf32>
    %19 = arith.subf %7, %18 : vector<16x32xf32>
    %20 = arith.mulf %19, %19 : vector<16x32xf32>
    %cst_9 = arith.constant dense<0.000000e+00> : vector<16xf32>
    %21 = vector.multi_reduction <add>, %20, %cst_9 [1] : vector<16x32xf32> to vector<16xf32>
    %22 = vector.shape_cast %21 : vector<16xf32> to vector<16x1xf32>
    %cst_10 = arith.constant 3.200000e+01 : f32
    %23 = vector.broadcast %cst_10 : f32 to vector<16x1xf32>
    %24 = arith.divf %22, %23 : vector<16x1xf32>
    %25 = vector.broadcast %17 : vector<16x1xf32> to vector<16x32xf32>
    %26 = arith.subf %7, %25 : vector<16x32xf32>
    %cst_11 = arith.constant 9.99999974E-6 : f32
    %27 = vector.broadcast %cst_11 : f32 to vector<16x1xf32>
    %28 = arith.addf %24, %27 : vector<16x1xf32>
    %29 = math.rsqrt %28 : vector<16x1xf32>
    %30 = vector.broadcast %29 : vector<16x1xf32> to vector<16x32xf32>
    %31 = arith.mulf %26, %30 : vector<16x32xf32>
    %32 = vector.broadcast %10 : vector<1x32xf32> to vector<16x32xf32>
    %33 = arith.mulf %31, %32 : vector<16x32xf32>
    %34 = vector.broadcast %13 : vector<1x32xf32> to vector<16x32xf32>
    %35 = arith.addf %33, %34 : vector<16x32xf32>
    %c0_12 = arith.constant 0 : index
    %c0_13 = arith.constant 0 : index
    %c0_14 = arith.constant 0 : index
    %36 = vector.load %arg2[%c0_12, %c0_13, %c0_14] : memref<2x32x192xf32, #tpu.memory_space<vmem>>, vector<1x32x192xf32>
    %37 = vector.shape_cast %36 : vector<1x32x192xf32> to vector<32x192xf32>
    %cst_15 = arith.constant dense<0.000000e+00> : vector<16x192xf32>
    %38 = tpu.matmul %35, %37, %cst_15 {dimension_numbers = #tpu.dot_dimension_numbers<[1], [0], [0], [1], [0, 0, 1, 1], [], []>} : vector<16x32xf32>, vector<32x192xf32>, vector<16x192xf32> -> vector<16x192xf32>
    %c0_16 = arith.constant 0 : index
    %c0_17 = arith.constant 0 : index
    %39 = vector.load %arg5[%c0_16, %c0_17] : memref<2x192xf32, #tpu.memory_space<vmem>>, vector<1x192xf32>
    %40 = vector.shape_cast %39 : vector<1x192xf32> to vector<192xf32>
    %41 = vector.shape_cast %40 : vector<192xf32> to vector<1x192xf32>
    %42 = vector.broadcast %41 : vector<1x192xf32> to vector<16x192xf32>
    %43 = arith.addf %38, %42 : vector<16x192xf32>
    %44 = vector.shape_cast %43 : vector<16x192xf32> to vector<2x8x192xf32>
    %45 = vector.extract_strided_slice %44 {offsets = [0, 0, 0], sizes = [2, 8, 8], strides = [1, 1, 1]} : vector<2x8x192xf32> to vector<2x8x8xf32>
    %46 = vector.extract_strided_slice %44 {offsets = [0, 0, 8], sizes = [2, 8, 8], strides = [1, 1, 1]} : vector<2x8x192xf32> to vector<2x8x8xf32>
    %47 = vector.extract_strided_slice %44 {offsets = [0, 0, 16], sizes = [2, 8, 8], strides = [1, 1, 1]} : vector<2x8x192xf32> to vector<2x8x8xf32>
    %48 = vector.extract_strided_slice %44 {offsets = [0, 0, 24], sizes = [2, 8, 8], strides = [1, 1, 1]} : vector<2x8x192xf32> to vector<2x8x8xf32>
    %49 = tpu.concatenate %45, %46, %47, %48 in 0 : vector<2x8x8xf32>, vector<2x8x8xf32>, vector<2x8x8xf32>, vector<2x8x8xf32> -> vector<8x8x8xf32>
    %50 = vector.extract_strided_slice %44 {offsets = [0, 0, 32], sizes = [2, 8, 8], strides = [1, 1, 1]} : vector<2x8x192xf32> to vector<2x8x8xf32>
    %51 = vector.extract_strided_slice %44 {offsets = [0, 0, 40], sizes = [2, 8, 8], strides = [1, 1, 1]} : vector<2x8x192xf32> to vector<2x8x8xf32>
    %52 = vector.extract_strided_slice %44 {offsets = [0, 0, 48], sizes = [2, 8, 8], strides = [1, 1, 1]} : vector<2x8x192xf32> to vector<2x8x8xf32>
    %53 = vector.extract_strided_slice %44 {offsets = [0, 0, 56], sizes = [2, 8, 8], strides = [1, 1, 1]} : vector<2x8x192xf32> to vector<2x8x8xf32>
    %54 = tpu.concatenate %50, %51, %52, %53 in 0 : vector<2x8x8xf32>, vector<2x8x8xf32>, vector<2x8x8xf32>, vector<2x8x8xf32> -> vector<8x8x8xf32>
    %55 = vector.extract_strided_slice %44 {offsets = [0, 0, 64], sizes = [2, 8, 32], strides = [1, 1, 1]} : vector<2x8x192xf32> to vector<2x8x32xf32>
    %56 = vector.extract_strided_slice %44 {offsets = [0, 0, 96], sizes = [2, 8, 32], strides = [1, 1, 1]} : vector<2x8x192xf32> to vector<2x8x32xf32>
    %57 = vector.extract_strided_slice %44 {offsets = [0, 0, 128], sizes = [2, 8, 32], strides = [1, 1, 1]} : vector<2x8x192xf32> to vector<2x8x32xf32>
    %58 = vector.extract_strided_slice %44 {offsets = [0, 0, 160], sizes = [2, 8, 32], strides = [1, 1, 1]} : vector<2x8x192xf32> to vector<2x8x32xf32>
    %59 = tpu.concatenate %55, %56, %57, %58 in 0 : vector<2x8x32xf32>, vector<2x8x32xf32>, vector<2x8x32xf32>, vector<2x8x32xf32> -> vector<8x8x32xf32>
    "tpu.trace_start"() <{level = 10 : i32, message = "bnd,bmd->bnm"}> : () -> ()
    %cst_18 = arith.constant dense<0.000000e+00> : vector<8x8x8xf32>
    %60 = tpu.matmul %49, %54, %cst_18 {dimension_numbers = #tpu.dot_dimension_numbers<[2], [2], [1], [1], [0, 0, 0, 1, 1, 1], [0], [0]>} : vector<8x8x8xf32>, vector<8x8x8xf32>, vector<8x8x8xf32> -> vector<8x8x8xf32>
    "tpu.trace_stop"() : () -> ()
    %cst_19 = arith.constant 0.353553385 : f32
    %61 = vector.broadcast %cst_19 : f32 to vector<8x8x8xf32>
    %62 = arith.mulf %60, %61 : vector<8x8x8xf32>
    %cst_20 = arith.constant dense<0xFF800000> : vector<8x8xf32>
    %63 = vector.multi_reduction <maximumf>, %62, %cst_20 [2] : vector<8x8x8xf32> to vector<8x8xf32>
    %64 = vector.shape_cast %63 : vector<8x8xf32> to vector<8x8x1xf32>
    %65 = vector.broadcast %64 : vector<8x8x1xf32> to vector<8x8x8xf32>
    %66 = arith.subf %62, %65 : vector<8x8x8xf32>
    %67 = math.exp %66 : vector<8x8x8xf32>
    %cst_21 = arith.constant dense<0.000000e+00> : vector<8x8xf32>
    %68 = vector.multi_reduction <add>, %67, %cst_21 [2] : vector<8x8x8xf32> to vector<8x8xf32>
    %69 = vector.shape_cast %68 : vector<8x8xf32> to vector<8x8x1xf32>
    %70 = vector.broadcast %69 : vector<8x8x1xf32> to vector<8x8x8xf32>
    %71 = arith.divf %67, %70 : vector<8x8x8xf32>
    "tpu.trace_start"() <{level = 10 : i32, message = "bnm,bmf->bnf"}> : () -> ()
    %cst_22 = arith.constant dense<0.000000e+00> : vector<8x8x32xf32>
    %72 = tpu.matmul %71, %59, %cst_22 {dimension_numbers = #tpu.dot_dimension_numbers<[2], [1], [1], [2], [0, 0, 0, 1, 1, 2], [0], [0]>} : vector<8x8x8xf32>, vector<8x8x32xf32>, vector<8x8x32xf32> -> vector<8x8x32xf32>
    "tpu.trace_stop"() : () -> ()
    %73 = vector.extract_strided_slice %72 {offsets = [0, 0, 0], sizes = [2, 8, 32], strides = [1, 1, 1]} : vector<8x8x32xf32> to vector<2x8x32xf32>
    %74 = vector.extract_strided_slice %72 {offsets = [2, 0, 0], sizes = [2, 8, 32], strides = [1, 1, 1]} : vector<8x8x32xf32> to vector<2x8x32xf32>
    %75 = vector.extract_strided_slice %72 {offsets = [4, 0, 0], sizes = [2, 8, 32], strides = [1, 1, 1]} : vector<8x8x32xf32> to vector<2x8x32xf32>
    %76 = vector.extract_strided_slice %72 {offsets = [6, 0, 0], sizes = [2, 8, 32], strides = [1, 1, 1]} : vector<8x8x32xf32> to vector<2x8x32xf32>
    %77 = arith.addf %73, %74 : vector<2x8x32xf32>
    %78 = arith.addf %77, %75 : vector<2x8x32xf32>
    %79 = arith.addf %78, %76 : vector<2x8x32xf32>
    %80 = vector.shape_cast %79 : vector<2x8x32xf32> to vector<16x32xf32>
    %c3 = arith.constant 3 : index
    %c0_23 = arith.constant 0 : index
    %81 = vector.load %arg6[%c3, %c0_23] : memref<17x32xf32, #tpu.memory_space<vmem>>, vector<1x32xf32>
    %82 = vector.shape_cast %81 : vector<1x32xf32> to vector<32xf32>
    %83 = vector.shape_cast %82 : vector<32xf32> to vector<1x32xf32>
    %84 = vector.broadcast %83 : vector<1x32xf32> to vector<16x32xf32>
    %85 = arith.addf %80, %84 : vector<16x32xf32>
    %86 = arith.addf %35, %85 : vector<16x32xf32>
    %c6 = arith.constant 6 : index
    %c0_24 = arith.constant 0 : index
    %87 = vector.load %arg6[%c6, %c0_24] : memref<17x32xf32, #tpu.memory_space<vmem>>, vector<1x32xf32>
    %88 = vector.shape_cast %87 : vector<1x32xf32> to vector<32xf32>
    %89 = vector.shape_cast %88 : vector<32xf32> to vector<1x32xf32>
    %c7 = arith.constant 7 : index
    %c0_25 = arith.constant 0 : index
    %90 = vector.load %arg6[%c7, %c0_25] : memref<17x32xf32, #tpu.memory_space<vmem>>, vector<1x32xf32>
    %91 = vector.shape_cast %90 : vector<1x32xf32> to vector<32xf32>
    %92 = vector.shape_cast %91 : vector<32xf32> to vector<1x32xf32>
    %cst_26 = arith.constant dense<0.000000e+00> : vector<16xf32>
    %93 = vector.multi_reduction <add>, %86, %cst_26 [1] : vector<16x32xf32> to vector<16xf32>
    %94 = vector.shape_cast %93 : vector<16xf32> to vector<16x1xf32>
    %cst_27 = arith.constant 3.200000e+01 : f32
    %95 = vector.broadcast %cst_27 : f32 to vector<16x1xf32>
    %96 = arith.divf %94, %95 : vector<16x1xf32>
    %97 = vector.broadcast %96 : vector<16x1xf32> to vector<16x32xf32>
    %98 = arith.subf %86, %97 : vector<16x32xf32>
    %99 = arith.mulf %98, %98 : vector<16x32xf32>
    %cst_28 = arith.constant dense<0.000000e+00> : vector<16xf32>
    %100 = vector.multi_reduction <add>, %99, %cst_28 [1] : vector<16x32xf32> to vector<16xf32>
    %101 = vector.shape_cast %100 : vector<16xf32> to vector<16x1xf32>
    %cst_29 = arith.constant 3.200000e+01 : f32
    %102 = vector.broadcast %cst_29 : f32 to vector<16x1xf32>
    %103 = arith.divf %101, %102 : vector<16x1xf32>
    %104 = vector.broadcast %96 : vector<16x1xf32> to vector<16x32xf32>
    %105 = arith.subf %86, %104 : vector<16x32xf32>
    %cst_30 = arith.constant 9.99999974E-6 : f32
    %106 = vector.broadcast %cst_30 : f32 to vector<16x1xf32>
    %107 = arith.addf %103, %106 : vector<16x1xf32>
    %108 = math.rsqrt %107 : vector<16x1xf32>
    %109 = vector.broadcast %108 : vector<16x1xf32> to vector<16x32xf32>
    %110 = arith.mulf %105, %109 : vector<16x32xf32>
    %111 = vector.broadcast %89 : vector<1x32xf32> to vector<16x32xf32>
    %112 = arith.mulf %110, %111 : vector<16x32xf32>
    %113 = vector.broadcast %92 : vector<1x32xf32> to vector<16x32xf32>
    %114 = arith.addf %112, %113 : vector<16x32xf32>
    %c0_31 = arith.constant 0 : index
    %c0_32 = arith.constant 0 : index
    %c0_33 = arith.constant 0 : index
    %115 = vector.load %arg3[%c0_31, %c0_32, %c0_33] : memref<2x32x32xf32, #tpu.memory_space<vmem>>, vector<1x32x32xf32>
    %116 = vector.shape_cast %115 : vector<1x32x32xf32> to vector<32x32xf32>
    %cst_34 = arith.constant dense<0.000000e+00> : vector<16x32xf32>
    %117 = tpu.matmul %114, %116, %cst_34 {dimension_numbers = #tpu.dot_dimension_numbers<[1], [0], [0], [1], [0, 0, 1, 1], [], []>} : vector<16x32xf32>, vector<32x32xf32>, vector<16x32xf32> -> vector<16x32xf32>
    %c4 = arith.constant 4 : index
    %c0_35 = arith.constant 0 : index
    %118 = vector.load %arg6[%c4, %c0_35] : memref<17x32xf32, #tpu.memory_space<vmem>>, vector<1x32xf32>
    %119 = vector.shape_cast %118 : vector<1x32xf32> to vector<32xf32>
    %120 = vector.shape_cast %119 : vector<32xf32> to vector<1x32xf32>
    %121 = vector.broadcast %120 : vector<1x32xf32> to vector<16x32xf32>
    %122 = arith.addf %117, %121 : vector<16x32xf32>
    %cst_36 = arith.constant 0.000000e+00 : f32
    %123 = vector.broadcast %cst_36 : f32 to vector<16x32xf32>
    %124 = arith.maximumf %122, %123 : vector<16x32xf32>
    %c0_37 = arith.constant 0 : index
    %c0_38 = arith.constant 0 : index
    %c0_39 = arith.constant 0 : index
    %125 = vector.load %arg4[%c0_37, %c0_38, %c0_39] : memref<2x32x32xf32, #tpu.memory_space<vmem>>, vector<1x32x32xf32>
    %126 = vector.shape_cast %125 : vector<1x32x32xf32> to vector<32x32xf32>
    %cst_40 = arith.constant dense<0.000000e+00> : vector<16x32xf32>
    %127 = tpu.matmul %124, %126, %cst_40 {dimension_numbers = #tpu.dot_dimension_numbers<[1], [0], [0], [1], [0, 0, 1, 1], [], []>} : vector<16x32xf32>, vector<32x32xf32>, vector<16x32xf32> -> vector<16x32xf32>
    %c5 = arith.constant 5 : index
    %c0_41 = arith.constant 0 : index
    %128 = vector.load %arg6[%c5, %c0_41] : memref<17x32xf32, #tpu.memory_space<vmem>>, vector<1x32xf32>
    %129 = vector.shape_cast %128 : vector<1x32xf32> to vector<32xf32>
    %130 = vector.shape_cast %129 : vector<32xf32> to vector<1x32xf32>
    %131 = vector.broadcast %130 : vector<1x32xf32> to vector<16x32xf32>
    %132 = arith.addf %127, %131 : vector<16x32xf32>
    %133 = arith.addf %114, %132 : vector<16x32xf32>
    %c8 = arith.constant 8 : index
    %c0_42 = arith.constant 0 : index
    %134 = vector.load %arg6[%c8, %c0_42] : memref<17x32xf32, #tpu.memory_space<vmem>>, vector<1x32xf32>
    %135 = vector.shape_cast %134 : vector<1x32xf32> to vector<32xf32>
    %136 = vector.shape_cast %135 : vector<32xf32> to vector<1x32xf32>
    %c9 = arith.constant 9 : index
    %c0_43 = arith.constant 0 : index
    %137 = vector.load %arg6[%c9, %c0_43] : memref<17x32xf32, #tpu.memory_space<vmem>>, vector<1x32xf32>
    %138 = vector.shape_cast %137 : vector<1x32xf32> to vector<32xf32>
    %139 = vector.shape_cast %138 : vector<32xf32> to vector<1x32xf32>
    %cst_44 = arith.constant dense<0.000000e+00> : vector<16xf32>
    %140 = vector.multi_reduction <add>, %133, %cst_44 [1] : vector<16x32xf32> to vector<16xf32>
    %141 = vector.shape_cast %140 : vector<16xf32> to vector<16x1xf32>
    %cst_45 = arith.constant 3.200000e+01 : f32
    %142 = vector.broadcast %cst_45 : f32 to vector<16x1xf32>
    %143 = arith.divf %141, %142 : vector<16x1xf32>
    %144 = vector.broadcast %143 : vector<16x1xf32> to vector<16x32xf32>
    %145 = arith.subf %133, %144 : vector<16x32xf32>
    %146 = arith.mulf %145, %145 : vector<16x32xf32>
    %cst_46 = arith.constant dense<0.000000e+00> : vector<16xf32>
    %147 = vector.multi_reduction <add>, %146, %cst_46 [1] : vector<16x32xf32> to vector<16xf32>
    %148 = vector.shape_cast %147 : vector<16xf32> to vector<16x1xf32>
    %cst_47 = arith.constant 3.200000e+01 : f32
    %149 = vector.broadcast %cst_47 : f32 to vector<16x1xf32>
    %150 = arith.divf %148, %149 : vector<16x1xf32>
    %151 = vector.broadcast %143 : vector<16x1xf32> to vector<16x32xf32>
    %152 = arith.subf %133, %151 : vector<16x32xf32>
    %cst_48 = arith.constant 9.99999974E-6 : f32
    %153 = vector.broadcast %cst_48 : f32 to vector<16x1xf32>
    %154 = arith.addf %150, %153 : vector<16x1xf32>
    %155 = math.rsqrt %154 : vector<16x1xf32>
    %156 = vector.broadcast %155 : vector<16x1xf32> to vector<16x32xf32>
    %157 = arith.mulf %152, %156 : vector<16x32xf32>
    %158 = vector.broadcast %136 : vector<1x32xf32> to vector<16x32xf32>
    %159 = arith.mulf %157, %158 : vector<16x32xf32>
    %160 = vector.broadcast %139 : vector<1x32xf32> to vector<16x32xf32>
    %161 = arith.addf %159, %160 : vector<16x32xf32>
    %c1_49 = arith.constant 1 : index
    %c0_50 = arith.constant 0 : index
    %c0_51 = arith.constant 0 : index
    %162 = vector.load %arg2[%c1_49, %c0_50, %c0_51] : memref<2x32x192xf32, #tpu.memory_space<vmem>>, vector<1x32x192xf32>
    %163 = vector.shape_cast %162 : vector<1x32x192xf32> to vector<32x192xf32>
    %cst_52 = arith.constant dense<0.000000e+00> : vector<16x192xf32>
    %164 = tpu.matmul %161, %163, %cst_52 {dimension_numbers = #tpu.dot_dimension_numbers<[1], [0], [0], [1], [0, 0, 1, 1], [], []>} : vector<16x32xf32>, vector<32x192xf32>, vector<16x192xf32> -> vector<16x192xf32>
    %c1_53 = arith.constant 1 : index
    %c0_54 = arith.constant 0 : index
    %165 = vector.load %arg5[%c1_53, %c0_54] : memref<2x192xf32, #tpu.memory_space<vmem>>, vector<1x192xf32>
    %166 = vector.shape_cast %165 : vector<1x192xf32> to vector<192xf32>
    %167 = vector.shape_cast %166 : vector<192xf32> to vector<1x192xf32>
    %168 = vector.broadcast %167 : vector<1x192xf32> to vector<16x192xf32>
    %169 = arith.addf %164, %168 : vector<16x192xf32>
    %170 = vector.shape_cast %169 : vector<16x192xf32> to vector<2x8x192xf32>
    %171 = vector.extract_strided_slice %170 {offsets = [0, 0, 0], sizes = [2, 8, 8], strides = [1, 1, 1]} : vector<2x8x192xf32> to vector<2x8x8xf32>
    %172 = vector.extract_strided_slice %170 {offsets = [0, 0, 8], sizes = [2, 8, 8], strides = [1, 1, 1]} : vector<2x8x192xf32> to vector<2x8x8xf32>
    %173 = vector.extract_strided_slice %170 {offsets = [0, 0, 16], sizes = [2, 8, 8], strides = [1, 1, 1]} : vector<2x8x192xf32> to vector<2x8x8xf32>
    %174 = vector.extract_strided_slice %170 {offsets = [0, 0, 24], sizes = [2, 8, 8], strides = [1, 1, 1]} : vector<2x8x192xf32> to vector<2x8x8xf32>
    %175 = tpu.concatenate %171, %172, %173, %174 in 0 : vector<2x8x8xf32>, vector<2x8x8xf32>, vector<2x8x8xf32>, vector<2x8x8xf32> -> vector<8x8x8xf32>
    %176 = vector.extract_strided_slice %170 {offsets = [0, 0, 32], sizes = [2, 8, 8], strides = [1, 1, 1]} : vector<2x8x192xf32> to vector<2x8x8xf32>
    %177 = vector.extract_strided_slice %170 {offsets = [0, 0, 40], sizes = [2, 8, 8], strides = [1, 1, 1]} : vector<2x8x192xf32> to vector<2x8x8xf32>
    %178 = vector.extract_strided_slice %170 {offsets = [0, 0, 48], sizes = [2, 8, 8], strides = [1, 1, 1]} : vector<2x8x192xf32> to vector<2x8x8xf32>
    %179 = vector.extract_strided_slice %170 {offsets = [0, 0, 56], sizes = [2, 8, 8], strides = [1, 1, 1]} : vector<2x8x192xf32> to vector<2x8x8xf32>
    %180 = tpu.concatenate %176, %177, %178, %179 in 0 : vector<2x8x8xf32>, vector<2x8x8xf32>, vector<2x8x8xf32>, vector<2x8x8xf32> -> vector<8x8x8xf32>
    %181 = vector.extract_strided_slice %170 {offsets = [0, 0, 64], sizes = [2, 8, 32], strides = [1, 1, 1]} : vector<2x8x192xf32> to vector<2x8x32xf32>
    %182 = vector.extract_strided_slice %170 {offsets = [0, 0, 96], sizes = [2, 8, 32], strides = [1, 1, 1]} : vector<2x8x192xf32> to vector<2x8x32xf32>
    %183 = vector.extract_strided_slice %170 {offsets = [0, 0, 128], sizes = [2, 8, 32], strides = [1, 1, 1]} : vector<2x8x192xf32> to vector<2x8x32xf32>
    %184 = vector.extract_strided_slice %170 {offsets = [0, 0, 160], sizes = [2, 8, 32], strides = [1, 1, 1]} : vector<2x8x192xf32> to vector<2x8x32xf32>
    %185 = tpu.concatenate %181, %182, %183, %184 in 0 : vector<2x8x32xf32>, vector<2x8x32xf32>, vector<2x8x32xf32>, vector<2x8x32xf32> -> vector<8x8x32xf32>
    "tpu.trace_start"() <{level = 10 : i32, message = "bnd,bmd->bnm"}> : () -> ()
    %cst_55 = arith.constant dense<0.000000e+00> : vector<8x8x8xf32>
    %186 = tpu.matmul %175, %180, %cst_55 {dimension_numbers = #tpu.dot_dimension_numbers<[2], [2], [1], [1], [0, 0, 0, 1, 1, 1], [0], [0]>} : vector<8x8x8xf32>, vector<8x8x8xf32>, vector<8x8x8xf32> -> vector<8x8x8xf32>
    "tpu.trace_stop"() : () -> ()
    %cst_56 = arith.constant 0.353553385 : f32
    %187 = vector.broadcast %cst_56 : f32 to vector<8x8x8xf32>
    %188 = arith.mulf %186, %187 : vector<8x8x8xf32>
    %cst_57 = arith.constant dense<0xFF800000> : vector<8x8xf32>
    %189 = vector.multi_reduction <maximumf>, %188, %cst_57 [2] : vector<8x8x8xf32> to vector<8x8xf32>
    %190 = vector.shape_cast %189 : vector<8x8xf32> to vector<8x8x1xf32>
    %191 = vector.broadcast %190 : vector<8x8x1xf32> to vector<8x8x8xf32>
    %192 = arith.subf %188, %191 : vector<8x8x8xf32>
    %193 = math.exp %192 : vector<8x8x8xf32>
    %cst_58 = arith.constant dense<0.000000e+00> : vector<8x8xf32>
    %194 = vector.multi_reduction <add>, %193, %cst_58 [2] : vector<8x8x8xf32> to vector<8x8xf32>
    %195 = vector.shape_cast %194 : vector<8x8xf32> to vector<8x8x1xf32>
    %196 = vector.broadcast %195 : vector<8x8x1xf32> to vector<8x8x8xf32>
    %197 = arith.divf %193, %196 : vector<8x8x8xf32>
    "tpu.trace_start"() <{level = 10 : i32, message = "bnm,bmf->bnf"}> : () -> ()
    %cst_59 = arith.constant dense<0.000000e+00> : vector<8x8x32xf32>
    %198 = tpu.matmul %197, %185, %cst_59 {dimension_numbers = #tpu.dot_dimension_numbers<[2], [1], [1], [2], [0, 0, 0, 1, 1, 2], [0], [0]>} : vector<8x8x8xf32>, vector<8x8x32xf32>, vector<8x8x32xf32> -> vector<8x8x32xf32>
    "tpu.trace_stop"() : () -> ()
    %199 = vector.extract_strided_slice %198 {offsets = [0, 0, 0], sizes = [2, 8, 32], strides = [1, 1, 1]} : vector<8x8x32xf32> to vector<2x8x32xf32>
    %200 = vector.extract_strided_slice %198 {offsets = [2, 0, 0], sizes = [2, 8, 32], strides = [1, 1, 1]} : vector<8x8x32xf32> to vector<2x8x32xf32>
    %201 = vector.extract_strided_slice %198 {offsets = [4, 0, 0], sizes = [2, 8, 32], strides = [1, 1, 1]} : vector<8x8x32xf32> to vector<2x8x32xf32>
    %202 = vector.extract_strided_slice %198 {offsets = [6, 0, 0], sizes = [2, 8, 32], strides = [1, 1, 1]} : vector<8x8x32xf32> to vector<2x8x32xf32>
    %203 = arith.addf %199, %200 : vector<2x8x32xf32>
    %204 = arith.addf %203, %201 : vector<2x8x32xf32>
    %205 = arith.addf %204, %202 : vector<2x8x32xf32>
    %206 = vector.shape_cast %205 : vector<2x8x32xf32> to vector<16x32xf32>
    %c10 = arith.constant 10 : index
    %c0_60 = arith.constant 0 : index
    %207 = vector.load %arg6[%c10, %c0_60] : memref<17x32xf32, #tpu.memory_space<vmem>>, vector<1x32xf32>
    %208 = vector.shape_cast %207 : vector<1x32xf32> to vector<32xf32>
    %209 = vector.shape_cast %208 : vector<32xf32> to vector<1x32xf32>
    %210 = vector.broadcast %209 : vector<1x32xf32> to vector<16x32xf32>
    %211 = arith.addf %206, %210 : vector<16x32xf32>
    %212 = arith.addf %161, %211 : vector<16x32xf32>
    %c13 = arith.constant 13 : index
    %c0_61 = arith.constant 0 : index
    %213 = vector.load %arg6[%c13, %c0_61] : memref<17x32xf32, #tpu.memory_space<vmem>>, vector<1x32xf32>
    %214 = vector.shape_cast %213 : vector<1x32xf32> to vector<32xf32>
    %215 = vector.shape_cast %214 : vector<32xf32> to vector<1x32xf32>
    %c14 = arith.constant 14 : index
    %c0_62 = arith.constant 0 : index
    %216 = vector.load %arg6[%c14, %c0_62] : memref<17x32xf32, #tpu.memory_space<vmem>>, vector<1x32xf32>
    %217 = vector.shape_cast %216 : vector<1x32xf32> to vector<32xf32>
    %218 = vector.shape_cast %217 : vector<32xf32> to vector<1x32xf32>
    %cst_63 = arith.constant dense<0.000000e+00> : vector<16xf32>
    %219 = vector.multi_reduction <add>, %212, %cst_63 [1] : vector<16x32xf32> to vector<16xf32>
    %220 = vector.shape_cast %219 : vector<16xf32> to vector<16x1xf32>
    %cst_64 = arith.constant 3.200000e+01 : f32
    %221 = vector.broadcast %cst_64 : f32 to vector<16x1xf32>
    %222 = arith.divf %220, %221 : vector<16x1xf32>
    %223 = vector.broadcast %222 : vector<16x1xf32> to vector<16x32xf32>
    %224 = arith.subf %212, %223 : vector<16x32xf32>
    %225 = arith.mulf %224, %224 : vector<16x32xf32>
    %cst_65 = arith.constant dense<0.000000e+00> : vector<16xf32>
    %226 = vector.multi_reduction <add>, %225, %cst_65 [1] : vector<16x32xf32> to vector<16xf32>
    %227 = vector.shape_cast %226 : vector<16xf32> to vector<16x1xf32>
    %cst_66 = arith.constant 3.200000e+01 : f32
    %228 = vector.broadcast %cst_66 : f32 to vector<16x1xf32>
    %229 = arith.divf %227, %228 : vector<16x1xf32>
    %230 = vector.broadcast %222 : vector<16x1xf32> to vector<16x32xf32>
    %231 = arith.subf %212, %230 : vector<16x32xf32>
    %cst_67 = arith.constant 9.99999974E-6 : f32
    %232 = vector.broadcast %cst_67 : f32 to vector<16x1xf32>
    %233 = arith.addf %229, %232 : vector<16x1xf32>
    %234 = math.rsqrt %233 : vector<16x1xf32>
    %235 = vector.broadcast %234 : vector<16x1xf32> to vector<16x32xf32>
    %236 = arith.mulf %231, %235 : vector<16x32xf32>
    %237 = vector.broadcast %215 : vector<1x32xf32> to vector<16x32xf32>
    %238 = arith.mulf %236, %237 : vector<16x32xf32>
    %239 = vector.broadcast %218 : vector<1x32xf32> to vector<16x32xf32>
    %240 = arith.addf %238, %239 : vector<16x32xf32>
    %c1_68 = arith.constant 1 : index
    %c0_69 = arith.constant 0 : index
    %c0_70 = arith.constant 0 : index
    %241 = vector.load %arg3[%c1_68, %c0_69, %c0_70] : memref<2x32x32xf32, #tpu.memory_space<vmem>>, vector<1x32x32xf32>
    %242 = vector.shape_cast %241 : vector<1x32x32xf32> to vector<32x32xf32>
    %cst_71 = arith.constant dense<0.000000e+00> : vector<16x32xf32>
    %243 = tpu.matmul %240, %242, %cst_71 {dimension_numbers = #tpu.dot_dimension_numbers<[1], [0], [0], [1], [0, 0, 1, 1], [], []>} : vector<16x32xf32>, vector<32x32xf32>, vector<16x32xf32> -> vector<16x32xf32>
    %c11 = arith.constant 11 : index
    %c0_72 = arith.constant 0 : index
    %244 = vector.load %arg6[%c11, %c0_72] : memref<17x32xf32, #tpu.memory_space<vmem>>, vector<1x32xf32>
    %245 = vector.shape_cast %244 : vector<1x32xf32> to vector<32xf32>
    %246 = vector.shape_cast %245 : vector<32xf32> to vector<1x32xf32>
    %247 = vector.broadcast %246 : vector<1x32xf32> to vector<16x32xf32>
    %248 = arith.addf %243, %247 : vector<16x32xf32>
    %cst_73 = arith.constant 0.000000e+00 : f32
    %249 = vector.broadcast %cst_73 : f32 to vector<16x32xf32>
    %250 = arith.maximumf %248, %249 : vector<16x32xf32>
    %c1_74 = arith.constant 1 : index
    %c0_75 = arith.constant 0 : index
    %c0_76 = arith.constant 0 : index
    %251 = vector.load %arg4[%c1_74, %c0_75, %c0_76] : memref<2x32x32xf32, #tpu.memory_space<vmem>>, vector<1x32x32xf32>
    %252 = vector.shape_cast %251 : vector<1x32x32xf32> to vector<32x32xf32>
    %cst_77 = arith.constant dense<0.000000e+00> : vector<16x32xf32>
    %253 = tpu.matmul %250, %252, %cst_77 {dimension_numbers = #tpu.dot_dimension_numbers<[1], [0], [0], [1], [0, 0, 1, 1], [], []>} : vector<16x32xf32>, vector<32x32xf32>, vector<16x32xf32> -> vector<16x32xf32>
    %c12 = arith.constant 12 : index
    %c0_78 = arith.constant 0 : index
    %254 = vector.load %arg6[%c12, %c0_78] : memref<17x32xf32, #tpu.memory_space<vmem>>, vector<1x32xf32>
    %255 = vector.shape_cast %254 : vector<1x32xf32> to vector<32xf32>
    %256 = vector.shape_cast %255 : vector<32xf32> to vector<1x32xf32>
    %257 = vector.broadcast %256 : vector<1x32xf32> to vector<16x32xf32>
    %258 = arith.addf %253, %257 : vector<16x32xf32>
    %259 = arith.addf %240, %258 : vector<16x32xf32>
    %c15 = arith.constant 15 : index
    %c0_79 = arith.constant 0 : index
    %260 = vector.load %arg6[%c15, %c0_79] : memref<17x32xf32, #tpu.memory_space<vmem>>, vector<1x32xf32>
    %261 = vector.shape_cast %260 : vector<1x32xf32> to vector<32xf32>
    %262 = vector.shape_cast %261 : vector<32xf32> to vector<1x32xf32>
    %c16 = arith.constant 16 : index
    %c0_80 = arith.constant 0 : index
    %263 = vector.load %arg6[%c16, %c0_80] : memref<17x32xf32, #tpu.memory_space<vmem>>, vector<1x32xf32>
    %264 = vector.shape_cast %263 : vector<1x32xf32> to vector<32xf32>
    %265 = vector.shape_cast %264 : vector<32xf32> to vector<1x32xf32>
    %cst_81 = arith.constant dense<0.000000e+00> : vector<16xf32>
    %266 = vector.multi_reduction <add>, %259, %cst_81 [1] : vector<16x32xf32> to vector<16xf32>
    %267 = vector.shape_cast %266 : vector<16xf32> to vector<16x1xf32>
    %cst_82 = arith.constant 3.200000e+01 : f32
    %268 = vector.broadcast %cst_82 : f32 to vector<16x1xf32>
    %269 = arith.divf %267, %268 : vector<16x1xf32>
    %270 = vector.broadcast %269 : vector<16x1xf32> to vector<16x32xf32>
    %271 = arith.subf %259, %270 : vector<16x32xf32>
    %272 = arith.mulf %271, %271 : vector<16x32xf32>
    %cst_83 = arith.constant dense<0.000000e+00> : vector<16xf32>
    %273 = vector.multi_reduction <add>, %272, %cst_83 [1] : vector<16x32xf32> to vector<16xf32>
    %274 = vector.shape_cast %273 : vector<16xf32> to vector<16x1xf32>
    %cst_84 = arith.constant 3.200000e+01 : f32
    %275 = vector.broadcast %cst_84 : f32 to vector<16x1xf32>
    %276 = arith.divf %274, %275 : vector<16x1xf32>
    %277 = vector.broadcast %269 : vector<16x1xf32> to vector<16x32xf32>
    %278 = arith.subf %259, %277 : vector<16x32xf32>
    %cst_85 = arith.constant 9.99999974E-6 : f32
    %279 = vector.broadcast %cst_85 : f32 to vector<16x1xf32>
    %280 = arith.addf %276, %279 : vector<16x1xf32>
    %281 = math.rsqrt %280 : vector<16x1xf32>
    %282 = vector.broadcast %281 : vector<16x1xf32> to vector<16x32xf32>
    %283 = arith.mulf %278, %282 : vector<16x32xf32>
    %284 = vector.broadcast %262 : vector<1x32xf32> to vector<16x32xf32>
    %285 = arith.mulf %283, %284 : vector<16x32xf32>
    %286 = vector.broadcast %265 : vector<1x32xf32> to vector<16x32xf32>
    %287 = arith.addf %285, %286 : vector<16x32xf32>
    %288 = vector.shape_cast %287 : vector<16x32xf32> to vector<2x8x32xf32>
    %cst_86 = arith.constant dense<0.000000e+00> : vector<2x32xf32>
    %289 = vector.multi_reduction <add>, %288, %cst_86 [1] : vector<2x8x32xf32> to vector<2x32xf32>
    %cst_87 = arith.constant 8.000000e+00 : f32
    %290 = vector.broadcast %cst_87 : f32 to vector<2x32xf32>
    %291 = arith.divf %289, %290 : vector<2x32xf32>
    %c0_88 = arith.constant 0 : index
    %c0_89 = arith.constant 0 : index
    %292 = vector.load %arg7[%c0_88, %c0_89] : memref<2x32xf32, #tpu.memory_space<vmem>>, vector<2x32xf32>
    tpu.vector_store %arg7[%c0_88, %c0_89], %291 {strides = array<i32>} : memref<2x32xf32, #tpu.memory_space<vmem>>, vector<2x32xf32>,
    return
  }
}

</mosaic_0001>

<llo_original>
// kernel: tpu_custom_call.1
$region0: #{tpu_custom_call.1}
  #allocation0 [shape = 'u32[]', space=smem, size = 0x4, offset = 0x4, fixed_abs, tag = 'smem constant byte address 0x4 - core index']
  #allocation1 [shape = 'u32[144,128]{1,0:T(1,128)}', space=vmem, size = 0x12000, scoped, tag = 'internal scratch']
  %s0 = inlined_call_operand.hbm [shape: f32[16,32], index: 0, kind: input, shape index: {}]
  %s1 = inlined_call_operand.hbm [shape: f32[32,32], index: 1, kind: input, shape index: {}]
  %s2 = inlined_call_operand.hbm [shape: f32[2,32,192], index: 2, kind: input, shape index: {}]
  %s3 = inlined_call_operand.hbm [shape: f32[2,32,32], index: 3, kind: input, shape index: {}]
  %s4 = inlined_call_operand.hbm [shape: f32[2,32,32], index: 4, kind: input, shape index: {}]
  %s5 = inlined_call_operand.vmem [shape: f32[2,192], index: 5, kind: input, shape index: {}]
  %s6 = inlined_call_operand.hbm [shape: f32[17,32], index: 6, kind: input, shape index: {}]
  %s7 = inlined_call_operand.hbm [shape: f32[2,32], index: 7, kind: output, shape index: {}]
  %s8 = sld [smem:[#allocation0]]
  $region62: #{tpu_custom_call.1} parent=0
    _
  %s10 = ssub.s32 1, %s8
  %s11 = scalar_select 0, %s10, %s8
  $region1: #{tpu_custom_call.1} parent=0
    #allocation2 [shape = 'u8[8192]{0}', space=vmem, size = 0x2000, scoped, tag = 'input window, operand 0, single buffered']
    #allocation3 [shape = 's32[1]{0}', space=sflag, size = 0x4, scoped, tag = 'scoped memory for tpu_custom_call.1']
    #allocation4 [shape = 's32[1]{0}', space=sflag, size = 0x4, scoped, tag = 'scoped memory for tpu_custom_call.1']
    #allocation5 [shape = 'u8[16384]{0}', space=vmem, size = 0x4000, scoped, tag = 'input window, operand 1, single buffered']
    #allocation6 [shape = 's32[1]{0}', space=sflag, size = 0x4, scoped, tag = 'scoped memory for tpu_custom_call.1']
    #allocation7 [shape = 'u8[65536]{0}', space=vmem, size = 0x10000, scoped, tag = 'input window, operand 2, single buffered']
    #allocation8 [shape = 'u8[32768]{0}', space=vmem, size = 0x8000, scoped, tag = 'input window, operand 3, single buffered']
    #allocation9 [shape = 's32[1]{0}', space=sflag, size = 0x4, scoped, tag = 'scoped memory for tpu_custom_call.1']
    #allocation10 [shape = 'u8[32768]{0}', space=vmem, size = 0x8000, scoped, tag = 'input window, operand 4, single buffered']
    #allocation11 [shape = 'u8[12288]{0}', space=vmem, size = 0x3000, scoped, tag = 'input window, operand 6, single buffered']
    #allocation12 [shape = 's32[1]{0}', space=sflag, size = 0x4, scoped, tag = 'scoped memory for tpu_custom_call.1']
    #allocation13 [shape = 'u8[1024]{0}', space=vmem, size = 0x400, scoped, tag = 'output window, operand 0, single buffered']
    %12 = vsyncpa [#allocation3], 0
    %13 = vsyncpa [#allocation6], 0
    %14 = vsyncpa [#allocation9], 0
    %15 = vsyncpa [#allocation12], 0
    %16 = vsyncpa [#allocation4], 0
    // Predicated region
    $region2: #{tpu_custom_call.1} parent=1 // pred_check
      _
    $region3: #{tpu_custom_call.1} parent=1 // pred_check_branch
      %18 = sbr.rel (0) target = $region5
    $region4: #{tpu_custom_call.1} parent=1 // pred_region
      %s20 = ssub.s32 256, 256
      %21 = vsyncadd [#allocation3], %s20
      %s22 = sshll.u32 [#allocation2], 4
      %s23 = int_to_ptr.vmem [resolvable:$true] %s22
      %28 = dma.hbm_to_vmem [thread:$0]  %s0, 256, %s23, [#allocation3], 128, 128, 8
    $region5: #{tpu_custom_call.1} parent=1 // pred_fallthru
      _
    // Predicated region
    $region6: #{tpu_custom_call.1} parent=1 // pred_check
      _
    $region7: #{tpu_custom_call.1} parent=1 // pred_check_branch
      %30 = sbr.rel (0) target = $region9
    $region8: #{tpu_custom_call.1} parent=1 // pred_region
      %s32 = ssub.s32 512, 512
      %33 = vsyncadd [#allocation6], %s32
      %s34 = sshll.u32 [#allocation5], 4
      %s35 = int_to_ptr.vmem [resolvable:$true] %s34
      %40 = dma.hbm_to_vmem [thread:$0]  %s1, 512, %s35, [#allocation6], 128, 128, 8
    $region9: #{tpu_custom_call.1} parent=1 // pred_fallthru
      _
    // Predicated region
    $region10: #{tpu_custom_call.1} parent=1 // pred_check
      _
    $region11: #{tpu_custom_call.1} parent=1 // pred_check_branch
      %42 = sbr.rel (0) target = $region13
    $region12: #{tpu_custom_call.1} parent=1 // pred_region
      %s44 = ssub.s32 2048, 2048
      %45 = vsyncadd [#allocation6], %s44
      %s46 = sshll.u32 [#allocation7], 4
      %s47 = int_to_ptr.vmem [resolvable:$true] %s46
      %52 = dma.hbm_to_vmem [thread:$0]  %s2, 2048, %s47, [#allocation6], 256, 256, 16
    $region13: #{tpu_custom_call.1} parent=1 // pred_fallthru
      _
    // Predicated region
    $region14: #{tpu_custom_call.1} parent=1 // pred_check
      _
    $region15: #{tpu_custom_call.1} parent=1 // pred_check_branch
      %54 = sbr.rel (0) target = $region17
    $region16: #{tpu_custom_call.1} parent=1 // pred_region
      %s56 = ssub.s32 1024, 1024
      %57 = vsyncadd [#allocation9], %s56
      %s58 = sshll.u32 [#allocation8], 4
      %s59 = int_to_ptr.vmem [resolvable:$true] %s58
      %64 = dma.hbm_to_vmem [thread:$0]  %s3, 1024, %s59, [#allocation9], 128, 128, 8
    $region17: #{tpu_custom_call.1} parent=1 // pred_fallthru
      _
    // Predicated region
    $region18: #{tpu_custom_call.1} parent=1 // pred_check
      _
    $region19: #{tpu_custom_call.1} parent=1 // pred_check_branch
      %66 = sbr.rel (0) target = $region21
    $region20: #{tpu_custom_call.1} parent=1 // pred_region
      %s68 = ssub.s32 1024, 1024
      %69 = vsyncadd [#allocation9], %s68
      %s70 = sshll.u32 [#allocation10], 4
      %s71 = int_to_ptr.vmem [resolvable:$true] %s70
      %76 = dma.hbm_to_vmem [thread:$0]  %s4, 1024, %s71, [#allocation9], 128, 128, 8
    $region21: #{tpu_custom_call.1} parent=1 // pred_fallthru
      _
    // Predicated region
    $region22: #{tpu_custom_call.1} parent=1 // pred_check
      _
    $region23: #{tpu_custom_call.1} parent=1 // pred_check_branch
      %78 = sbr.rel (0) target = $region25
    $region24: #{tpu_custom_call.1} parent=1 // pred_region
      _
    $region25: #{tpu_custom_call.1} parent=1 // pred_fallthru
      _
    // Predicated region
    $region26: #{tpu_custom_call.1} parent=1 // pred_check
      _
    $region27: #{tpu_custom_call.1} parent=1 // pred_check_branch
      %80 = sbr.rel (0) target = $region29
    $region28: #{tpu_custom_call.1} parent=1 // pred_region
      %s82 = ssub.s32 384, 384
      %83 = vsyncadd [#allocation12], %s82
      %s84 = sshll.u32 [#allocation11], 4
      %s85 = int_to_ptr.vmem [resolvable:$true] %s84
      %90 = dma.hbm_to_vmem [thread:$0]  %s6, 384, %s85, [#allocation12], 128, 128, 8
    $region29: #{tpu_custom_call.1} parent=1 // pred_fallthru
      _
    // Predicated region
    $region30: #{tpu_custom_call.1} parent=1 // pred_check
      _
    $region31: #{tpu_custom_call.1} parent=1 // pred_check_branch
      %92 = sbr.rel (0) target = $region33
    $region32: #{tpu_custom_call.1} parent=1 // pred_region
      %93 = dma.done [#allocation3], 256
    $region33: #{tpu_custom_call.1} parent=1 // pred_fallthru
      _
    // Predicated region
    $region34: #{tpu_custom_call.1} parent=1 // pred_check
      _
    $region35: #{tpu_custom_call.1} parent=1 // pred_check_branch
      %95 = sbr.rel (0) target = $region37
    $region36: #{tpu_custom_call.1} parent=1 // pred_region
      %96 = dma.done [#allocation6], 512
    $region37: #{tpu_custom_call.1} parent=1 // pred_fallthru
      _
    // Predicated region
    $region38: #{tpu_custom_call.1} parent=1 // pred_check
      _
    $region39: #{tpu_custom_call.1} parent=1 // pred_check_branch
      %98 = sbr.rel (0) target = $region41
    $region40: #{tpu_custom_call.1} parent=1 // pred_region
      %99 = dma.done [#allocation6], 2048
    $region41: #{tpu_custom_call.1} parent=1 // pred_fallthru
      _
    // Predicated region
    $region42: #{tpu_custom_call.1} parent=1 // pred_check
      _
    $region43: #{tpu_custom_call.1} parent=1 // pred_check_branch
      %101 = sbr.rel (0) target = $region45
    $region44: #{tpu_custom_call.1} parent=1 // pred_region
      %102 = dma.done [#allocation9], 1024
    $region45: #{tpu_custom_call.1} parent=1 // pred_fallthru
      _
    // Predicated region
    $region46: #{tpu_custom_call.1} parent=1 // pred_check
      _
    $region47: #{tpu_custom_call.1} parent=1 // pred_check_branch
      %104 = sbr.rel (0) target = $region49
    $region48: #{tpu_custom_call.1} parent=1 // pred_region
      %105 = dma.done [#allocation9], 1024
    $region49: #{tpu_custom_call.1} parent=1 // pred_fallthru
      _
    // Predicated region
    $region50: #{tpu_custom_call.1} parent=1 // pred_check
      _
    $region51: #{tpu_custom_call.1} parent=1 // pred_check_branch
      %107 = sbr.rel (0) target = $region53
    $region52: #{tpu_custom_call.1} parent=1 // pred_region
      %108 = dma.done [#allocation12], 384
    $region53: #{tpu_custom_call.1} parent=1 // pred_fallthru
      _
    %v109 = vld [vmem:[#allocation2] sm:$0xff]
    %v110 = vld [vmem:[#allocation2 + $0x8] sm:$0xff]
    %v111 = vld [vmem:[#allocation5] sm:$0xff]
    %v112 = vld [vmem:[#allocation5 + $0x8] sm:$0xff]
    %v113 = vld [vmem:[#allocation5 + $0x10] sm:$0xff]
    %v114 = vld [vmem:[#allocation5 + $0x18] sm:$0xff]
    %v115 = vld [vmem:[#allocation11] sm:$0x1]
    %v116 = vlaneseq
    %v117 = vshrl.u32 %v116, 7
    %v118 = vsub.s32 0, %v117
    %v119 = vrot.slane %v115, %v118
    %vm120 = vcmask 261120
    %v122 = vsel %vm120, %v109, 0
    %v125 = vsel %vm120, %v110, 0
    %127 = vmatprep.subr.mxu0 0.0
    %128 = vmatpush1.msra.mxu0 %v111
    %129 = vmatprep.subr.mxu0 0.0
    %130 = vmatpush1.msra.mxu0 %v112
    %131 = vmatprep.subr.mxu0 0.0
    %132 = vmatpush1.msra.mxu0 %v113
    %133 = vmatprep.subr.mxu0 0.0
    %134 = vmatpush1.msra.mxu0 %v114
    %135 = vmatprep.subr.mxu0 0.0
    %136 = vmatpush1.msra.mxu0 0.0
    %137 = vmatprep.subr.mxu0 0.0
    %138 = vmatpush1.msra.mxu0 0.0
    %139 = vmatprep.subr.mxu0 0.0
    %140 = vmatpush1.msra.mxu0 0.0
    %141 = vmatprep.subr.mxu0 0.0
    %142 = vmatpush1.msra.mxu0 0.0
    %143 = vmatprep.subr.mxu0 0.0
    %144 = vmatpush1.msra.mxu0 0.0
    %145 = vmatprep.subr.mxu0 0.0
    %146 = vmatpush1.msra.mxu0 0.0
    %147 = vmatprep.subr.mxu0 0.0
    %148 = vmatpush1.msra.mxu0 0.0
    %149 = vmatprep.subr.mxu0 0.0
    %150 = vmatpush1.msra.mxu0 0.0
    %151 = vmatprep.subr.mxu0 0.0
    %152 = vmatpush1.msra.mxu0 0.0
    %153 = vmatprep.subr.mxu0 0.0
    %154 = vmatpush1.msra.mxu0 0.0
    %155 = vmatprep.subr.mxu0 0.0
    %156 = vmatpush1.msra.mxu0 0.0
    %157 = vmatprep.subr.mxu0 0.0
    %158 = vmatpush1.msra.mxu0 0.0
    %159 = vmatprep.subr.mxu0 0.0
    %160 = vmatpush1.msra.mxu0 0.0
    %161 = vmatprep.subr.mxu0 0.0
    %162 = vmatpush1.msra.mxu0 0.0
    %163 = vmatprep.subr.mxu0 0.0
    %164 = vmatpush1.msra.mxu0 0.0
    %165 = vmatprep.subr.mxu0 0.0
    %166 = vmatpush1.msra.mxu0 0.0
    %167 = vmatprep.subr.mxu0 0.0
    %168 = vmatpush1.msra.mxu0 0.0
    %169 = vmatprep.subr.mxu0 0.0
    %170 = vmatpush1.msra.mxu0 0.0
    %171 = vmatprep.subr.mxu0 0.0
    %172 = vmatpush1.msra.mxu0 0.0
    %173 = vmatprep.subr.mxu0 0.0
    %174 = vmatpush1.msra.mxu0 0.0
    %175 = vmatprep.subr.mxu0 0.0
    %176 = vmatpush1.msra.mxu0 0.0
    %177 = vmatprep.subr.mxu0 0.0
    %178 = vmatpush1.msra.mxu0 0.0
    %179 = vmatprep.subr.mxu0 0.0
    %180 = vmatpush1.msra.mxu0 0.0
    %181 = vmatprep.subr.mxu0 0.0
    %182 = vmatpush1.msra.mxu0 0.0
    %183 = vmatprep.subr.mxu0 0.0
    %184 = vmatpush1.msra.mxu0 0.0
    %185 = vmatprep.subr.mxu0 0.0
    %186 = vmatpush1.msra.mxu0 0.0
    %187 = vmatprep.subr.mxu0 0.0
    %188 = vmatpush1.msra.mxu0 0.0
    %189 = vmatprep.subr.mxu0 0.0
    %190 = vmatpush1.msra.mxu0 0.0
    %191 = vmatprep.mubr.f32.mxu0 0.0
    %192 = vmatmul.mubr.f32.gmra.mrb[0].mxu0 %v122
    %v193 = vpop.f32.mrb[0].mxu0
    %v194 = vadd.f32 %v119, %v193
    %v195 = vpop.f32.mrb[0].mxu0
    %196 = vmatprep.mubr.f32.mxu0 0.0
    %197 = vmatmul.mubr.f32.gmra.mrb[0].mxu0 %v125
    %v198 = vpop.f32.mrb[0].mxu0
    %v199 = vadd.f32 %v119, %v198
    %v200 = vpop.f32.mrb[0].mxu0
    %201 = vdwg.mxu0
    %v202 = vld [vmem:[#allocation11 + $0x1] sm:$0x1]
    %v203 = vld [vmem:[#allocation11 + $0x2] sm:$0x1]
    %v204 = vsel %vm120, %v194, 0.0
    %205 = vadd.xlane.f32.xlu0 %v204
    %v206 = vpop.xlane.xlu0 %205
    %v207 = vsel %vm120, %v199, 0.0
    %208 = vadd.xlane.f32.xlu0 %v207
    %v209 = vpop.xlane.xlu0 %208
    %v210 = vrcp.pop 32.0
    %v211 = vmul.f32 %v206, %v210
    %v212 = vmul.f32 %v209, %v210
    %v213 = vsub.f32 %v194, %v211
    %v214 = vsub.f32 %v199, %v212
    %v215 = vmul.f32 %v213, %v213
    %v216 = vmul.f32 %v214, %v214
    %v217 = vsel %vm120, %v215, 0.0
    %218 = vadd.xlane.f32.xlu0 %v217
    %v219 = vpop.xlane.xlu0 %218
    %v220 = vsel %vm120, %v216, 0.0
    %221 = vadd.xlane.f32.xlu0 %v220
    %v222 = vpop.xlane.xlu0 %221
    %v223 = vmul.f32 %v219, %v210
    %v224 = vmul.f32 %v222, %v210
    %v225 = vadd.f32 %v223, 1e-05
    %v226 = vadd.f32 %v224, 1e-05
    %v227 = vrsqrt.pop %v225
    %v228 = vrsqrt.pop %v226
    %v229 = vmul.f32 %v213, %v227
    %v230 = vmul.f32 %v214, %v228
    %v231 = vlaneseq
    %v232 = vshrl.u32 %v231, 7
    %v233 = vsub.s32 0, %v232
    %v234 = vrot.slane %v202, %v233
    %v235 = vmul.f32 %v229, %v234
    %v236 = vmul.f32 %v230, %v234
    %v237 = vlaneseq
    %v238 = vshrl.u32 %v237, 7
    %v239 = vsub.s32 0, %v238
    %v240 = vrot.slane %v203, %v239
    %v241 = vadd.f32 %v235, %v240
    %v242 = vadd.f32 %v236, %v240
    %v243 = vld [vmem:[#allocation7] sm:$0xff]
    %v244 = vld [vmem:[#allocation7 + $0x8] sm:$0xff]
    %v245 = vld [vmem:[#allocation7 + $0x10] sm:$0xff]
    %v246 = vld [vmem:[#allocation7 + $0x18] sm:$0xff]
    %v247 = vld [vmem:[#allocation7 + $0x20] sm:$0xff]
    %v248 = vld [vmem:[#allocation7 + $0x28] sm:$0xff]
    %v249 = vld [vmem:[#allocation7 + $0x30] sm:$0xff]
    %v250 = vld [vmem:[#allocation7 + $0x38] sm:$0xff]
    %v251 = vld [vmem:[%s5] ss:$2 sm:$0x3]
    %v253 = vlaneseq
    %v254 = vshrl.u32 %v253, 7
    %v255 = vsub.s32 0, %v254
    %v256 = vrot.slane %v251, %v255
    %v257 = vlaneseq
    %v258 = vshrl.u32 %v257, 7
    %v259 = vsub.s32 1, %v258
    %v260 = vrot.slane %v251, %v259
    %v264 = vsel %vm120, %v241, 0
    %v267 = vsel %vm120, %v242, 0
    %269 = vmatprep.subr.mxu0 %v244
    %270 = vmatpush1.msra.mxu0 %v243
    %271 = vmatprep.subr.mxu0 %v246
    %272 = vmatpush1.msra.mxu0 %v245
    %273 = vmatprep.subr.mxu0 %v248
    %274 = vmatpush1.msra.mxu0 %v247
    %275 = vmatprep.subr.mxu0 %v250
    %276 = vmatpush1.msra.mxu0 %v249
    %277 = vmatprep.subr.mxu0 0.0
    %278 = vmatpush1.msra.mxu0 0.0
    %279 = vmatprep.subr.mxu0 0.0
    %280 = vmatpush1.msra.mxu0 0.0
    %281 = vmatprep.subr.mxu0 0.0
    %282 = vmatpush1.msra.mxu0 0.0
    %283 = vmatprep.subr.mxu0 0.0
    %284 = vmatpush1.msra.mxu0 0.0
    %285 = vmatprep.subr.mxu0 0.0
    %286 = vmatpush1.msra.mxu0 0.0
    %287 = vmatprep.subr.mxu0 0.0
    %288 = vmatpush1.msra.mxu0 0.0
    %289 = vmatprep.subr.mxu0 0.0
    %290 = vmatpush1.msra.mxu0 0.0
    %291 = vmatprep.subr.mxu0 0.0
    %292 = vmatpush1.msra.mxu0 0.0
    %293 = vmatprep.subr.mxu0 0.0
    %294 = vmatpush1.msra.mxu0 0.0
    %295 = vmatprep.subr.mxu0 0.0
    %296 = vmatpush1.msra.mxu0 0.0
    %297 = vmatprep.subr.mxu0 0.0
    %298 = vmatpush1.msra.mxu0 0.0
    %299 = vmatprep.subr.mxu0 0.0
    %300 = vmatpush1.msra.mxu0 0.0
    %301 = vmatprep.subr.mxu0 0.0
    %302 = vmatpush1.msra.mxu0 0.0
    %303 = vmatprep.subr.mxu0 0.0
    %304 = vmatpush1.msra.mxu0 0.0
    %305 = vmatprep.subr.mxu0 0.0
    %306 = vmatpush1.msra.mxu0 0.0
    %307 = vmatprep.subr.mxu0 0.0
    %308 = vmatpush1.msra.mxu0 0.0
    %309 = vmatprep.subr.mxu0 0.0
    %310 = vmatpush1.msra.mxu0 0.0
    %311 = vmatprep.subr.mxu0 0.0
    %312 = vmatpush1.msra.mxu0 0.0
    %313 = vmatprep.subr.mxu0 0.0
    %314 = vmatpush1.msra.mxu0 0.0
    %315 = vmatprep.subr.mxu0 0.0
    %316 = vmatpush1.msra.mxu0 0.0
    %317 = vmatprep.subr.mxu0 0.0
    %318 = vmatpush1.msra.mxu0 0.0
    %319 = vmatprep.subr.mxu0 0.0
    %320 = vmatpush1.msra.mxu0 0.0
    %321 = vmatprep.subr.mxu0 0.0
    %322 = vmatpush1.msra.mxu0 0.0
    %323 = vmatprep.subr.mxu0 0.0
    %324 = vmatpush1.msra.mxu0 0.0
    %325 = vmatprep.subr.mxu0 0.0
    %326 = vmatpush1.msra.mxu0 0.0
    %327 = vmatprep.subr.mxu0 0.0
    %328 = vmatpush1.msra.mxu0 0.0
    %329 = vmatprep.subr.mxu0 0.0
    %330 = vmatpush1.msra.mxu0 0.0
    %331 = vmatprep.subr.mxu0 0.0
    %332 = vmatpush1.msra.mxu0 0.0
    %333 = vmatprep.mubr.f32.mxu0 0.0
    %334 = vmatmul.mubr.f32.gmra.mrb[0].mxu0 %v264
    %v335 = vpop.f32.mrb[0].mxu0
    %v336 = vadd.f32 %v256, %v335
    %v337 = vpop.f32.mrb[0].mxu0
    %v338 = vadd.f32 %v260, %v337
    %339 = vmatprep.mubr.f32.mxu0 0.0
    %340 = vmatmul.mubr.f32.gmra.mrb[0].mxu0 %v267
    %v341 = vpop.f32.mrb[0].mxu0
    %v342 = vadd.f32 %v256, %v341
    %v343 = vpop.f32.mrb[0].mxu0
    %v344 = vadd.f32 %v260, %v343
    %345 = vdwg.mxu0
    %348 = vrot.lane.b32.xlu0 %v336, 120
    %v349 = vpop.permute.xlu0 %348
    %350 = vrot.lane.b32.xlu0 %v342, 120
    %v351 = vpop.permute.xlu0 %350
    %352 = vrot.lane.b32.xlu0 %v336, 112
    %v353 = vpop.permute.xlu0 %352
    %354 = vrot.lane.b32.xlu0 %v342, 112
    %v355 = vpop.permute.xlu0 %354
    %356 = vrot.lane.b32.xlu0 %v336, 104
    %v357 = vpop.permute.xlu0 %356
    %358 = vrot.lane.b32.xlu0 %v342, 104
    %v359 = vpop.permute.xlu0 %358
    %360 = vrot.lane.b32.xlu0 %v336, 96
    %v361 = vpop.permute.xlu0 %360
    %362 = vrot.lane.b32.xlu0 %v342, 96
    %v363 = vpop.permute.xlu0 %362
    %366 = vrot.lane.b32.xlu0 %v338, 64
    %v367 = vpop.permute.xlu0 %366
    %368 = vrot.lane.b32.xlu0 %v344, 64
    %v369 = vpop.permute.xlu0 %368
    %370 = vrot.lane.b32.xlu0 %v338, 32
    %v371 = vpop.permute.xlu0 %370
    %372 = vrot.lane.b32.xlu0 %v344, 32
    %v373 = vpop.permute.xlu0 %372
    %vm374 = vcmask 64512
    %v375 = vsel %vm374, %v336, 0
    %v377 = vsel %vm374, %v361, 0
    %379 = vmatprep.subr.mxu0 0.0
    %380 = vmatpush1.xpose.msra.mxu0 %v377
    %381 = vmatprep.subr.mxu0 0.0
    %382 = vmatpush1.xpose.msra.mxu0 0.0
    %383 = vmatprep.subr.mxu0 0.0
    %384 = vmatpush1.xpose.msra.mxu0 0.0
    %385 = vmatprep.subr.mxu0 0.0
    %386 = vmatpush1.xpose.msra.mxu0 0.0
    %387 = vmatprep.subr.mxu0 0.0
    %388 = vmatpush1.xpose.msra.mxu0 0.0
    %389 = vmatprep.subr.mxu0 0.0
    %390 = vmatpush1.xpose.msra.mxu0 0.0
    %391 = vmatprep.subr.mxu0 0.0
    %392 = vmatpush1.xpose.msra.mxu0 0.0
    %393 = vmatprep.subr.mxu0 0.0
    %394 = vmatpush1.xpose.msra.mxu0 0.0
    %395 = vmatprep.subr.mxu0 0.0
    %396 = vmatpush1.xpose.msra.mxu0 0.0
    %397 = vmatprep.subr.mxu0 0.0
    %398 = vmatpush1.xpose.msra.mxu0 0.0
    %399 = vmatprep.subr.mxu0 0.0
    %400 = vmatpush1.xpose.msra.mxu0 0.0
    %401 = vmatprep.subr.mxu0 0.0
    %402 = vmatpush1.xpose.msra.mxu0 0.0
    %403 = vmatprep.subr.mxu0 0.0
    %404 = vmatpush1.xpose.msra.mxu0 0.0
    %405 = vmatprep.subr.mxu0 0.0
    %406 = vmatpush1.xpose.msra.mxu0 0.0
    %407 = vmatprep.subr.mxu0 0.0
    %408 = vmatpush1.xpose.msra.mxu0 0.0
    %409 = vmatprep.subr.mxu0 0.0
    %410 = vmatpush1.xpose.msra.mxu0 0.0
    %411 = vmatprep.subr.mxu0 0.0
    %412 = vmatpush1.xpose.msra.mxu0 0.0
    %413 = vmatprep.subr.mxu0 0.0
    %414 = vmatpush1.xpose.msra.mxu0 0.0
    %415 = vmatprep.subr.mxu0 0.0
    %416 = vmatpush1.xpose.msra.mxu0 0.0
    %417 = vmatprep.subr.mxu0 0.0
    %418 = vmatpush1.xpose.msra.mxu0 0.0
    %419 = vmatprep.subr.mxu0 0.0
    %420 = vmatpush1.xpose.msra.mxu0 0.0
    %421 = vmatprep.subr.mxu0 0.0
    %422 = vmatpush1.xpose.msra.mxu0 0.0
    %423 = vmatprep.subr.mxu0 0.0
    %424 = vmatpush1.xpose.msra.mxu0 0.0
    %425 = vmatprep.subr.mxu0 0.0
    %426 = vmatpush1.xpose.msra.mxu0 0.0
    %427 = vmatprep.subr.mxu0 0.0
    %428 = vmatpush1.xpose.msra.mxu0 0.0
    %429 = vmatprep.subr.mxu0 0.0
    %430 = vmatpush1.xpose.msra.mxu0 0.0
    %431 = vmatprep.subr.mxu0 0.0
    %432 = vmatpush1.xpose.msra.mxu0 0.0
    %433 = vmatprep.subr.mxu0 0.0
    %434 = vmatpush1.xpose.msra.mxu0 0.0
    %435 = vmatprep.subr.mxu0 0.0
    %436 = vmatpush1.xpose.msra.mxu0 0.0
    %437 = vmatprep.subr.mxu0 0.0
    %438 = vmatpush1.xpose.msra.mxu0 0.0
    %439 = vmatprep.subr.mxu0 0.0
    %440 = vmatpush1.xpose.msra.mxu0 0.0
    %441 = vmatprep.subr.mxu0 0.0
    %442 = vmatpush1.xpose.msra.mxu0 0.0
    %443 = vmatprep.mubr.f32.mxu0 0.0
    %444 = vmatmul.mubr.f32.gmra.mrb[0].mxu0 %v375
    %v445 = vpop.f32.mrb[0].mxu0
    %v446 = vadd.f32 0.0, %v445
    %v447 = vpop.f32.mrb[0].mxu0
    %448 = vdwg.mxu0
    %v449 = vsel %vm374, %v342, 0
    %v451 = vsel %vm374, %v363, 0
    %453 = vmatprep.subr.mxu0 0.0
    %454 = vmatpush1.xpose.msra.mxu0 %v451
    %455 = vmatprep.subr.mxu0 0.0
    %456 = vmatpush1.xpose.msra.mxu0 0.0
    %457 = vmatprep.subr.mxu0 0.0
    %458 = vmatpush1.xpose.msra.mxu0 0.0
    %459 = vmatprep.subr.mxu0 0.0
    %460 = vmatpush1.xpose.msra.mxu0 0.0
    %461 = vmatprep.subr.mxu0 0.0
    %462 = vmatpush1.xpose.msra.mxu0 0.0
    %463 = vmatprep.subr.mxu0 0.0
    %464 = vmatpush1.xpose.msra.mxu0 0.0
    %465 = vmatprep.subr.mxu0 0.0
    %466 = vmatpush1.xpose.msra.mxu0 0.0
    %467 = vmatprep.subr.mxu0 0.0
    %468 = vmatpush1.xpose.msra.mxu0 0.0
    %469 = vmatprep.subr.mxu0 0.0
    %470 = vmatpush1.xpose.msra.mxu0 0.0
    %471 = vmatprep.subr.mxu0 0.0
    %472 = vmatpush1.xpose.msra.mxu0 0.0
    %473 = vmatprep.subr.mxu0 0.0
    %474 = vmatpush1.xpose.msra.mxu0 0.0
    %475 = vmatprep.subr.mxu0 0.0
    %476 = vmatpush1.xpose.msra.mxu0 0.0
    %477 = vmatprep.subr.mxu0 0.0
    %478 = vmatpush1.xpose.msra.mxu0 0.0
    %479 = vmatprep.subr.mxu0 0.0
    %480 = vmatpush1.xpose.msra.mxu0 0.0
    %481 = vmatprep.subr.mxu0 0.0
    %482 = vmatpush1.xpose.msra.mxu0 0.0
    %483 = vmatprep.subr.mxu0 0.0
    %484 = vmatpush1.xpose.msra.mxu0 0.0
    %485 = vmatprep.subr.mxu0 0.0
    %486 = vmatpush1.xpose.msra.mxu0 0.0
    %487 = vmatprep.subr.mxu0 0.0
    %488 = vmatpush1.xpose.msra.mxu0 0.0
    %489 = vmatprep.subr.mxu0 0.0
    %490 = vmatpush1.xpose.msra.mxu0 0.0
    %491 = vmatprep.subr.mxu0 0.0
    %492 = vmatpush1.xpose.msra.mxu0 0.0
    %493 = vmatprep.subr.mxu0 0.0
    %494 = vmatpush1.xpose.msra.mxu0 0.0
    %495 = vmatprep.subr.mxu0 0.0
    %496 = vmatpush1.xpose.msra.mxu0 0.0
    %497 = vmatprep.subr.mxu0 0.0
    %498 = vmatpush1.xpose.msra.mxu0 0.0
    %499 = vmatprep.subr.mxu0 0.0
    %500 = vmatpush1.xpose.msra.mxu0 0.0
    %501 = vmatprep.subr.mxu0 0.0
    %502 = vmatpush1.xpose.msra.mxu0 0.0
    %503 = vmatprep.subr.mxu0 0.0
    %504 = vmatpush1.xpose.msra.mxu0 0.0
    %505 = vmatprep.subr.mxu0 0.0
    %506 = vmatpush1.xpose.msra.mxu0 0.0
    %507 = vmatprep.subr.mxu0 0.0
    %508 = vmatpush1.xpose.msra.mxu0 0.0
    %509 = vmatprep.subr.mxu0 0.0
    %510 = vmatpush1.xpose.msra.mxu0 0.0
    %511 = vmatprep.subr.mxu0 0.0
    %512 = vmatpush1.xpose.msra.mxu0 0.0
    %513 = vmatprep.subr.mxu0 0.0
    %514 = vmatpush1.xpose.msra.mxu0 0.0
    %515 = vmatprep.subr.mxu0 0.0
    %516 = vmatpush1.xpose.msra.mxu0 0.0
    %517 = vmatprep.mubr.f32.mxu0 0.0
    %518 = vmatmul.mubr.f32.gmra.mrb[0].mxu0 %v449
    %v519 = vpop.f32.mrb[0].mxu0
    %v520 = vadd.f32 0.0, %v519
    %v521 = vpop.f32.mrb[0].mxu0
    %522 = vdwg.mxu0
    %523 = vrot.lane.b32.xlu0 %v349, 96
    %v524 = vpop.permute.xlu0 %523
    %v525 = vsel %vm374, %v349, 0
    %v527 = vsel %vm374, %v524, 0
    %529 = vmatprep.subr.mxu0 0.0
    %530 = vmatpush1.xpose.msra.mxu0 %v527
    %531 = vmatprep.subr.mxu0 0.0
    %532 = vmatpush1.xpose.msra.mxu0 0.0
    %533 = vmatprep.subr.mxu0 0.0
    %534 = vmatpush1.xpose.msra.mxu0 0.0
    %535 = vmatprep.subr.mxu0 0.0
    %536 = vmatpush1.xpose.msra.mxu0 0.0
    %537 = vmatprep.subr.mxu0 0.0
    %538 = vmatpush1.xpose.msra.mxu0 0.0
    %539 = vmatprep.subr.mxu0 0.0
    %540 = vmatpush1.xpose.msra.mxu0 0.0
    %541 = vmatprep.subr.mxu0 0.0
    %542 = vmatpush1.xpose.msra.mxu0 0.0
    %543 = vmatprep.subr.mxu0 0.0
    %544 = vmatpush1.xpose.msra.mxu0 0.0
    %545 = vmatprep.subr.mxu0 0.0
    %546 = vmatpush1.xpose.msra.mxu0 0.0
    %547 = vmatprep.subr.mxu0 0.0
    %548 = vmatpush1.xpose.msra.mxu0 0.0
    %549 = vmatprep.subr.mxu0 0.0
    %550 = vmatpush1.xpose.msra.mxu0 0.0
    %551 = vmatprep.subr.mxu0 0.0
    %552 = vmatpush1.xpose.msra.mxu0 0.0
    %553 = vmatprep.subr.mxu0 0.0
    %554 = vmatpush1.xpose.msra.mxu0 0.0
    %555 = vmatprep.subr.mxu0 0.0
    %556 = vmatpush1.xpose.msra.mxu0 0.0
    %557 = vmatprep.subr.mxu0 0.0
    %558 = vmatpush1.xpose.msra.mxu0 0.0
    %559 = vmatprep.subr.mxu0 0.0
    %560 = vmatpush1.xpose.msra.mxu0 0.0
    %561 = vmatprep.subr.mxu0 0.0
    %562 = vmatpush1.xpose.msra.mxu0 0.0
    %563 = vmatprep.subr.mxu0 0.0
    %564 = vmatpush1.xpose.msra.mxu0 0.0
    %565 = vmatprep.subr.mxu0 0.0
    %566 = vmatpush1.xpose.msra.mxu0 0.0
    %567 = vmatprep.subr.mxu0 0.0
    %568 = vmatpush1.xpose.msra.mxu0 0.0
    %569 = vmatprep.subr.mxu0 0.0
    %570 = vmatpush1.xpose.msra.mxu0 0.0
    %571 = vmatprep.subr.mxu0 0.0
    %572 = vmatpush1.xpose.msra.mxu0 0.0
    %573 = vmatprep.subr.mxu0 0.0
    %574 = vmatpush1.xpose.msra.mxu0 0.0
    %575 = vmatprep.subr.mxu0 0.0
    %576 = vmatpush1.xpose.msra.mxu0 0.0
    %577 = vmatprep.subr.mxu0 0.0
    %578 = vmatpush1.xpose.msra.mxu0 0.0
    %579 = vmatprep.subr.mxu0 0.0
    %580 = vmatpush1.xpose.msra.mxu0 0.0
    %581 = vmatprep.subr.mxu0 0.0
    %582 = vmatpush1.xpose.msra.mxu0 0.0
    %583 = vmatprep.subr.mxu0 0.0
    %584 = vmatpush1.xpose.msra.mxu0 0.0
    %585 = vmatprep.subr.mxu0 0.0
    %586 = vmatpush1.xpose.msra.mxu0 0.0
    %587 = vmatprep.subr.mxu0 0.0
    %588 = vmatpush1.xpose.msra.mxu0 0.0
    %589 = vmatprep.subr.mxu0 0.0
    %590 = vmatpush1.xpose.msra.mxu0 0.0
    %591 = vmatprep.subr.mxu0 0.0
    %592 = vmatpush1.xpose.msra.mxu0 0.0
    %593 = vmatprep.mubr.f32.mxu0 0.0
    %594 = vmatmul.mubr.f32.gmra.mrb[0].mxu0 %v525
    %v595 = vpop.f32.mrb[0].mxu0
    %v596 = vadd.f32 0.0, %v595
    %v597 = vpop.f32.mrb[0].mxu0
    %598 = vdwg.mxu0
    %599 = vrot.lane.b32.xlu0 %v351, 96
    %v600 = vpop.permute.xlu0 %599
    %v601 = vsel %vm374, %v351, 0
    %v603 = vsel %vm374, %v600, 0
    %605 = vmatprep.subr.mxu0 0.0
    %606 = vmatpush1.xpose.msra.mxu0 %v603
    %607 = vmatprep.subr.mxu0 0.0
    %608 = vmatpush1.xpose.msra.mxu0 0.0
    %609 = vmatprep.subr.mxu0 0.0
    %610 = vmatpush1.xpose.msra.mxu0 0.0
    %611 = vmatprep.subr.mxu0 0.0
    %612 = vmatpush1.xpose.msra.mxu0 0.0
    %613 = vmatprep.subr.mxu0 0.0
    %614 = vmatpush1.xpose.msra.mxu0 0.0
    %615 = vmatprep.subr.mxu0 0.0
    %616 = vmatpush1.xpose.msra.mxu0 0.0
    %617 = vmatprep.subr.mxu0 0.0
    %618 = vmatpush1.xpose.msra.mxu0 0.0
    %619 = vmatprep.subr.mxu0 0.0
    %620 = vmatpush1.xpose.msra.mxu0 0.0
    %621 = vmatprep.subr.mxu0 0.0
    %622 = vmatpush1.xpose.msra.mxu0 0.0
    %623 = vmatprep.subr.mxu0 0.0
    %624 = vmatpush1.xpose.msra.mxu0 0.0
    %625 = vmatprep.subr.mxu0 0.0
    %626 = vmatpush1.xpose.msra.mxu0 0.0
    %627 = vmatprep.subr.mxu0 0.0
    %628 = vmatpush1.xpose.msra.mxu0 0.0
    %629 = vmatprep.subr.mxu0 0.0
    %630 = vmatpush1.xpose.msra.mxu0 0.0
    %631 = vmatprep.subr.mxu0 0.0
    %632 = vmatpush1.xpose.msra.mxu0 0.0
    %633 = vmatprep.subr.mxu0 0.0
    %634 = vmatpush1.xpose.msra.mxu0 0.0
    %635 = vmatprep.subr.mxu0 0.0
    %636 = vmatpush1.xpose.msra.mxu0 0.0
    %637 = vmatprep.subr.mxu0 0.0
    %638 = vmatpush1.xpose.msra.mxu0 0.0
    %639 = vmatprep.subr.mxu0 0.0
    %640 = vmatpush1.xpose.msra.mxu0 0.0
    %641 = vmatprep.subr.mxu0 0.0
    %642 = vmatpush1.xpose.msra.mxu0 0.0
    %643 = vmatprep.subr.mxu0 0.0
    %644 = vmatpush1.xpose.msra.mxu0 0.0
    %645 = vmatprep.subr.mxu0 0.0
    %646 = vmatpush1.xpose.msra.mxu0 0.0
    %647 = vmatprep.subr.mxu0 0.0
    %648 = vmatpush1.xpose.msra.mxu0 0.0
    %649 = vmatprep.subr.mxu0 0.0
    %650 = vmatpush1.xpose.msra.mxu0 0.0
    %651 = vmatprep.subr.mxu0 0.0
    %652 = vmatpush1.xpose.msra.mxu0 0.0
    %653 = vmatprep.subr.mxu0 0.0
    %654 = vmatpush1.xpose.msra.mxu0 0.0
    %655 = vmatprep.subr.mxu0 0.0
    %656 = vmatpush1.xpose.msra.mxu0 0.0
    %657 = vmatprep.subr.mxu0 0.0
    %658 = vmatpush1.xpose.msra.mxu0 0.0
    %659 = vmatprep.subr.mxu0 0.0
    %660 = vmatpush1.xpose.msra.mxu0 0.0
    %661 = vmatprep.subr.mxu0 0.0
    %662 = vmatpush1.xpose.msra.mxu0 0.0
    %663 = vmatprep.subr.mxu0 0.0
    %664 = vmatpush1.xpose.msra.mxu0 0.0
    %665 = vmatprep.subr.mxu0 0.0
    %666 = vmatpush1.xpose.msra.mxu0 0.0
    %667 = vmatprep.subr.mxu0 0.0
    %668 = vmatpush1.xpose.msra.mxu0 0.0
    %669 = vmatprep.mubr.f32.mxu0 0.0
    %670 = vmatmul.mubr.f32.gmra.mrb[0].mxu0 %v601
    %v671 = vpop.f32.mrb[0].mxu0
    %v672 = vadd.f32 0.0, %v671
    %v673 = vpop.f32.mrb[0].mxu0
    %674 = vdwg.mxu0
    %675 = vrot.lane.b32.xlu0 %v353, 96
    %v676 = vpop.permute.xlu0 %675
    %v677 = vsel %vm374, %v353, 0
    %v679 = vsel %vm374, %v676, 0
    %681 = vmatprep.subr.mxu0 0.0
    %682 = vmatpush1.xpose.msra.mxu0 %v679
    %683 = vmatprep.subr.mxu0 0.0
    %684 = vmatpush1.xpose.msra.mxu0 0.0
    %685 = vmatprep.subr.mxu0 0.0
    %686 = vmatpush1.xpose.msra.mxu0 0.0
    %687 = vmatprep.subr.mxu0 0.0
    %688 = vmatpush1.xpose.msra.mxu0 0.0
    %689 = vmatprep.subr.mxu0 0.0
    %690 = vmatpush1.xpose.msra.mxu0 0.0
    %691 = vmatprep.subr.mxu0 0.0
    %692 = vmatpush1.xpose.msra.mxu0 0.0
    %693 = vmatprep.subr.mxu0 0.0
    %694 = vmatpush1.xpose.msra.mxu0 0.0
    %695 = vmatprep.subr.mxu0 0.0
    %696 = vmatpush1.xpose.msra.mxu0 0.0
    %697 = vmatprep.subr.mxu0 0.0
    %698 = vmatpush1.xpose.msra.mxu0 0.0
    %699 = vmatprep.subr.mxu0 0.0
    %700 = vmatpush1.xpose.msra.mxu0 0.0
    %701 = vmatprep.subr.mxu0 0.0
    %702 = vmatpush1.xpose.msra.mxu0 0.0
    %703 = vmatprep.subr.mxu0 0.0
    %704 = vmatpush1.xpose.msra.mxu0 0.0
    %705 = vmatprep.subr.mxu0 0.0
    %706 = vmatpush1.xpose.msra.mxu0 0.0
    %707 = vmatprep.subr.mxu0 0.0
    %708 = vmatpush1.xpose.msra.mxu0 0.0
    %709 = vmatprep.subr.mxu0 0.0
    %710 = vmatpush1.xpose.msra.mxu0 0.0
    %711 = vmatprep.subr.mxu0 0.0
    %712 = vmatpush1.xpose.msra.mxu0 0.0
    %713 = vmatprep.subr.mxu0 0.0
    %714 = vmatpush1.xpose.msra.mxu0 0.0
    %715 = vmatprep.subr.mxu0 0.0
    %716 = vmatpush1.xpose.msra.mxu0 0.0
    %717 = vmatprep.subr.mxu0 0.0
    %718 = vmatpush1.xpose.msra.mxu0 0.0
    %719 = vmatprep.subr.mxu0 0.0
    %720 = vmatpush1.xpose.msra.mxu0 0.0
    %721 = vmatprep.subr.mxu0 0.0
    %722 = vmatpush1.xpose.msra.mxu0 0.0
    %723 = vmatprep.subr.mxu0 0.0
    %724 = vmatpush1.xpose.msra.mxu0 0.0
    %725 = vmatprep.subr.mxu0 0.0
    %726 = vmatpush1.xpose.msra.mxu0 0.0
    %727 = vmatprep.subr.mxu0 0.0
    %728 = vmatpush1.xpose.msra.mxu0 0.0
    %729 = vmatprep.subr.mxu0 0.0
    %730 = vmatpush1.xpose.msra.mxu0 0.0
    %731 = vmatprep.subr.mxu0 0.0
    %732 = vmatpush1.xpose.msra.mxu0 0.0
    %733 = vmatprep.subr.mxu0 0.0
    %734 = vmatpush1.xpose.msra.mxu0 0.0
    %735 = vmatprep.subr.mxu0 0.0
    %736 = vmatpush1.xpose.msra.mxu0 0.0
    %737 = vmatprep.subr.mxu0 0.0
    %738 = vmatpush1.xpose.msra.mxu0 0.0
    %739 = vmatprep.subr.mxu0 0.0
    %740 = vmatpush1.xpose.msra.mxu0 0.0
    %741 = vmatprep.subr.mxu0 0.0
    %742 = vmatpush1.xpose.msra.mxu0 0.0
    %743 = vmatprep.subr.mxu0 0.0
    %744 = vmatpush1.xpose.msra.mxu0 0.0
    %745 = vmatprep.mubr.f32.mxu0 0.0
    %746 = vmatmul.mubr.f32.gmra.mrb[0].mxu0 %v677
    %v747 = vpop.f32.mrb[0].mxu0
    %v748 = vadd.f32 0.0, %v747
    %v749 = vpop.f32.mrb[0].mxu0
    %750 = vdwg.mxu0
    %751 = vrot.lane.b32.xlu0 %v355, 96
    %v752 = vpop.permute.xlu0 %751
    %v753 = vsel %vm374, %v355, 0
    %v755 = vsel %vm374, %v752, 0
    %757 = vmatprep.subr.mxu0 0.0
    %758 = vmatpush1.xpose.msra.mxu0 %v755
    %759 = vmatprep.subr.mxu0 0.0
    %760 = vmatpush1.xpose.msra.mxu0 0.0
    %761 = vmatprep.subr.mxu0 0.0
    %762 = vmatpush1.xpose.msra.mxu0 0.0
    %763 = vmatprep.subr.mxu0 0.0
    %764 = vmatpush1.xpose.msra.mxu0 0.0
    %765 = vmatprep.subr.mxu0 0.0
    %766 = vmatpush1.xpose.msra.mxu0 0.0
    %767 = vmatprep.subr.mxu0 0.0
    %768 = vmatpush1.xpose.msra.mxu0 0.0
    %769 = vmatprep.subr.mxu0 0.0
    %770 = vmatpush1.xpose.msra.mxu0 0.0
    %771 = vmatprep.subr.mxu0 0.0
    %772 = vmatpush1.xpose.msra.mxu0 0.0
    %773 = vmatprep.subr.mxu0 0.0
    %774 = vmatpush1.xpose.msra.mxu0 0.0
    %775 = vmatprep.subr.mxu0 0.0
    %776 = vmatpush1.xpose.msra.mxu0 0.0
    %777 = vmatprep.subr.mxu0 0.0
    %778 = vmatpush1.xpose.msra.mxu0 0.0
    %779 = vmatprep.subr.mxu0 0.0
    %780 = vmatpush1.xpose.msra.mxu0 0.0
    %781 = vmatprep.subr.mxu0 0.0
    %782 = vmatpush1.xpose.msra.mxu0 0.0
    %783 = vmatprep.subr.mxu0 0.0
    %784 = vmatpush1.xpose.msra.mxu0 0.0
    %785 = vmatprep.subr.mxu0 0.0
    %786 = vmatpush1.xpose.msra.mxu0 0.0
    %787 = vmatprep.subr.mxu0 0.0
    %788 = vmatpush1.xpose.msra.mxu0 0.0
    %789 = vmatprep.subr.mxu0 0.0
    %790 = vmatpush1.xpose.msra.mxu0 0.0
    %791 = vmatprep.subr.mxu0 0.0
    %792 = vmatpush1.xpose.msra.mxu0 0.0
    %793 = vmatprep.subr.mxu0 0.0
    %794 = vmatpush1.xpose.msra.mxu0 0.0
    %795 = vmatprep.subr.mxu0 0.0
    %796 = vmatpush1.xpose.msra.mxu0 0.0
    %797 = vmatprep.subr.mxu0 0.0
    %798 = vmatpush1.xpose.msra.mxu0 0.0
    %799 = vmatprep.subr.mxu0 0.0
    %800 = vmatpush1.xpose.msra.mxu0 0.0
    %801 = vmatprep.subr.mxu0 0.0
    %802 = vmatpush1.xpose.msra.mxu0 0.0
    %803 = vmatprep.subr.mxu0 0.0
    %804 = vmatpush1.xpose.msra.mxu0 0.0
    %805 = vmatprep.subr.mxu0 0.0
    %806 = vmatpush1.xpose.msra.mxu0 0.0
    %807 = vmatprep.subr.mxu0 0.0
    %808 = vmatpush1.xpose.msra.mxu0 0.0
    %809 = vmatprep.subr.mxu0 0.0
    %810 = vmatpush1.xpose.msra.mxu0 0.0
    %811 = vmatprep.subr.mxu0 0.0
    %812 = vmatpush1.xpose.msra.mxu0 0.0
    %813 = vmatprep.subr.mxu0 0.0
    %814 = vmatpush1.xpose.msra.mxu0 0.0
    %815 = vmatprep.subr.mxu0 0.0
    %816 = vmatpush1.xpose.msra.mxu0 0.0
    %817 = vmatprep.subr.mxu0 0.0
    %818 = vmatpush1.xpose.msra.mxu0 0.0
    %819 = vmatprep.subr.mxu0 0.0
    %820 = vmatpush1.xpose.msra.mxu0 0.0
    %821 = vmatprep.mubr.f32.mxu0 0.0
    %822 = vmatmul.mubr.f32.gmra.mrb[0].mxu0 %v753
    %v823 = vpop.f32.mrb[0].mxu0
    %v824 = vadd.f32 0.0, %v823
    %v825 = vpop.f32.mrb[0].mxu0
    %826 = vdwg.mxu0
    %827 = vrot.lane.b32.xlu0 %v357, 96
    %v828 = vpop.permute.xlu0 %827
    %v829 = vsel %vm374, %v357, 0
    %v831 = vsel %vm374, %v828, 0
    %833 = vmatprep.subr.mxu0 0.0
    %834 = vmatpush1.xpose.msra.mxu0 %v831
    %835 = vmatprep.subr.mxu0 0.0
    %836 = vmatpush1.xpose.msra.mxu0 0.0
    %837 = vmatprep.subr.mxu0 0.0
    %838 = vmatpush1.xpose.msra.mxu0 0.0
    %839 = vmatprep.subr.mxu0 0.0
    %840 = vmatpush1.xpose.msra.mxu0 0.0
    %841 = vmatprep.subr.mxu0 0.0
    %842 = vmatpush1.xpose.msra.mxu0 0.0
    %843 = vmatprep.subr.mxu0 0.0
    %844 = vmatpush1.xpose.msra.mxu0 0.0
    %845 = vmatprep.subr.mxu0 0.0
    %846 = vmatpush1.xpose.msra.mxu0 0.0
    %847 = vmatprep.subr.mxu0 0.0
    %848 = vmatpush1.xpose.msra.mxu0 0.0
    %849 = vmatprep.subr.mxu0 0.0
    %850 = vmatpush1.xpose.msra.mxu0 0.0
    %851 = vmatprep.subr.mxu0 0.0
    %852 = vmatpush1.xpose.msra.mxu0 0.0
    %853 = vmatprep.subr.mxu0 0.0
    %854 = vmatpush1.xpose.msra.mxu0 0.0
    %855 = vmatprep.subr.mxu0 0.0
    %856 = vmatpush1.xpose.msra.mxu0 0.0
    %857 = vmatprep.subr.mxu0 0.0
    %858 = vmatpush1.xpose.msra.mxu0 0.0
    %859 = vmatprep.subr.mxu0 0.0
    %860 = vmatpush1.xpose.msra.mxu0 0.0
    %861 = vmatprep.subr.mxu0 0.0
    %862 = vmatpush1.xpose.msra.mxu0 0.0
    %863 = vmatprep.subr.mxu0 0.0
    %864 = vmatpush1.xpose.msra.mxu0 0.0
    %865 = vmatprep.subr.mxu0 0.0
    %866 = vmatpush1.xpose.msra.mxu0 0.0
    %867 = vmatprep.subr.mxu0 0.0
    %868 = vmatpush1.xpose.msra.mxu0 0.0
    %869 = vmatprep.subr.mxu0 0.0
    %870 = vmatpush1.xpose.msra.mxu0 0.0
    %871 = vmatprep.subr.mxu0 0.0
    %872 = vmatpush1.xpose.msra.mxu0 0.0
    %873 = vmatprep.subr.mxu0 0.0
    %874 = vmatpush1.xpose.msra.mxu0 0.0
    %875 = vmatprep.subr.mxu0 0.0
    %876 = vmatpush1.xpose.msra.mxu0 0.0
    %877 = vmatprep.subr.mxu0 0.0
    %878 = vmatpush1.xpose.msra.mxu0 0.0
    %879 = vmatprep.subr.mxu0 0.0
    %880 = vmatpush1.xpose.msra.mxu0 0.0
    %881 = vmatprep.subr.mxu0 0.0
    %882 = vmatpush1.xpose.msra.mxu0 0.0
    %883 = vmatprep.subr.mxu0 0.0
    %884 = vmatpush1.xpose.msra.mxu0 0.0
    %885 = vmatprep.subr.mxu0 0.0
    %886 = vmatpush1.xpose.msra.mxu0 0.0
    %887 = vmatprep.subr.mxu0 0.0
    %888 = vmatpush1.xpose.msra.mxu0 0.0
    %889 = vmatprep.subr.mxu0 0.0
    %890 = vmatpush1.xpose.msra.mxu0 0.0
    %891 = vmatprep.subr.mxu0 0.0
    %892 = vmatpush1.xpose.msra.mxu0 0.0
    %893 = vmatprep.subr.mxu0 0.0
    %894 = vmatpush1.xpose.msra.mxu0 0.0
    %895 = vmatprep.subr.mxu0 0.0
    %896 = vmatpush1.xpose.msra.mxu0 0.0
    %897 = vmatprep.mubr.f32.mxu0 0.0
    %898 = vmatmul.mubr.f32.gmra.mrb[0].mxu0 %v829
    %v899 = vpop.f32.mrb[0].mxu0
    %v900 = vadd.f32 0.0, %v899
    %v901 = vpop.f32.mrb[0].mxu0
    %902 = vdwg.mxu0
    %903 = vrot.lane.b32.xlu0 %v359, 96
    %v904 = vpop.permute.xlu0 %903
    %v905 = vsel %vm374, %v359, 0
    %v907 = vsel %vm374, %v904, 0
    %909 = vmatprep.subr.mxu0 0.0
    %910 = vmatpush1.xpose.msra.mxu0 %v907
    %911 = vmatprep.subr.mxu0 0.0
    %912 = vmatpush1.xpose.msra.mxu0 0.0
    %913 = vmatprep.subr.mxu0 0.0
    %914 = vmatpush1.xpose.msra.mxu0 0.0
    %915 = vmatprep.subr.mxu0 0.0
    %916 = vmatpush1.xpose.msra.mxu0 0.0
    %917 = vmatprep.subr.mxu0 0.0
    %918 = vmatpush1.xpose.msra.mxu0 0.0
    %919 = vmatprep.subr.mxu0 0.0
    %920 = vmatpush1.xpose.msra.mxu0 0.0
    %921 = vmatprep.subr.mxu0 0.0
    %922 = vmatpush1.xpose.msra.mxu0 0.0
    %923 = vmatprep.subr.mxu0 0.0
    %924 = vmatpush1.xpose.msra.mxu0 0.0
    %925 = vmatprep.subr.mxu0 0.0
    %926 = vmatpush1.xpose.msra.mxu0 0.0
    %927 = vmatprep.subr.mxu0 0.0
    %928 = vmatpush1.xpose.msra.mxu0 0.0
    %929 = vmatprep.subr.mxu0 0.0
    %930 = vmatpush1.xpose.msra.mxu0 0.0
    %931 = vmatprep.subr.mxu0 0.0
    %932 = vmatpush1.xpose.msra.mxu0 0.0
    %933 = vmatprep.subr.mxu0 0.0
    %934 = vmatpush1.xpose.msra.mxu0 0.0
    %935 = vmatprep.subr.mxu0 0.0
    %936 = vmatpush1.xpose.msra.mxu0 0.0
    %937 = vmatprep.subr.mxu0 0.0
    %938 = vmatpush1.xpose.msra.mxu0 0.0
    %939 = vmatprep.subr.mxu0 0.0
    %940 = vmatpush1.xpose.msra.mxu0 0.0
    %941 = vmatprep.subr.mxu0 0.0
    %942 = vmatpush1.xpose.msra.mxu0 0.0
    %943 = vmatprep.subr.mxu0 0.0
    %944 = vmatpush1.xpose.msra.mxu0 0.0
    %945 = vmatprep.subr.mxu0 0.0
    %946 = vmatpush1.xpose.msra.mxu0 0.0
    %947 = vmatprep.subr.mxu0 0.0
    %948 = vmatpush1.xpose.msra.mxu0 0.0
    %949 = vmatprep.subr.mxu0 0.0
    %950 = vmatpush1.xpose.msra.mxu0 0.0
    %951 = vmatprep.subr.mxu0 0.0
    %952 = vmatpush1.xpose.msra.mxu0 0.0
    %953 = vmatprep.subr.mxu0 0.0
    %954 = vmatpush1.xpose.msra.mxu0 0.0
    %955 = vmatprep.subr.mxu0 0.0
    %956 = vmatpush1.xpose.msra.mxu0 0.0
    %957 = vmatprep.subr.mxu0 0.0
    %958 = vmatpush1.xpose.msra.mxu0 0.0
    %959 = vmatprep.subr.mxu0 0.0
    %960 = vmatpush1.xpose.msra.mxu0 0.0
    %961 = vmatprep.subr.mxu0 0.0
    %962 = vmatpush1.xpose.msra.mxu0 0.0
    %963 = vmatprep.subr.mxu0 0.0
    %964 = vmatpush1.xpose.msra.mxu0 0.0
    %965 = vmatprep.subr.mxu0 0.0
    %966 = vmatpush1.xpose.msra.mxu0 0.0
    %967 = vmatprep.subr.mxu0 0.0
    %968 = vmatpush1.xpose.msra.mxu0 0.0
    %969 = vmatprep.subr.mxu0 0.0
    %970 = vmatpush1.xpose.msra.mxu0 0.0
    %971 = vmatprep.subr.mxu0 0.0
    %972 = vmatpush1.xpose.msra.mxu0 0.0
    %973 = vmatprep.mubr.f32.mxu0 0.0
    %974 = vmatmul.mubr.f32.gmra.mrb[0].mxu0 %v905
    %v975 = vpop.f32.mrb[0].mxu0
    %v976 = vadd.f32 0.0, %v975
    %v977 = vpop.f32.mrb[0].mxu0
    %978 = vdwg.mxu0
    %v979 = vmul.f32 %v446, 0.35355338
    %v980 = vmul.f32 %v520, 0.35355338
    %v981 = vmul.f32 %v596, 0.35355338
    %v982 = vmul.f32 %v672, 0.35355338
    %v983 = vmul.f32 %v748, 0.35355338
    %v984 = vmul.f32 %v824, 0.35355338
    %v985 = vmul.f32 %v900, 0.35355338
    %v986 = vmul.f32 %v976, 0.35355338
    %v987 = vsel %vm374, %v979, -inf
    %988 = vmax.xlane.f32.xlu0 %v987
    %v989 = vpop.xlane.xlu0 %988
    %v990 = vsel %vm374, %v980, -inf
    %991 = vmax.xlane.f32.xlu0 %v990
    %v992 = vpop.xlane.xlu0 %991
    %v993 = vsel %vm374, %v981, -inf
    %994 = vmax.xlane.f32.xlu0 %v993
    %v995 = vpop.xlane.xlu0 %994
    %v996 = vsel %vm374, %v982, -inf
    %997 = vmax.xlane.f32.xlu0 %v996
    %v998 = vpop.xlane.xlu0 %997
    %v999 = vsel %vm374, %v983, -inf
    %1000 = vmax.xlane.f32.xlu0 %v999
    %v1001 = vpop.xlane.xlu0 %1000
    %v1002 = vsel %vm374, %v984, -inf
    %1003 = vmax.xlane.f32.xlu0 %v1002
    %v1004 = vpop.xlane.xlu0 %1003
    %v1005 = vsel %vm374, %v985, -inf
    %1006 = vmax.xlane.f32.xlu0 %v1005
    %v1007 = vpop.xlane.xlu0 %1006
    %v1008 = vsel %vm374, %v986, -inf
    %1009 = vmax.xlane.f32.xlu0 %v1008
    %v1010 = vpop.xlane.xlu0 %1009
    %v1011 = vsub.f32 %v979, %v989
    %v1012 = vsub.f32 %v980, %v992
    %v1013 = vsub.f32 %v981, %v995
    %v1014 = vsub.f32 %v982, %v998
    %v1015 = vsub.f32 %v983, %v1001
    %v1016 = vsub.f32 %v984, %v1004
    %v1017 = vsub.f32 %v985, %v1007
    %v1018 = vsub.f32 %v986, %v1010
    %v1019 = vmul.f32 %v1011, 1.442695
    %v1020 = vpow.pop %v1019
    %v1021 = vmul.f32 %v1012, 1.442695
    %v1022 = vpow.pop %v1021
    %v1023 = vmul.f32 %v1013, 1.442695
    %v1024 = vpow.pop %v1023
    %v1025 = vmul.f32 %v1014, 1.442695
    %v1026 = vpow.pop %v1025
    %v1027 = vmul.f32 %v1015, 1.442695
    %v1028 = vpow.pop %v1027
    %v1029 = vmul.f32 %v1016, 1.442695
    %v1030 = vpow.pop %v1029
    %v1031 = vmul.f32 %v1017, 1.442695
    %v1032 = vpow.pop %v1031
    %v1033 = vmul.f32 %v1018, 1.442695
    %v1034 = vpow.pop %v1033
    %v1035 = vsel %vm374, %v1020, 0.0
    %1036 = vadd.xlane.f32.xlu0 %v1035
    %v1037 = vpop.xlane.xlu0 %1036
    %v1038 = vsel %vm374, %v1022, 0.0
    %1039 = vadd.xlane.f32.xlu0 %v1038
    %v1040 = vpop.xlane.xlu0 %1039
    %v1041 = vsel %vm374, %v1024, 0.0
    %1042 = vadd.xlane.f32.xlu0 %v1041
    %v1043 = vpop.xlane.xlu0 %1042
    %v1044 = vsel %vm374, %v1026, 0.0
    %1045 = vadd.xlane.f32.xlu0 %v1044
    %v1046 = vpop.xlane.xlu0 %1045
    %v1047 = vsel %vm374, %v1028, 0.0
    %1048 = vadd.xlane.f32.xlu0 %v1047
    %v1049 = vpop.xlane.xlu0 %1048
    %v1050 = vsel %vm374, %v1030, 0.0
    %1051 = vadd.xlane.f32.xlu0 %v1050
    %v1052 = vpop.xlane.xlu0 %1051
    %v1053 = vsel %vm374, %v1032, 0.0
    %1054 = vadd.xlane.f32.xlu0 %v1053
    %v1055 = vpop.xlane.xlu0 %1054
    %v1056 = vsel %vm374, %v1034, 0.0
    %1057 = vadd.xlane.f32.xlu0 %v1056
    %v1058 = vpop.xlane.xlu0 %1057
    %v1059 = vrcp.pop %v1037
    %v1060 = vmul.f32 %v1020, %v1059
    %v1061 = vrcp.pop %v1040
    %v1062 = vmul.f32 %v1022, %v1061
    %v1063 = vrcp.pop %v1043
    %v1064 = vmul.f32 %v1024, %v1063
    %v1065 = vrcp.pop %v1046
    %v1066 = vmul.f32 %v1026, %v1065
    %v1067 = vrcp.pop %v1049
    %v1068 = vmul.f32 %v1028, %v1067
    %v1069 = vrcp.pop %v1052
    %v1070 = vmul.f32 %v1030, %v1069
    %v1071 = vrcp.pop %v1055
    %v1072 = vmul.f32 %v1032, %v1071
    %v1073 = vrcp.pop %v1058
    %v1074 = vmul.f32 %v1034, %v1073
    %1075 = vrot.lane.b32.xlu0 %v336, 64
    %v1076 = vpop.permute.xlu0 %1075
    %v1079 = vsel %vm374, %v1060, 0
    %1081 = vmatprep.subr.mxu0 0.0
    %1082 = vmatpush1.msra.mxu0 %v1076
    %1083 = vmatprep.subr.mxu0 0.0
    %1084 = vmatpush1.msra.mxu0 0.0
    %1085 = vmatprep.subr.mxu0 0.0
    %1086 = vmatpush1.msra.mxu0 0.0
    %1087 = vmatprep.subr.mxu0 0.0
    %1088 = vmatpush1.msra.mxu0 0.0
    %1089 = vmatprep.subr.mxu0 0.0
    %1090 = vmatpush1.msra.mxu0 0.0
    %1091 = vmatprep.subr.mxu0 0.0
    %1092 = vmatpush1.msra.mxu0 0.0
    %1093 = vmatprep.subr.mxu0 0.0
    %1094 = vmatpush1.msra.mxu0 0.0
    %1095 = vmatprep.subr.mxu0 0.0
    %1096 = vmatpush1.msra.mxu0 0.0
    %1097 = vmatprep.subr.mxu0 0.0
    %1098 = vmatpush1.msra.mxu0 0.0
    %1099 = vmatprep.subr.mxu0 0.0
    %1100 = vmatpush1.msra.mxu0 0.0
    %1101 = vmatprep.subr.mxu0 0.0
    %1102 = vmatpush1.msra.mxu0 0.0
    %1103 = vmatprep.subr.mxu0 0.0
    %1104 = vmatpush1.msra.mxu0 0.0
    %1105 = vmatprep.subr.mxu0 0.0
    %1106 = vmatpush1.msra.mxu0 0.0
    %1107 = vmatprep.subr.mxu0 0.0
    %1108 = vmatpush1.msra.mxu0 0.0
    %1109 = vmatprep.subr.mxu0 0.0
    %1110 = vmatpush1.msra.mxu0 0.0
    %1111 = vmatprep.subr.mxu0 0.0
    %1112 = vmatpush1.msra.mxu0 0.0
    %1113 = vmatprep.subr.mxu0 0.0
    %1114 = vmatpush1.msra.mxu0 0.0
    %1115 = vmatprep.subr.mxu0 0.0
    %1116 = vmatpush1.msra.mxu0 0.0
    %1117 = vmatprep.subr.mxu0 0.0
    %1118 = vmatpush1.msra.mxu0 0.0
    %1119 = vmatprep.subr.mxu0 0.0
    %1120 = vmatpush1.msra.mxu0 0.0
    %1121 = vmatprep.subr.mxu0 0.0
    %1122 = vmatpush1.msra.mxu0 0.0
    %1123 = vmatprep.subr.mxu0 0.0
    %1124 = vmatpush1.msra.mxu0 0.0
    %1125 = vmatprep.subr.mxu0 0.0
    %1126 = vmatpush1.msra.mxu0 0.0
    %1127 = vmatprep.subr.mxu0 0.0
    %1128 = vmatpush1.msra.mxu0 0.0
    %1129 = vmatprep.subr.mxu0 0.0
    %1130 = vmatpush1.msra.mxu0 0.0
    %1131 = vmatprep.subr.mxu0 0.0
    %1132 = vmatpush1.msra.mxu0 0.0
    %1133 = vmatprep.subr.mxu0 0.0
    %1134 = vmatpush1.msra.mxu0 0.0
    %1135 = vmatprep.subr.mxu0 0.0
    %1136 = vmatpush1.msra.mxu0 0.0
    %1137 = vmatprep.subr.mxu0 0.0
    %1138 = vmatpush1.msra.mxu0 0.0
    %1139 = vmatprep.subr.mxu0 0.0
    %1140 = vmatpush1.msra.mxu0 0.0
    %1141 = vmatprep.subr.mxu0 0.0
    %1142 = vmatpush1.msra.mxu0 0.0
    %1143 = vmatprep.subr.mxu0 0.0
    %1144 = vmatpush1.msra.mxu0 0.0
    %1145 = vmatprep.mubr.f32.mxu0 0.0
    %1146 = vmatmul.mubr.f32.gmra.mrb[0].mxu0 %v1079
    %v1147 = vpop.f32.mrb[0].mxu0
    %v1148 = vadd.f32 0.0, %v1147
    %v1149 = vpop.f32.mrb[0].mxu0
    %1150 = vdwg.mxu0
    %1151 = vrot.lane.b32.xlu0 %v342, 64
    %v1152 = vpop.permute.xlu0 %1151
    %v1155 = vsel %vm374, %v1062, 0
    %1157 = vmatprep.subr.mxu0 0.0
    %1158 = vmatpush1.msra.mxu0 %v1152
    %1159 = vmatprep.subr.mxu0 0.0
    %1160 = vmatpush1.msra.mxu0 0.0
    %1161 = vmatprep.subr.mxu0 0.0
    %1162 = vmatpush1.msra.mxu0 0.0
    %1163 = vmatprep.subr.mxu0 0.0
    %1164 = vmatpush1.msra.mxu0 0.0
    %1165 = vmatprep.subr.mxu0 0.0
    %1166 = vmatpush1.msra.mxu0 0.0
    %1167 = vmatprep.subr.mxu0 0.0
    %1168 = vmatpush1.msra.mxu0 0.0
    %1169 = vmatprep.subr.mxu0 0.0
    %1170 = vmatpush1.msra.mxu0 0.0
    %1171 = vmatprep.subr.mxu0 0.0
    %1172 = vmatpush1.msra.mxu0 0.0
    %1173 = vmatprep.subr.mxu0 0.0
    %1174 = vmatpush1.msra.mxu0 0.0
    %1175 = vmatprep.subr.mxu0 0.0
    %1176 = vmatpush1.msra.mxu0 0.0
    %1177 = vmatprep.subr.mxu0 0.0
    %1178 = vmatpush1.msra.mxu0 0.0
    %1179 = vmatprep.subr.mxu0 0.0
    %1180 = vmatpush1.msra.mxu0 0.0
    %1181 = vmatprep.subr.mxu0 0.0
    %1182 = vmatpush1.msra.mxu0 0.0
    %1183 = vmatprep.subr.mxu0 0.0
    %1184 = vmatpush1.msra.mxu0 0.0
    %1185 = vmatprep.subr.mxu0 0.0
    %1186 = vmatpush1.msra.mxu0 0.0
    %1187 = vmatprep.subr.mxu0 0.0
    %1188 = vmatpush1.msra.mxu0 0.0
    %1189 = vmatprep.subr.mxu0 0.0
    %1190 = vmatpush1.msra.mxu0 0.0
    %1191 = vmatprep.subr.mxu0 0.0
    %1192 = vmatpush1.msra.mxu0 0.0
    %1193 = vmatprep.subr.mxu0 0.0
    %1194 = vmatpush1.msra.mxu0 0.0
    %1195 = vmatprep.subr.mxu0 0.0
    %1196 = vmatpush1.msra.mxu0 0.0
    %1197 = vmatprep.subr.mxu0 0.0
    %1198 = vmatpush1.msra.mxu0 0.0
    %1199 = vmatprep.subr.mxu0 0.0
    %1200 = vmatpush1.msra.mxu0 0.0
    %1201 = vmatprep.subr.mxu0 0.0
    %1202 = vmatpush1.msra.mxu0 0.0
    %1203 = vmatprep.subr.mxu0 0.0
    %1204 = vmatpush1.msra.mxu0 0.0
    %1205 = vmatprep.subr.mxu0 0.0
    %1206 = vmatpush1.msra.mxu0 0.0
    %1207 = vmatprep.subr.mxu0 0.0
    %1208 = vmatpush1.msra.mxu0 0.0
    %1209 = vmatprep.subr.mxu0 0.0
    %1210 = vmatpush1.msra.mxu0 0.0
    %1211 = vmatprep.subr.mxu0 0.0
    %1212 = vmatpush1.msra.mxu0 0.0
    %1213 = vmatprep.subr.mxu0 0.0
    %1214 = vmatpush1.msra.mxu0 0.0
    %1215 = vmatprep.subr.mxu0 0.0
    %1216 = vmatpush1.msra.mxu0 0.0
    %1217 = vmatprep.subr.mxu0 0.0
    %1218 = vmatpush1.msra.mxu0 0.0
    %1219 = vmatprep.subr.mxu0 0.0
    %1220 = vmatpush1.msra.mxu0 0.0
    %1221 = vmatprep.mubr.f32.mxu0 0.0
    %1222 = vmatmul.mubr.f32.gmra.mrb[0].mxu0 %v1155
    %v1223 = vpop.f32.mrb[0].mxu0
    %v1224 = vadd.f32 0.0, %v1223
    %v1225 = vpop.f32.mrb[0].mxu0
    %1226 = vdwg.mxu0
    %1227 = vrot.lane.b32.xlu0 %v361, 64
    %v1228 = vpop.permute.xlu0 %1227
    %v1231 = vsel %vm374, %v1064, 0
    %1233 = vmatprep.subr.mxu0 0.0
    %1234 = vmatpush1.msra.mxu0 %v1228
    %1235 = vmatprep.subr.mxu0 0.0
    %1236 = vmatpush1.msra.mxu0 0.0
    %1237 = vmatprep.subr.mxu0 0.0
    %1238 = vmatpush1.msra.mxu0 0.0
    %1239 = vmatprep.subr.mxu0 0.0
    %1240 = vmatpush1.msra.mxu0 0.0
    %1241 = vmatprep.subr.mxu0 0.0
    %1242 = vmatpush1.msra.mxu0 0.0
    %1243 = vmatprep.subr.mxu0 0.0
    %1244 = vmatpush1.msra.mxu0 0.0
    %1245 = vmatprep.subr.mxu0 0.0
    %1246 = vmatpush1.msra.mxu0 0.0
    %1247 = vmatprep.subr.mxu0 0.0
    %1248 = vmatpush1.msra.mxu0 0.0
    %1249 = vmatprep.subr.mxu0 0.0
    %1250 = vmatpush1.msra.mxu0 0.0
    %1251 = vmatprep.subr.mxu0 0.0
    %1252 = vmatpush1.msra.mxu0 0.0
    %1253 = vmatprep.subr.mxu0 0.0
    %1254 = vmatpush1.msra.mxu0 0.0
    %1255 = vmatprep.subr.mxu0 0.0
    %1256 = vmatpush1.msra.mxu0 0.0
    %1257 = vmatprep.subr.mxu0 0.0
    %1258 = vmatpush1.msra.mxu0 0.0
    %1259 = vmatprep.subr.mxu0 0.0
    %1260 = vmatpush1.msra.mxu0 0.0
    %1261 = vmatprep.subr.mxu0 0.0
    %1262 = vmatpush1.msra.mxu0 0.0
    %1263 = vmatprep.subr.mxu0 0.0
    %1264 = vmatpush1.msra.mxu0 0.0
    %1265 = vmatprep.subr.mxu0 0.0
    %1266 = vmatpush1.msra.mxu0 0.0
    %1267 = vmatprep.subr.mxu0 0.0
    %1268 = vmatpush1.msra.mxu0 0.0
    %1269 = vmatprep.subr.mxu0 0.0
    %1270 = vmatpush1.msra.mxu0 0.0
    %1271 = vmatprep.subr.mxu0 0.0
    %1272 = vmatpush1.msra.mxu0 0.0
    %1273 = vmatprep.subr.mxu0 0.0
    %1274 = vmatpush1.msra.mxu0 0.0
    %1275 = vmatprep.subr.mxu0 0.0
    %1276 = vmatpush1.msra.mxu0 0.0
    %1277 = vmatprep.subr.mxu0 0.0
    %1278 = vmatpush1.msra.mxu0 0.0
    %1279 = vmatprep.subr.mxu0 0.0
    %1280 = vmatpush1.msra.mxu0 0.0
    %1281 = vmatprep.subr.mxu0 0.0
    %1282 = vmatpush1.msra.mxu0 0.0
    %1283 = vmatprep.subr.mxu0 0.0
    %1284 = vmatpush1.msra.mxu0 0.0
    %1285 = vmatprep.subr.mxu0 0.0
    %1286 = vmatpush1.msra.mxu0 0.0
    %1287 = vmatprep.subr.mxu0 0.0
    %1288 = vmatpush1.msra.mxu0 0.0
    %1289 = vmatprep.subr.mxu0 0.0
    %1290 = vmatpush1.msra.mxu0 0.0
    %1291 = vmatprep.subr.mxu0 0.0
    %1292 = vmatpush1.msra.mxu0 0.0
    %1293 = vmatprep.subr.mxu0 0.0
    %1294 = vmatpush1.msra.mxu0 0.0
    %1295 = vmatprep.subr.mxu0 0.0
    %1296 = vmatpush1.msra.mxu0 0.0
    %1297 = vmatprep.mubr.f32.mxu0 0.0
    %1298 = vmatmul.mubr.f32.gmra.mrb[0].mxu0 %v1231
    %v1299 = vpop.f32.mrb[0].mxu0
    %v1300 = vadd.f32 0.0, %v1299
    %v1301 = vpop.f32.mrb[0].mxu0
    %1302 = vdwg.mxu0
    %1303 = vrot.lane.b32.xlu0 %v363, 64
    %v1304 = vpop.permute.xlu0 %1303
    %v1307 = vsel %vm374, %v1066, 0
    %1309 = vmatprep.subr.mxu0 0.0
    %1310 = vmatpush1.msra.mxu0 %v1304
    %1311 = vmatprep.subr.mxu0 0.0
    %1312 = vmatpush1.msra.mxu0 0.0
    %1313 = vmatprep.subr.mxu0 0.0
    %1314 = vmatpush1.msra.mxu0 0.0
    %1315 = vmatprep.subr.mxu0 0.0
    %1316 = vmatpush1.msra.mxu0 0.0
    %1317 = vmatprep.subr.mxu0 0.0
    %1318 = vmatpush1.msra.mxu0 0.0
    %1319 = vmatprep.subr.mxu0 0.0
    %1320 = vmatpush1.msra.mxu0 0.0
    %1321 = vmatprep.subr.mxu0 0.0
    %1322 = vmatpush1.msra.mxu0 0.0
    %1323 = vmatprep.subr.mxu0 0.0
    %1324 = vmatpush1.msra.mxu0 0.0
    %1325 = vmatprep.subr.mxu0 0.0
    %1326 = vmatpush1.msra.mxu0 0.0
    %1327 = vmatprep.subr.mxu0 0.0
    %1328 = vmatpush1.msra.mxu0 0.0
    %1329 = vmatprep.subr.mxu0 0.0
    %1330 = vmatpush1.msra.mxu0 0.0
    %1331 = vmatprep.subr.mxu0 0.0
    %1332 = vmatpush1.msra.mxu0 0.0
    %1333 = vmatprep.subr.mxu0 0.0
    %1334 = vmatpush1.msra.mxu0 0.0
    %1335 = vmatprep.subr.mxu0 0.0
    %1336 = vmatpush1.msra.mxu0 0.0
    %1337 = vmatprep.subr.mxu0 0.0
    %1338 = vmatpush1.msra.mxu0 0.0
    %1339 = vmatprep.subr.mxu0 0.0
    %1340 = vmatpush1.msra.mxu0 0.0
    %1341 = vmatprep.subr.mxu0 0.0
    %1342 = vmatpush1.msra.mxu0 0.0
    %1343 = vmatprep.subr.mxu0 0.0
    %1344 = vmatpush1.msra.mxu0 0.0
    %1345 = vmatprep.subr.mxu0 0.0
    %1346 = vmatpush1.msra.mxu0 0.0
    %1347 = vmatprep.subr.mxu0 0.0
    %1348 = vmatpush1.msra.mxu0 0.0
    %1349 = vmatprep.subr.mxu0 0.0
    %1350 = vmatpush1.msra.mxu0 0.0
    %1351 = vmatprep.subr.mxu0 0.0
    %1352 = vmatpush1.msra.mxu0 0.0
    %1353 = vmatprep.subr.mxu0 0.0
    %1354 = vmatpush1.msra.mxu0 0.0
    %1355 = vmatprep.subr.mxu0 0.0
    %1356 = vmatpush1.msra.mxu0 0.0
    %1357 = vmatprep.subr.mxu0 0.0
    %1358 = vmatpush1.msra.mxu0 0.0
    %1359 = vmatprep.subr.mxu0 0.0
    %1360 = vmatpush1.msra.mxu0 0.0
    %1361 = vmatprep.subr.mxu0 0.0
    %1362 = vmatpush1.msra.mxu0 0.0
    %1363 = vmatprep.subr.mxu0 0.0
    %1364 = vmatpush1.msra.mxu0 0.0
    %1365 = vmatprep.subr.mxu0 0.0
    %1366 = vmatpush1.msra.mxu0 0.0
    %1367 = vmatprep.subr.mxu0 0.0
    %1368 = vmatpush1.msra.mxu0 0.0
    %1369 = vmatprep.subr.mxu0 0.0
    %1370 = vmatpush1.msra.mxu0 0.0
    %1371 = vmatprep.subr.mxu0 0.0
    %1372 = vmatpush1.msra.mxu0 0.0
    %1373 = vmatprep.mubr.f32.mxu0 0.0
    %1374 = vmatmul.mubr.f32.gmra.mrb[0].mxu0 %v1307
    %v1375 = vpop.f32.mrb[0].mxu0
    %v1376 = vadd.f32 0.0, %v1375
    %v1377 = vpop.f32.mrb[0].mxu0
    %1378 = vdwg.mxu0
    %1379 = vrot.lane.b32.xlu0 %v367, 64
    %v1380 = vpop.permute.xlu0 %1379
    %v1383 = vsel %vm374, %v1068, 0
    %1385 = vmatprep.subr.mxu0 0.0
    %1386 = vmatpush1.msra.mxu0 %v1380
    %1387 = vmatprep.subr.mxu0 0.0
    %1388 = vmatpush1.msra.mxu0 0.0
    %1389 = vmatprep.subr.mxu0 0.0
    %1390 = vmatpush1.msra.mxu0 0.0
    %1391 = vmatprep.subr.mxu0 0.0
    %1392 = vmatpush1.msra.mxu0 0.0
    %1393 = vmatprep.subr.mxu0 0.0
    %1394 = vmatpush1.msra.mxu0 0.0
    %1395 = vmatprep.subr.mxu0 0.0
    %1396 = vmatpush1.msra.mxu0 0.0
    %1397 = vmatprep.subr.mxu0 0.0
    %1398 = vmatpush1.msra.mxu0 0.0
    %1399 = vmatprep.subr.mxu0 0.0
    %1400 = vmatpush1.msra.mxu0 0.0
    %1401 = vmatprep.subr.mxu0 0.0
    %1402 = vmatpush1.msra.mxu0 0.0
    %1403 = vmatprep.subr.mxu0 0.0
    %1404 = vmatpush1.msra.mxu0 0.0
    %1405 = vmatprep.subr.mxu0 0.0
    %1406 = vmatpush1.msra.mxu0 0.0
    %1407 = vmatprep.subr.mxu0 0.0
    %1408 = vmatpush1.msra.mxu0 0.0
    %1409 = vmatprep.subr.mxu0 0.0
    %1410 = vmatpush1.msra.mxu0 0.0
    %1411 = vmatprep.subr.mxu0 0.0
    %1412 = vmatpush1.msra.mxu0 0.0
    %1413 = vmatprep.subr.mxu0 0.0
    %1414 = vmatpush1.msra.mxu0 0.0
    %1415 = vmatprep.subr.mxu0 0.0
    %1416 = vmatpush1.msra.mxu0 0.0
    %1417 = vmatprep.subr.mxu0 0.0
    %1418 = vmatpush1.msra.mxu0 0.0
    %1419 = vmatprep.subr.mxu0 0.0
    %1420 = vmatpush1.msra.mxu0 0.0
    %1421 = vmatprep.subr.mxu0 0.0
    %1422 = vmatpush1.msra.mxu0 0.0
    %1423 = vmatprep.subr.mxu0 0.0
    %1424 = vmatpush1.msra.mxu0 0.0
    %1425 = vmatprep.subr.mxu0 0.0
    %1426 = vmatpush1.msra.mxu0 0.0
    %1427 = vmatprep.subr.mxu0 0.0
    %1428 = vmatpush1.msra.mxu0 0.0
    %1429 = vmatprep.subr.mxu0 0.0
    %1430 = vmatpush1.msra.mxu0 0.0
    %1431 = vmatprep.subr.mxu0 0.0
    %1432 = vmatpush1.msra.mxu0 0.0
    %1433 = vmatprep.subr.mxu0 0.0
    %1434 = vmatpush1.msra.mxu0 0.0
    %1435 = vmatprep.subr.mxu0 0.0
    %1436 = vmatpush1.msra.mxu0 0.0
    %1437 = vmatprep.subr.mxu0 0.0
    %1438 = vmatpush1.msra.mxu0 0.0
    %1439 = vmatprep.subr.mxu0 0.0
    %1440 = vmatpush1.msra.mxu0 0.0
    %1441 = vmatprep.subr.mxu0 0.0
    %1442 = vmatpush1.msra.mxu0 0.0
    %1443 = vmatprep.subr.mxu0 0.0
    %1444 = vmatpush1.msra.mxu0 0.0
    %1445 = vmatprep.subr.mxu0 0.0
    %1446 = vmatpush1.msra.mxu0 0.0
    %1447 = vmatprep.subr.mxu0 0.0
    %1448 = vmatpush1.msra.mxu0 0.0
    %1449 = vmatprep.mubr.f32.mxu0 0.0
    %1450 = vmatmul.mubr.f32.gmra.mrb[0].mxu0 %v1383
    %v1451 = vpop.f32.mrb[0].mxu0
    %v1452 = vadd.f32 0.0, %v1451
    %v1453 = vpop.f32.mrb[0].mxu0
    %1454 = vdwg.mxu0
    %1455 = vrot.lane.b32.xlu0 %v369, 64
    %v1456 = vpop.permute.xlu0 %1455
    %v1459 = vsel %vm374, %v1070, 0
    %1461 = vmatprep.subr.mxu0 0.0
    %1462 = vmatpush1.msra.mxu0 %v1456
    %1463 = vmatprep.subr.mxu0 0.0
    %1464 = vmatpush1.msra.mxu0 0.0
    %1465 = vmatprep.subr.mxu0 0.0
    %1466 = vmatpush1.msra.mxu0 0.0
    %1467 = vmatprep.subr.mxu0 0.0
    %1468 = vmatpush1.msra.mxu0 0.0
    %1469 = vmatprep.subr.mxu0 0.0
    %1470 = vmatpush1.msra.mxu0 0.0
    %1471 = vmatprep.subr.mxu0 0.0
    %1472 = vmatpush1.msra.mxu0 0.0
    %1473 = vmatprep.subr.mxu0 0.0
    %1474 = vmatpush1.msra.mxu0 0.0
    %1475 = vmatprep.subr.mxu0 0.0
    %1476 = vmatpush1.msra.mxu0 0.0
    %1477 = vmatprep.subr.mxu0 0.0
    %1478 = vmatpush1.msra.mxu0 0.0
    %1479 = vmatprep.subr.mxu0 0.0
    %1480 = vmatpush1.msra.mxu0 0.0
    %1481 = vmatprep.subr.mxu0 0.0
    %1482 = vmatpush1.msra.mxu0 0.0
    %1483 = vmatprep.subr.mxu0 0.0
    %1484 = vmatpush1.msra.mxu0 0.0
    %1485 = vmatprep.subr.mxu0 0.0
    %1486 = vmatpush1.msra.mxu0 0.0
    %1487 = vmatprep.subr.mxu0 0.0
    %1488 = vmatpush1.msra.mxu0 0.0
    %1489 = vmatprep.subr.mxu0 0.0
    %1490 = vmatpush1.msra.mxu0 0.0
    %1491 = vmatprep.subr.mxu0 0.0
    %1492 = vmatpush1.msra.mxu0 0.0
    %1493 = vmatprep.subr.mxu0 0.0
    %1494 = vmatpush1.msra.mxu0 0.0
    %1495 = vmatprep.subr.mxu0 0.0
    %1496 = vmatpush1.msra.mxu0 0.0
    %1497 = vmatprep.subr.mxu0 0.0
    %1498 = vmatpush1.msra.mxu0 0.0
    %1499 = vmatprep.subr.mxu0 0.0
    %1500 = vmatpush1.msra.mxu0 0.0
    %1501 = vmatprep.subr.mxu0 0.0
    %1502 = vmatpush1.msra.mxu0 0.0
    %1503 = vmatprep.subr.mxu0 0.0
    %1504 = vmatpush1.msra.mxu0 0.0
    %1505 = vmatprep.subr.mxu0 0.0
    %1506 = vmatpush1.msra.mxu0 0.0
    %1507 = vmatprep.subr.mxu0 0.0
    %1508 = vmatpush1.msra.mxu0 0.0
    %1509 = vmatprep.subr.mxu0 0.0
    %1510 = vmatpush1.msra.mxu0 0.0
    %1511 = vmatprep.subr.mxu0 0.0
    %1512 = vmatpush1.msra.mxu0 0.0
    %1513 = vmatprep.subr.mxu0 0.0
    %1514 = vmatpush1.msra.mxu0 0.0
    %1515 = vmatprep.subr.mxu0 0.0
    %1516 = vmatpush1.msra.mxu0 0.0
    %1517 = vmatprep.subr.mxu0 0.0
    %1518 = vmatpush1.msra.mxu0 0.0
    %1519 = vmatprep.subr.mxu0 0.0
    %1520 = vmatpush1.msra.mxu0 0.0
    %1521 = vmatprep.subr.mxu0 0.0
    %1522 = vmatpush1.msra.mxu0 0.0
    %1523 = vmatprep.subr.mxu0 0.0
    %1524 = vmatpush1.msra.mxu0 0.0
    %1525 = vmatprep.mubr.f32.mxu0 0.0
    %1526 = vmatmul.mubr.f32.gmra.mrb[0].mxu0 %v1459
    %v1527 = vpop.f32.mrb[0].mxu0
    %v1528 = vadd.f32 0.0, %v1527
    %v1529 = vpop.f32.mrb[0].mxu0
    %1530 = vdwg.mxu0
    %1531 = vrot.lane.b32.xlu0 %v371, 64
    %v1532 = vpop.permute.xlu0 %1531
    %v1535 = vsel %vm374, %v1072, 0
    %1537 = vmatprep.subr.mxu0 0.0
    %1538 = vmatpush1.msra.mxu0 %v1532
    %1539 = vmatprep.subr.mxu0 0.0
    %1540 = vmatpush1.msra.mxu0 0.0
    %1541 = vmatprep.subr.mxu0 0.0
    %1542 = vmatpush1.msra.mxu0 0.0
    %1543 = vmatprep.subr.mxu0 0.0
    %1544 = vmatpush1.msra.mxu0 0.0
    %1545 = vmatprep.subr.mxu0 0.0
    %1546 = vmatpush1.msra.mxu0 0.0
    %1547 = vmatprep.subr.mxu0 0.0
    %1548 = vmatpush1.msra.mxu0 0.0
    %1549 = vmatprep.subr.mxu0 0.0
    %1550 = vmatpush1.msra.mxu0 0.0
    %1551 = vmatprep.subr.mxu0 0.0
    %1552 = vmatpush1.msra.mxu0 0.0
    %1553 = vmatprep.subr.mxu0 0.0
    %1554 = vmatpush1.msra.mxu0 0.0
    %1555 = vmatprep.subr.mxu0 0.0
    %1556 = vmatpush1.msra.mxu0 0.0
    %1557 = vmatprep.subr.mxu0 0.0
    %1558 = vmatpush1.msra.mxu0 0.0
    %1559 = vmatprep.subr.mxu0 0.0
    %1560 = vmatpush1.msra.mxu0 0.0
    %1561 = vmatprep.subr.mxu0 0.0
    %1562 = vmatpush1.msra.mxu0 0.0
    %1563 = vmatprep.subr.mxu0 0.0
    %1564 = vmatpush1.msra.mxu0 0.0
    %1565 = vmatprep.subr.mxu0 0.0
    %1566 = vmatpush1.msra.mxu0 0.0
    %1567 = vmatprep.subr.mxu0 0.0
    %1568 = vmatpush1.msra.mxu0 0.0
    %1569 = vmatprep.subr.mxu0 0.0
    %1570 = vmatpush1.msra.mxu0 0.0
    %1571 = vmatprep.subr.mxu0 0.0
    %1572 = vmatpush1.msra.mxu0 0.0
    %1573 = vmatprep.subr.mxu0 0.0
    %1574 = vmatpush1.msra.mxu0 0.0
    %1575 = vmatprep.subr.mxu0 0.0
    %1576 = vmatpush1.msra.mxu0 0.0
    %1577 = vmatprep.subr.mxu0 0.0
    %1578 = vmatpush1.msra.mxu0 0.0
    %1579 = vmatprep.subr.mxu0 0.0
    %1580 = vmatpush1.msra.mxu0 0.0
    %1581 = vmatprep.subr.mxu0 0.0
    %1582 = vmatpush1.msra.mxu0 0.0
    %1583 = vmatprep.subr.mxu0 0.0
    %1584 = vmatpush1.msra.mxu0 0.0
    %1585 = vmatprep.subr.mxu0 0.0
    %1586 = vmatpush1.msra.mxu0 0.0
    %1587 = vmatprep.subr.mxu0 0.0
    %1588 = vmatpush1.msra.mxu0 0.0
    %1589 = vmatprep.subr.mxu0 0.0
    %1590 = vmatpush1.msra.mxu0 0.0
    %1591 = vmatprep.subr.mxu0 0.0
    %1592 = vmatpush1.msra.mxu0 0.0
    %1593 = vmatprep.subr.mxu0 0.0
    %1594 = vmatpush1.msra.mxu0 0.0
    %1595 = vmatprep.subr.mxu0 0.0
    %1596 = vmatpush1.msra.mxu0 0.0
    %1597 = vmatprep.subr.mxu0 0.0
    %1598 = vmatpush1.msra.mxu0 0.0
    %1599 = vmatprep.subr.mxu0 0.0
    %1600 = vmatpush1.msra.mxu0 0.0
    %1601 = vmatprep.mubr.f32.mxu0 0.0
    %1602 = vmatmul.mubr.f32.gmra.mrb[0].mxu0 %v1535
    %v1603 = vpop.f32.mrb[0].mxu0
    %v1604 = vadd.f32 0.0, %v1603
    %v1605 = vpop.f32.mrb[0].mxu0
    %1606 = vdwg.mxu0
    %1607 = vrot.lane.b32.xlu0 %v373, 64
    %v1608 = vpop.permute.xlu0 %1607
    %v1611 = vsel %vm374, %v1074, 0
    %1613 = vmatprep.subr.mxu0 0.0
    %1614 = vmatpush1.msra.mxu0 %v1608
    %1615 = vmatprep.subr.mxu0 0.0
    %1616 = vmatpush1.msra.mxu0 0.0
    %1617 = vmatprep.subr.mxu0 0.0
    %1618 = vmatpush1.msra.mxu0 0.0
    %1619 = vmatprep.subr.mxu0 0.0
    %1620 = vmatpush1.msra.mxu0 0.0
    %1621 = vmatprep.subr.mxu0 0.0
    %1622 = vmatpush1.msra.mxu0 0.0
    %1623 = vmatprep.subr.mxu0 0.0
    %1624 = vmatpush1.msra.mxu0 0.0
    %1625 = vmatprep.subr.mxu0 0.0
    %1626 = vmatpush1.msra.mxu0 0.0
    %1627 = vmatprep.subr.mxu0 0.0
    %1628 = vmatpush1.msra.mxu0 0.0
    %1629 = vmatprep.subr.mxu0 0.0
    %1630 = vmatpush1.msra.mxu0 0.0
    %1631 = vmatprep.subr.mxu0 0.0
    %1632 = vmatpush1.msra.mxu0 0.0
    %1633 = vmatprep.subr.mxu0 0.0
    %1634 = vmatpush1.msra.mxu0 0.0
    %1635 = vmatprep.subr.mxu0 0.0
    %1636 = vmatpush1.msra.mxu0 0.0
    %1637 = vmatprep.subr.mxu0 0.0
    %1638 = vmatpush1.msra.mxu0 0.0
    %1639 = vmatprep.subr.mxu0 0.0
    %1640 = vmatpush1.msra.mxu0 0.0
    %1641 = vmatprep.subr.mxu0 0.0
    %1642 = vmatpush1.msra.mxu0 0.0
    %1643 = vmatprep.subr.mxu0 0.0
    %1644 = vmatpush1.msra.mxu0 0.0
    %1645 = vmatprep.subr.mxu0 0.0
    %1646 = vmatpush1.msra.mxu0 0.0
    %1647 = vmatprep.subr.mxu0 0.0
    %1648 = vmatpush1.msra.mxu0 0.0
    %1649 = vmatprep.subr.mxu0 0.0
    %1650 = vmatpush1.msra.mxu0 0.0
    %1651 = vmatprep.subr.mxu0 0.0
    %1652 = vmatpush1.msra.mxu0 0.0
    %1653 = vmatprep.subr.mxu0 0.0
    %1654 = vmatpush1.msra.mxu0 0.0
    %1655 = vmatprep.subr.mxu0 0.0
    %1656 = vmatpush1.msra.mxu0 0.0
    %1657 = vmatprep.subr.mxu0 0.0
    %1658 = vmatpush1.msra.mxu0 0.0
    %1659 = vmatprep.subr.mxu0 0.0
    %1660 = vmatpush1.msra.mxu0 0.0
    %1661 = vmatprep.subr.mxu0 0.0
    %1662 = vmatpush1.msra.mxu0 0.0
    %1663 = vmatprep.subr.mxu0 0.0
    %1664 = vmatpush1.msra.mxu0 0.0
    %1665 = vmatprep.subr.mxu0 0.0
    %1666 = vmatpush1.msra.mxu0 0.0
    %1667 = vmatprep.subr.mxu0 0.0
    %1668 = vmatpush1.msra.mxu0 0.0
    %1669 = vmatprep.subr.mxu0 0.0
    %1670 = vmatpush1.msra.mxu0 0.0
    %1671 = vmatprep.subr.mxu0 0.0
    %1672 = vmatpush1.msra.mxu0 0.0
    %1673 = vmatprep.subr.mxu0 0.0
    %1674 = vmatpush1.msra.mxu0 0.0
    %1675 = vmatprep.subr.mxu0 0.0
    %1676 = vmatpush1.msra.mxu0 0.0
    %1677 = vmatprep.mubr.f32.mxu0 0.0
    %1678 = vmatmul.mubr.f32.gmra.mrb[0].mxu0 %v1611
    %v1679 = vpop.f32.mrb[0].mxu0
    %v1680 = vadd.f32 0.0, %v1679
    %v1681 = vpop.f32.mrb[0].mxu0
    %1682 = vdwg.mxu0
    %v1683 = vadd.f32 %v1148, %v1300
    %v1684 = vadd.f32 %v1224, %v1376
    %v1685 = vadd.f32 %v1683, %v1452
    %v1686 = vadd.f32 %v1684, %v1528
    %v1687 = vadd.f32 %v1685, %v1604
    %v1688 = vadd.f32 %v1686, %v1680
    %v1689 = vld [vmem:[#allocation11 + $0x3] sm:$0x1]
    %v1690 = vlaneseq
    %v1691 = vshrl.u32 %v1690, 7
    %v1692 = vsub.s32 0, %v1691
    %v1693 = vrot.slane %v1689, %v1692
    %v1694 = vadd.f32 %v1687, %v1693
    %v1695 = vadd.f32 %v1688, %v1693
    %v1696 = vadd.f32 %v241, %v1694
    %v1697 = vadd.f32 %v242, %v1695
    %v1698 = vld [vmem:[#allocation11 + $0x6] sm:$0x1]
    %v1699 = vld [vmem:[#allocation11 + $0x7] sm:$0x1]
    %v1700 = vsel %vm120, %v1696, 0.0
    %1701 = vadd.xlane.f32.xlu0 %v1700
    %v1702 = vpop.xlane.xlu0 %1701
    %v1703 = vsel %vm120, %v1697, 0.0
    %1704 = vadd.xlane.f32.xlu0 %v1703
    %v1705 = vpop.xlane.xlu0 %1704
    %v1706 = vmul.f32 %v1702, %v210
    %v1707 = vmul.f32 %v1705, %v210
    %v1708 = vsub.f32 %v1696, %v1706
    %v1709 = vsub.f32 %v1697, %v1707
    %v1710 = vmul.f32 %v1708, %v1708
    %v1711 = vmul.f32 %v1709, %v1709
    %v1712 = vsel %vm120, %v1710, 0.0
    %1713 = vadd.xlane.f32.xlu0 %v1712
    %v1714 = vpop.xlane.xlu0 %1713
    %v1715 = vsel %vm120, %v1711, 0.0
    %1716 = vadd.xlane.f32.xlu0 %v1715
    %v1717 = vpop.xlane.xlu0 %1716
    %v1718 = vmul.f32 %v1714, %v210
    %v1719 = vmul.f32 %v1717, %v210
    %v1720 = vadd.f32 %v1718, 1e-05
    %v1721 = vadd.f32 %v1719, 1e-05
    %v1722 = vrsqrt.pop %v1720
    %v1723 = vrsqrt.pop %v1721
    %v1724 = vmul.f32 %v1708, %v1722
    %v1725 = vmul.f32 %v1709, %v1723
    %v1726 = vlaneseq
    %v1727 = vshrl.u32 %v1726, 7
    %v1728 = vsub.s32 0, %v1727
    %v1729 = vrot.slane %v1698, %v1728
    %v1730 = vmul.f32 %v1724, %v1729
    %v1731 = vmul.f32 %v1725, %v1729
    %v1732 = vlaneseq
    %v1733 = vshrl.u32 %v1732, 7
    %v1734 = vsub.s32 0, %v1733
    %v1735 = vrot.slane %v1699, %v1734
    %v1736 = vadd.f32 %v1730, %v1735
    %v1737 = vadd.f32 %v1731, %v1735
    %v1738 = vld [vmem:[#allocation8] sm:$0xff]
    %v1739 = vld [vmem:[#allocation8 + $0x8] sm:$0xff]
    %v1740 = vld [vmem:[#allocation8 + $0x10] sm:$0xff]
    %v1741 = vld [vmem:[#allocation8 + $0x18] sm:$0xff]
    %v1742 = vld [vmem:[#allocation11 + $0x4] sm:$0x1]
    %v1743 = vlaneseq
    %v1744 = vshrl.u32 %v1743, 7
    %v1745 = vsub.s32 0, %v1744
    %v1746 = vrot.slane %v1742, %v1745
    %v1748 = vsel %vm120, %v1736, 0
    %v1751 = vsel %vm120, %v1737, 0
    %1753 = vmatprep.subr.mxu0 0.0
    %1754 = vmatpush1.msra.mxu0 %v1738
    %1755 = vmatprep.subr.mxu0 0.0
    %1756 = vmatpush1.msra.mxu0 %v1739
    %1757 = vmatprep.subr.mxu0 0.0
    %1758 = vmatpush1.msra.mxu0 %v1740
    %1759 = vmatprep.subr.mxu0 0.0
    %1760 = vmatpush1.msra.mxu0 %v1741
    %1761 = vmatprep.subr.mxu0 0.0
    %1762 = vmatpush1.msra.mxu0 0.0
    %1763 = vmatprep.subr.mxu0 0.0
    %1764 = vmatpush1.msra.mxu0 0.0
    %1765 = vmatprep.subr.mxu0 0.0
    %1766 = vmatpush1.msra.mxu0 0.0
    %1767 = vmatprep.subr.mxu0 0.0
    %1768 = vmatpush1.msra.mxu0 0.0
    %1769 = vmatprep.subr.mxu0 0.0
    %1770 = vmatpush1.msra.mxu0 0.0
    %1771 = vmatprep.subr.mxu0 0.0
    %1772 = vmatpush1.msra.mxu0 0.0
    %1773 = vmatprep.subr.mxu0 0.0
    %1774 = vmatpush1.msra.mxu0 0.0
    %1775 = vmatprep.subr.mxu0 0.0
    %1776 = vmatpush1.msra.mxu0 0.0
    %1777 = vmatprep.subr.mxu0 0.0
    %1778 = vmatpush1.msra.mxu0 0.0
    %1779 = vmatprep.subr.mxu0 0.0
    %1780 = vmatpush1.msra.mxu0 0.0
    %1781 = vmatprep.subr.mxu0 0.0
    %1782 = vmatpush1.msra.mxu0 0.0
    %1783 = vmatprep.subr.mxu0 0.0
    %1784 = vmatpush1.msra.mxu0 0.0
    %1785 = vmatprep.subr.mxu0 0.0
    %1786 = vmatpush1.msra.mxu0 0.0
    %1787 = vmatprep.subr.mxu0 0.0
    %1788 = vmatpush1.msra.mxu0 0.0
    %1789 = vmatprep.subr.mxu0 0.0
    %1790 = vmatpush1.msra.mxu0 0.0
    %1791 = vmatprep.subr.mxu0 0.0
    %1792 = vmatpush1.msra.mxu0 0.0
    %1793 = vmatprep.subr.mxu0 0.0
    %1794 = vmatpush1.msra.mxu0 0.0
    %1795 = vmatprep.subr.mxu0 0.0
    %1796 = vmatpush1.msra.mxu0 0.0
    %1797 = vmatprep.subr.mxu0 0.0
    %1798 = vmatpush1.msra.mxu0 0.0
    %1799 = vmatprep.subr.mxu0 0.0
    %1800 = vmatpush1.msra.mxu0 0.0
    %1801 = vmatprep.subr.mxu0 0.0
    %1802 = vmatpush1.msra.mxu0 0.0
    %1803 = vmatprep.subr.mxu0 0.0
    %1804 = vmatpush1.msra.mxu0 0.0
    %1805 = vmatprep.subr.mxu0 0.0
    %1806 = vmatpush1.msra.mxu0 0.0
    %1807 = vmatprep.subr.mxu0 0.0
    %1808 = vmatpush1.msra.mxu0 0.0
    %1809 = vmatprep.subr.mxu0 0.0
    %1810 = vmatpush1.msra.mxu0 0.0
    %1811 = vmatprep.subr.mxu0 0.0
    %1812 = vmatpush1.msra.mxu0 0.0
    %1813 = vmatprep.subr.mxu0 0.0
    %1814 = vmatpush1.msra.mxu0 0.0
    %1815 = vmatprep.subr.mxu0 0.0
    %1816 = vmatpush1.msra.mxu0 0.0
    %1817 = vmatprep.mubr.f32.mxu0 0.0
    %1818 = vmatmul.mubr.f32.gmra.mrb[0].mxu0 %v1748
    %v1819 = vpop.f32.mrb[0].mxu0
    %v1820 = vadd.f32 %v1746, %v1819
    %v1821 = vpop.f32.mrb[0].mxu0
    %1822 = vmatprep.mubr.f32.mxu0 0.0
    %1823 = vmatmul.mubr.f32.gmra.mrb[0].mxu0 %v1751
    %v1824 = vpop.f32.mrb[0].mxu0
    %v1825 = vadd.f32 %v1746, %v1824
    %v1826 = vpop.f32.mrb[0].mxu0
    %1827 = vdwg.mxu0
    %v1828 = vmax.f32 %v1820, 0.0
    %v1829 = vmax.f32 %v1825, 0.0
    %v1830 = vld [vmem:[#allocation10] sm:$0xff]
    %v1831 = vld [vmem:[#allocation10 + $0x8] sm:$0xff]
    %v1832 = vld [vmem:[#allocation10 + $0x10] sm:$0xff]
    %v1833 = vld [vmem:[#allocation10 + $0x18] sm:$0xff]
    %v1834 = vld [vmem:[#allocation11 + $0x5] sm:$0x1]
    %v1835 = vlaneseq
    %v1836 = vshrl.u32 %v1835, 7
    %v1837 = vsub.s32 0, %v1836
    %v1838 = vrot.slane %v1834, %v1837
    %v1840 = vsel %vm120, %v1828, 0
    %v1843 = vsel %vm120, %v1829, 0
    %1845 = vmatprep.subr.mxu0 0.0
    %1846 = vmatpush1.msra.mxu0 %v1830
    %1847 = vmatprep.subr.mxu0 0.0
    %1848 = vmatpush1.msra.mxu0 %v1831
    %1849 = vmatprep.subr.mxu0 0.0
    %1850 = vmatpush1.msra.mxu0 %v1832
    %1851 = vmatprep.subr.mxu0 0.0
    %1852 = vmatpush1.msra.mxu0 %v1833
    %1853 = vmatprep.subr.mxu0 0.0
    %1854 = vmatpush1.msra.mxu0 0.0
    %1855 = vmatprep.subr.mxu0 0.0
    %1856 = vmatpush1.msra.mxu0 0.0
    %1857 = vmatprep.subr.mxu0 0.0
    %1858 = vmatpush1.msra.mxu0 0.0
    %1859 = vmatprep.subr.mxu0 0.0
    %1860 = vmatpush1.msra.mxu0 0.0
    %1861 = vmatprep.subr.mxu0 0.0
    %1862 = vmatpush1.msra.mxu0 0.0
    %1863 = vmatprep.subr.mxu0 0.0
    %1864 = vmatpush1.msra.mxu0 0.0
    %1865 = vmatprep.subr.mxu0 0.0
    %1866 = vmatpush1.msra.mxu0 0.0
    %1867 = vmatprep.subr.mxu0 0.0
    %1868 = vmatpush1.msra.mxu0 0.0
    %1869 = vmatprep.subr.mxu0 0.0
    %1870 = vmatpush1.msra.mxu0 0.0
    %1871 = vmatprep.subr.mxu0 0.0
    %1872 = vmatpush1.msra.mxu0 0.0
    %1873 = vmatprep.subr.mxu0 0.0
    %1874 = vmatpush1.msra.mxu0 0.0
    %1875 = vmatprep.subr.mxu0 0.0
    %1876 = vmatpush1.msra.mxu0 0.0
    %1877 = vmatprep.subr.mxu0 0.0
    %1878 = vmatpush1.msra.mxu0 0.0
    %1879 = vmatprep.subr.mxu0 0.0
    %1880 = vmatpush1.msra.mxu0 0.0
    %1881 = vmatprep.subr.mxu0 0.0
    %1882 = vmatpush1.msra.mxu0 0.0
    %1883 = vmatprep.subr.mxu0 0.0
    %1884 = vmatpush1.msra.mxu0 0.0
    %1885 = vmatprep.subr.mxu0 0.0
    %1886 = vmatpush1.msra.mxu0 0.0
    %1887 = vmatprep.subr.mxu0 0.0
    %1888 = vmatpush1.msra.mxu0 0.0
    %1889 = vmatprep.subr.mxu0 0.0
    %1890 = vmatpush1.msra.mxu0 0.0
    %1891 = vmatprep.subr.mxu0 0.0
    %1892 = vmatpush1.msra.mxu0 0.0
    %1893 = vmatprep.subr.mxu0 0.0
    %1894 = vmatpush1.msra.mxu0 0.0
    %1895 = vmatprep.subr.mxu0 0.0
    %1896 = vmatpush1.msra.mxu0 0.0
    %1897 = vmatprep.subr.mxu0 0.0
    %1898 = vmatpush1.msra.mxu0 0.0
    %1899 = vmatprep.subr.mxu0 0.0
    %1900 = vmatpush1.msra.mxu0 0.0
    %1901 = vmatprep.subr.mxu0 0.0
    %1902 = vmatpush1.msra.mxu0 0.0
    %1903 = vmatprep.subr.mxu0 0.0
    %1904 = vmatpush1.msra.mxu0 0.0
    %1905 = vmatprep.subr.mxu0 0.0
    %1906 = vmatpush1.msra.mxu0 0.0
    %1907 = vmatprep.subr.mxu0 0.0
    %1908 = vmatpush1.msra.mxu0 0.0
    %1909 = vmatprep.mubr.f32.mxu0 0.0
    %1910 = vmatmul.mubr.f32.gmra.mrb[0].mxu0 %v1840
    %v1911 = vpop.f32.mrb[0].mxu0
    %v1912 = vadd.f32 %v1838, %v1911
    %v1913 = vpop.f32.mrb[0].mxu0
    %1914 = vmatprep.mubr.f32.mxu0 0.0
    %1915 = vmatmul.mubr.f32.gmra.mrb[0].mxu0 %v1843
    %v1916 = vpop.f32.mrb[0].mxu0
    %v1917 = vadd.f32 %v1838, %v1916
    %v1918 = vpop.f32.mrb[0].mxu0
    %1919 = vdwg.mxu0
    %v1920 = vadd.f32 %v1736, %v1912
    %v1921 = vadd.f32 %v1737, %v1917
    %v1922 = vld [vmem:[#allocation11 + $0x8] sm:$0x1]
    %v1923 = vld [vmem:[#allocation11 + $0x9] sm:$0x1]
    %v1924 = vsel %vm120, %v1920, 0.0
    %1925 = vadd.xlane.f32.xlu0 %v1924
    %v1926 = vpop.xlane.xlu0 %1925
    %v1927 = vsel %vm120, %v1921, 0.0
    %1928 = vadd.xlane.f32.xlu0 %v1927
    %v1929 = vpop.xlane.xlu0 %1928
    %v1930 = vmul.f32 %v1926, %v210
    %v1931 = vmul.f32 %v1929, %v210
    %v1932 = vsub.f32 %v1920, %v1930
    %v1933 = vsub.f32 %v1921, %v1931
    %v1934 = vmul.f32 %v1932, %v1932
    %v1935 = vmul.f32 %v1933, %v1933
    %v1936 = vsel %vm120, %v1934, 0.0
    %1937 = vadd.xlane.f32.xlu0 %v1936
    %v1938 = vpop.xlane.xlu0 %1937
    %v1939 = vsel %vm120, %v1935, 0.0
    %1940 = vadd.xlane.f32.xlu0 %v1939
    %v1941 = vpop.xlane.xlu0 %1940
    %v1942 = vmul.f32 %v1938, %v210
    %v1943 = vmul.f32 %v1941, %v210
    %v1944 = vadd.f32 %v1942, 1e-05
    %v1945 = vadd.f32 %v1943, 1e-05
    %v1946 = vrsqrt.pop %v1944
    %v1947 = vrsqrt.pop %v1945
    %v1948 = vmul.f32 %v1932, %v1946
    %v1949 = vmul.f32 %v1933, %v1947
    %v1950 = vlaneseq
    %v1951 = vshrl.u32 %v1950, 7
    %v1952 = vsub.s32 0, %v1951
    %v1953 = vrot.slane %v1922, %v1952
    %v1954 = vmul.f32 %v1948, %v1953
    %v1955 = vmul.f32 %v1949, %v1953
    %v1956 = vlaneseq
    %v1957 = vshrl.u32 %v1956, 7
    %v1958 = vsub.s32 0, %v1957
    %v1959 = vrot.slane %v1923, %v1958
    %v1960 = vadd.f32 %v1954, %v1959
    %v1961 = vadd.f32 %v1955, %v1959
    %s1962 = scalar_lea.vmem [#allocation7], 64
    %v1963 = vld [vmem:[%s1962] sm:$0xff]
    %v1964 = vld [vmem:[%s1962 + $0x8] sm:$0xff]
    %v1965 = vld [vmem:[%s1962 + $0x10] sm:$0xff]
    %v1966 = vld [vmem:[%s1962 + $0x18] sm:$0xff]
    %v1967 = vld [vmem:[%s1962 + $0x20] sm:$0xff]
    %v1968 = vld [vmem:[%s1962 + $0x28] sm:$0xff]
    %v1969 = vld [vmem:[%s1962 + $0x30] sm:$0xff]
    %v1970 = vld [vmem:[%s1962 + $0x38] sm:$0xff]
    %s1971 = scalar_lea.vmem %s5, 1
    %v1972 = vld [vmem:[%s1971] ss:$2 sm:$0x3]
    %v1974 = vlaneseq
    %v1975 = vshrl.u32 %v1974, 7
    %v1976 = vsub.s32 0, %v1975
    %v1977 = vrot.slane %v1972, %v1976
    %v1978 = vlaneseq
    %v1979 = vshrl.u32 %v1978, 7
    %v1980 = vsub.s32 1, %v1979
    %v1981 = vrot.slane %v1972, %v1980
    %v1985 = vsel %vm120, %v1960, 0
    %v1988 = vsel %vm120, %v1961, 0
    %1990 = vmatprep.subr.mxu0 %v1964
    %1991 = vmatpush1.msra.mxu0 %v1963
    %1992 = vmatprep.subr.mxu0 %v1966
    %1993 = vmatpush1.msra.mxu0 %v1965
    %1994 = vmatprep.subr.mxu0 %v1968
    %1995 = vmatpush1.msra.mxu0 %v1967
    %1996 = vmatprep.subr.mxu0 %v1970
    %1997 = vmatpush1.msra.mxu0 %v1969
    %1998 = vmatprep.subr.mxu0 0.0
    %1999 = vmatpush1.msra.mxu0 0.0
    %2000 = vmatprep.subr.mxu0 0.0
    %2001 = vmatpush1.msra.mxu0 0.0
    %2002 = vmatprep.subr.mxu0 0.0
    %2003 = vmatpush1.msra.mxu0 0.0
    %2004 = vmatprep.subr.mxu0 0.0
    %2005 = vmatpush1.msra.mxu0 0.0
    %2006 = vmatprep.subr.mxu0 0.0
    %2007 = vmatpush1.msra.mxu0 0.0
    %2008 = vmatprep.subr.mxu0 0.0
    %2009 = vmatpush1.msra.mxu0 0.0
    %2010 = vmatprep.subr.mxu0 0.0
    %2011 = vmatpush1.msra.mxu0 0.0
    %2012 = vmatprep.subr.mxu0 0.0
    %2013 = vmatpush1.msra.mxu0 0.0
    %2014 = vmatprep.subr.mxu0 0.0
    %2015 = vmatpush1.msra.mxu0 0.0
    %2016 = vmatprep.subr.mxu0 0.0
    %2017 = vmatpush1.msra.mxu0 0.0
    %2018 = vmatprep.subr.mxu0 0.0
    %2019 = vmatpush1.msra.mxu0 0.0
    %2020 = vmatprep.subr.mxu0 0.0
    %2021 = vmatpush1.msra.mxu0 0.0
    %2022 = vmatprep.subr.mxu0 0.0
    %2023 = vmatpush1.msra.mxu0 0.0
    %2024 = vmatprep.subr.mxu0 0.0
    %2025 = vmatpush1.msra.mxu0 0.0
    %2026 = vmatprep.subr.mxu0 0.0
    %2027 = vmatpush1.msra.mxu0 0.0
    %2028 = vmatprep.subr.mxu0 0.0
    %2029 = vmatpush1.msra.mxu0 0.0
    %2030 = vmatprep.subr.mxu0 0.0
    %2031 = vmatpush1.msra.mxu0 0.0
    %2032 = vmatprep.subr.mxu0 0.0
    %2033 = vmatpush1.msra.mxu0 0.0
    %2034 = vmatprep.subr.mxu0 0.0
    %2035 = vmatpush1.msra.mxu0 0.0
    %2036 = vmatprep.subr.mxu0 0.0
    %2037 = vmatpush1.msra.mxu0 0.0
    %2038 = vmatprep.subr.mxu0 0.0
    %2039 = vmatpush1.msra.mxu0 0.0
    %2040 = vmatprep.subr.mxu0 0.0
    %2041 = vmatpush1.msra.mxu0 0.0
    %2042 = vmatprep.subr.mxu0 0.0
    %2043 = vmatpush1.msra.mxu0 0.0
    %2044 = vmatprep.subr.mxu0 0.0
    %2045 = vmatpush1.msra.mxu0 0.0
    %2046 = vmatprep.subr.mxu0 0.0
    %2047 = vmatpush1.msra.mxu0 0.0
    %2048 = vmatprep.subr.mxu0 0.0
    %2049 = vmatpush1.msra.mxu0 0.0
    %2050 = vmatprep.subr.mxu0 0.0
    %2051 = vmatpush1.msra.mxu0 0.0
    %2052 = vmatprep.subr.mxu0 0.0
    %2053 = vmatpush1.msra.mxu0 0.0
    %2054 = vmatprep.mubr.f32.mxu0 0.0
    %2055 = vmatmul.mubr.f32.gmra.mrb[0].mxu0 %v1985
    %v2056 = vpop.f32.mrb[0].mxu0
    %v2057 = vadd.f32 %v1977, %v2056
    %v2058 = vpop.f32.mrb[0].mxu0
    %v2059 = vadd.f32 %v1981, %v2058
    %2060 = vmatprep.mubr.f32.mxu0 0.0
    %2061 = vmatmul.mubr.f32.gmra.mrb[0].mxu0 %v1988
    %v2062 = vpop.f32.mrb[0].mxu0
    %v2063 = vadd.f32 %v1977, %v2062
    %v2064 = vpop.f32.mrb[0].mxu0
    %v2065 = vadd.f32 %v1981, %v2064
    %2066 = vdwg.mxu0
    %2069 = vrot.lane.b32.xlu0 %v2057, 120
    %v2070 = vpop.permute.xlu0 %2069
    %2071 = vrot.lane.b32.xlu0 %v2063, 120
    %v2072 = vpop.permute.xlu0 %2071
    %2073 = vrot.lane.b32.xlu0 %v2057, 112
    %v2074 = vpop.permute.xlu0 %2073
    %2075 = vrot.lane.b32.xlu0 %v2063, 112
    %v2076 = vpop.permute.xlu0 %2075
    %2077 = vrot.lane.b32.xlu0 %v2057, 104
    %v2078 = vpop.permute.xlu0 %2077
    %2079 = vrot.lane.b32.xlu0 %v2063, 104
    %v2080 = vpop.permute.xlu0 %2079
    %2081 = vrot.lane.b32.xlu0 %v2057, 96
    %v2082 = vpop.permute.xlu0 %2081
    %2083 = vrot.lane.b32.xlu0 %v2063, 96
    %v2084 = vpop.permute.xlu0 %2083
    %2087 = vrot.lane.b32.xlu0 %v2059, 64
    %v2088 = vpop.permute.xlu0 %2087
    %2089 = vrot.lane.b32.xlu0 %v2065, 64
    %v2090 = vpop.permute.xlu0 %2089
    %2091 = vrot.lane.b32.xlu0 %v2059, 32
    %v2092 = vpop.permute.xlu0 %2091
    %2093 = vrot.lane.b32.xlu0 %v2065, 32
    %v2094 = vpop.permute.xlu0 %2093
    %v2095 = vsel %vm374, %v2057, 0
    %v2097 = vsel %vm374, %v2082, 0
    %2099 = vmatprep.subr.mxu0 0.0
    %2100 = vmatpush1.xpose.msra.mxu0 %v2097
    %2101 = vmatprep.subr.mxu0 0.0
    %2102 = vmatpush1.xpose.msra.mxu0 0.0
    %2103 = vmatprep.subr.mxu0 0.0
    %2104 = vmatpush1.xpose.msra.mxu0 0.0
    %2105 = vmatprep.subr.mxu0 0.0
    %2106 = vmatpush1.xpose.msra.mxu0 0.0
    %2107 = vmatprep.subr.mxu0 0.0
    %2108 = vmatpush1.xpose.msra.mxu0 0.0
    %2109 = vmatprep.subr.mxu0 0.0
    %2110 = vmatpush1.xpose.msra.mxu0 0.0
    %2111 = vmatprep.subr.mxu0 0.0
    %2112 = vmatpush1.xpose.msra.mxu0 0.0
    %2113 = vmatprep.subr.mxu0 0.0
    %2114 = vmatpush1.xpose.msra.mxu0 0.0
    %2115 = vmatprep.subr.mxu0 0.0
    %2116 = vmatpush1.xpose.msra.mxu0 0.0
    %2117 = vmatprep.subr.mxu0 0.0
    %2118 = vmatpush1.xpose.msra.mxu0 0.0
    %2119 = vmatprep.subr.mxu0 0.0
    %2120 = vmatpush1.xpose.msra.mxu0 0.0
    %2121 = vmatprep.subr.mxu0 0.0
    %2122 = vmatpush1.xpose.msra.mxu0 0.0
    %2123 = vmatprep.subr.mxu0 0.0
    %2124 = vmatpush1.xpose.msra.mxu0 0.0
    %2125 = vmatprep.subr.mxu0 0.0
    %2126 = vmatpush1.xpose.msra.mxu0 0.0
    %2127 = vmatprep.subr.mxu0 0.0
    %2128 = vmatpush1.xpose.msra.mxu0 0.0
    %2129 = vmatprep.subr.mxu0 0.0
    %2130 = vmatpush1.xpose.msra.mxu0 0.0
    %2131 = vmatprep.subr.mxu0 0.0
    %2132 = vmatpush1.xpose.msra.mxu0 0.0
    %2133 = vmatprep.subr.mxu0 0.0
    %2134 = vmatpush1.xpose.msra.mxu0 0.0
    %2135 = vmatprep.subr.mxu0 0.0
    %2136 = vmatpush1.xpose.msra.mxu0 0.0
    %2137 = vmatprep.subr.mxu0 0.0
    %2138 = vmatpush1.xpose.msra.mxu0 0.0
    %2139 = vmatprep.subr.mxu0 0.0
    %2140 = vmatpush1.xpose.msra.mxu0 0.0
    %2141 = vmatprep.subr.mxu0 0.0
    %2142 = vmatpush1.xpose.msra.mxu0 0.0
    %2143 = vmatprep.subr.mxu0 0.0
    %2144 = vmatpush1.xpose.msra.mxu0 0.0
    %2145 = vmatprep.subr.mxu0 0.0
    %2146 = vmatpush1.xpose.msra.mxu0 0.0
    %2147 = vmatprep.subr.mxu0 0.0
    %2148 = vmatpush1.xpose.msra.mxu0 0.0
    %2149 = vmatprep.subr.mxu0 0.0
    %2150 = vmatpush1.xpose.msra.mxu0 0.0
    %2151 = vmatprep.subr.mxu0 0.0
    %2152 = vmatpush1.xpose.msra.mxu0 0.0
    %2153 = vmatprep.subr.mxu0 0.0
    %2154 = vmatpush1.xpose.msra.mxu0 0.0
    %2155 = vmatprep.subr.mxu0 0.0
    %2156 = vmatpush1.xpose.msra.mxu0 0.0
    %2157 = vmatprep.subr.mxu0 0.0
    %2158 = vmatpush1.xpose.msra.mxu0 0.0
    %2159 = vmatprep.subr.mxu0 0.0
    %2160 = vmatpush1.xpose.msra.mxu0 0.0
    %2161 = vmatprep.subr.mxu0 0.0
    %2162 = vmatpush1.xpose.msra.mxu0 0.0
    %2163 = vmatprep.mubr.f32.mxu0 0.0
    %2164 = vmatmul.mubr.f32.gmra.mrb[0].mxu0 %v2095
    %v2165 = vpop.f32.mrb[0].mxu0
    %v2166 = vadd.f32 0.0, %v2165
    %v2167 = vpop.f32.mrb[0].mxu0
    %2168 = vdwg.mxu0
    %v2169 = vsel %vm374, %v2063, 0
    %v2171 = vsel %vm374, %v2084, 0
    %2173 = vmatprep.subr.mxu0 0.0
    %2174 = vmatpush1.xpose.msra.mxu0 %v2171
    %2175 = vmatprep.subr.mxu0 0.0
    %2176 = vmatpush1.xpose.msra.mxu0 0.0
    %2177 = vmatprep.subr.mxu0 0.0
    %2178 = vmatpush1.xpose.msra.mxu0 0.0
    %2179 = vmatprep.subr.mxu0 0.0
    %2180 = vmatpush1.xpose.msra.mxu0 0.0
    %2181 = vmatprep.subr.mxu0 0.0
    %2182 = vmatpush1.xpose.msra.mxu0 0.0
    %2183 = vmatprep.subr.mxu0 0.0
    %2184 = vmatpush1.xpose.msra.mxu0 0.0
    %2185 = vmatprep.subr.mxu0 0.0
    %2186 = vmatpush1.xpose.msra.mxu0 0.0
    %2187 = vmatprep.subr.mxu0 0.0
    %2188 = vmatpush1.xpose.msra.mxu0 0.0
    %2189 = vmatprep.subr.mxu0 0.0
    %2190 = vmatpush1.xpose.msra.mxu0 0.0
    %2191 = vmatprep.subr.mxu0 0.0
    %2192 = vmatpush1.xpose.msra.mxu0 0.0
    %2193 = vmatprep.subr.mxu0 0.0
    %2194 = vmatpush1.xpose.msra.mxu0 0.0
    %2195 = vmatprep.subr.mxu0 0.0
    %2196 = vmatpush1.xpose.msra.mxu0 0.0
    %2197 = vmatprep.subr.mxu0 0.0
    %2198 = vmatpush1.xpose.msra.mxu0 0.0
    %2199 = vmatprep.subr.mxu0 0.0
    %2200 = vmatpush1.xpose.msra.mxu0 0.0
    %2201 = vmatprep.subr.mxu0 0.0
    %2202 = vmatpush1.xpose.msra.mxu0 0.0
    %2203 = vmatprep.subr.mxu0 0.0
    %2204 = vmatpush1.xpose.msra.mxu0 0.0
    %2205 = vmatprep.subr.mxu0 0.0
    %2206 = vmatpush1.xpose.msra.mxu0 0.0
    %2207 = vmatprep.subr.mxu0 0.0
    %2208 = vmatpush1.xpose.msra.mxu0 0.0
    %2209 = vmatprep.subr.mxu0 0.0
    %2210 = vmatpush1.xpose.msra.mxu0 0.0
    %2211 = vmatprep.subr.mxu0 0.0
    %2212 = vmatpush1.xpose.msra.mxu0 0.0
    %2213 = vmatprep.subr.mxu0 0.0
    %2214 = vmatpush1.xpose.msra.mxu0 0.0
    %2215 = vmatprep.subr.mxu0 0.0
    %2216 = vmatpush1.xpose.msra.mxu0 0.0
    %2217 = vmatprep.subr.mxu0 0.0
    %2218 = vmatpush1.xpose.msra.mxu0 0.0
    %2219 = vmatprep.subr.mxu0 0.0
    %2220 = vmatpush1.xpose.msra.mxu0 0.0
    %2221 = vmatprep.subr.mxu0 0.0
    %2222 = vmatpush1.xpose.msra.mxu0 0.0
    %2223 = vmatprep.subr.mxu0 0.0
    %2224 = vmatpush1.xpose.msra.mxu0 0.0
    %2225 = vmatprep.subr.mxu0 0.0
    %2226 = vmatpush1.xpose.msra.mxu0 0.0
    %2227 = vmatprep.subr.mxu0 0.0
    %2228 = vmatpush1.xpose.msra.mxu0 0.0
    %2229 = vmatprep.subr.mxu0 0.0
    %2230 = vmatpush1.xpose.msra.mxu0 0.0
    %2231 = vmatprep.subr.mxu0 0.0
    %2232 = vmatpush1.xpose.msra.mxu0 0.0
    %2233 = vmatprep.subr.mxu0 0.0
    %2234 = vmatpush1.xpose.msra.mxu0 0.0
    %2235 = vmatprep.subr.mxu0 0.0
    %2236 = vmatpush1.xpose.msra.mxu0 0.0
    %2237 = vmatprep.mubr.f32.mxu0 0.0
    %2238 = vmatmul.mubr.f32.gmra.mrb[0].mxu0 %v2169
    %v2239 = vpop.f32.mrb[0].mxu0
    %v2240 = vadd.f32 0.0, %v2239
    %v2241 = vpop.f32.mrb[0].mxu0
    %2242 = vdwg.mxu0
    %2243 = vrot.lane.b32.xlu0 %v2070, 96
    %v2244 = vpop.permute.xlu0 %2243
    %v2245 = vsel %vm374, %v2070, 0
    %v2247 = vsel %vm374, %v2244, 0
    %2249 = vmatprep.subr.mxu0 0.0
    %2250 = vmatpush1.xpose.msra.mxu0 %v2247
    %2251 = vmatprep.subr.mxu0 0.0
    %2252 = vmatpush1.xpose.msra.mxu0 0.0
    %2253 = vmatprep.subr.mxu0 0.0
    %2254 = vmatpush1.xpose.msra.mxu0 0.0
    %2255 = vmatprep.subr.mxu0 0.0
    %2256 = vmatpush1.xpose.msra.mxu0 0.0
    %2257 = vmatprep.subr.mxu0 0.0
    %2258 = vmatpush1.xpose.msra.mxu0 0.0
    %2259 = vmatprep.subr.mxu0 0.0
    %2260 = vmatpush1.xpose.msra.mxu0 0.0
    %2261 = vmatprep.subr.mxu0 0.0
    %2262 = vmatpush1.xpose.msra.mxu0 0.0
    %2263 = vmatprep.subr.mxu0 0.0
    %2264 = vmatpush1.xpose.msra.mxu0 0.0
    %2265 = vmatprep.subr.mxu0 0.0
    %2266 = vmatpush1.xpose.msra.mxu0 0.0
    %2267 = vmatprep.subr.mxu0 0.0
    %2268 = vmatpush1.xpose.msra.mxu0 0.0
    %2269 = vmatprep.subr.mxu0 0.0
    %2270 = vmatpush1.xpose.msra.mxu0 0.0
    %2271 = vmatprep.subr.mxu0 0.0
    %2272 = vmatpush1.xpose.msra.mxu0 0.0
    %2273 = vmatprep.subr.mxu0 0.0
    %2274 = vmatpush1.xpose.msra.mxu0 0.0
    %2275 = vmatprep.subr.mxu0 0.0
    %2276 = vmatpush1.xpose.msra.mxu0 0.0
    %2277 = vmatprep.subr.mxu0 0.0
    %2278 = vmatpush1.xpose.msra.mxu0 0.0
    %2279 = vmatprep.subr.mxu0 0.0
    %2280 = vmatpush1.xpose.msra.mxu0 0.0
    %2281 = vmatprep.subr.mxu0 0.0
    %2282 = vmatpush1.xpose.msra.mxu0 0.0
    %2283 = vmatprep.subr.mxu0 0.0
    %2284 = vmatpush1.xpose.msra.mxu0 0.0
    %2285 = vmatprep.subr.mxu0 0.0
    %2286 = vmatpush1.xpose.msra.mxu0 0.0
    %2287 = vmatprep.subr.mxu0 0.0
    %2288 = vmatpush1.xpose.msra.mxu0 0.0
    %2289 = vmatprep.subr.mxu0 0.0
    %2290 = vmatpush1.xpose.msra.mxu0 0.0
    %2291 = vmatprep.subr.mxu0 0.0
    %2292 = vmatpush1.xpose.msra.mxu0 0.0
    %2293 = vmatprep.subr.mxu0 0.0
    %2294 = vmatpush1.xpose.msra.mxu0 0.0
    %2295 = vmatprep.subr.mxu0 0.0
    %2296 = vmatpush1.xpose.msra.mxu0 0.0
    %2297 = vmatprep.subr.mxu0 0.0
    %2298 = vmatpush1.xpose.msra.mxu0 0.0
    %2299 = vmatprep.subr.mxu0 0.0
    %2300 = vmatpush1.xpose.msra.mxu0 0.0
    %2301 = vmatprep.subr.mxu0 0.0
    %2302 = vmatpush1.xpose.msra.mxu0 0.0
    %2303 = vmatprep.subr.mxu0 0.0
    %2304 = vmatpush1.xpose.msra.mxu0 0.0
    %2305 = vmatprep.subr.mxu0 0.0
    %2306 = vmatpush1.xpose.msra.mxu0 0.0
    %2307 = vmatprep.subr.mxu0 0.0
    %2308 = vmatpush1.xpose.msra.mxu0 0.0
    %2309 = vmatprep.subr.mxu0 0.0
    %2310 = vmatpush1.xpose.msra.mxu0 0.0
    %2311 = vmatprep.subr.mxu0 0.0
    %2312 = vmatpush1.xpose.msra.mxu0 0.0
    %2313 = vmatprep.mubr.f32.mxu0 0.0
    %2314 = vmatmul.mubr.f32.gmra.mrb[0].mxu0 %v2245
    %v2315 = vpop.f32.mrb[0].mxu0
    %v2316 = vadd.f32 0.0, %v2315
    %v2317 = vpop.f32.mrb[0].mxu0
    %2318 = vdwg.mxu0
    %2319 = vrot.lane.b32.xlu0 %v2072, 96
    %v2320 = vpop.permute.xlu0 %2319
    %v2321 = vsel %vm374, %v2072, 0
    %v2323 = vsel %vm374, %v2320, 0
    %2325 = vmatprep.subr.mxu0 0.0
    %2326 = vmatpush1.xpose.msra.mxu0 %v2323
    %2327 = vmatprep.subr.mxu0 0.0
    %2328 = vmatpush1.xpose.msra.mxu0 0.0
    %2329 = vmatprep.subr.mxu0 0.0
    %2330 = vmatpush1.xpose.msra.mxu0 0.0
    %2331 = vmatprep.subr.mxu0 0.0
    %2332 = vmatpush1.xpose.msra.mxu0 0.0
    %2333 = vmatprep.subr.mxu0 0.0
    %2334 = vmatpush1.xpose.msra.mxu0 0.0
    %2335 = vmatprep.subr.mxu0 0.0
    %2336 = vmatpush1.xpose.msra.mxu0 0.0
    %2337 = vmatprep.subr.mxu0 0.0
    %2338 = vmatpush1.xpose.msra.mxu0 0.0
    %2339 = vmatprep.subr.mxu0 0.0
    %2340 = vmatpush1.xpose.msra.mxu0 0.0
    %2341 = vmatprep.subr.mxu0 0.0
    %2342 = vmatpush1.xpose.msra.mxu0 0.0
    %2343 = vmatprep.subr.mxu0 0.0
    %2344 = vmatpush1.xpose.msra.mxu0 0.0
    %2345 = vmatprep.subr.mxu0 0.0
    %2346 = vmatpush1.xpose.msra.mxu0 0.0
    %2347 = vmatprep.subr.mxu0 0.0
    %2348 = vmatpush1.xpose.msra.mxu0 0.0
    %2349 = vmatprep.subr.mxu0 0.0
    %2350 = vmatpush1.xpose.msra.mxu0 0.0
    %2351 = vmatprep.subr.mxu0 0.0
    %2352 = vmatpush1.xpose.msra.mxu0 0.0
    %2353 = vmatprep.subr.mxu0 0.0
    %2354 = vmatpush1.xpose.msra.mxu0 0.0
    %2355 = vmatprep.subr.mxu0 0.0
    %2356 = vmatpush1.xpose.msra.mxu0 0.0
    %2357 = vmatprep.subr.mxu0 0.0
    %2358 = vmatpush1.xpose.msra.mxu0 0.0
    %2359 = vmatprep.subr.mxu0 0.0
    %2360 = vmatpush1.xpose.msra.mxu0 0.0
    %2361 = vmatprep.subr.mxu0 0.0
    %2362 = vmatpush1.xpose.msra.mxu0 0.0
    %2363 = vmatprep.subr.mxu0 0.0
    %2364 = vmatpush1.xpose.msra.mxu0 0.0
    %2365 = vmatprep.subr.mxu0 0.0
    %2366 = vmatpush1.xpose.msra.mxu0 0.0
    %2367 = vmatprep.subr.mxu0 0.0
    %2368 = vmatpush1.xpose.msra.mxu0 0.0
    %2369 = vmatprep.subr.mxu0 0.0
    %2370 = vmatpush1.xpose.msra.mxu0 0.0
    %2371 = vmatprep.subr.mxu0 0.0
    %2372 = vmatpush1.xpose.msra.mxu0 0.0
    %2373 = vmatprep.subr.mxu0 0.0
    %2374 = vmatpush1.xpose.msra.mxu0 0.0
    %2375 = vmatprep.subr.mxu0 0.0
    %2376 = vmatpush1.xpose.msra.mxu0 0.0
    %2377 = vmatprep.subr.mxu0 0.0
    %2378 = vmatpush1.xpose.msra.mxu0 0.0
    %2379 = vmatprep.subr.mxu0 0.0
    %2380 = vmatpush1.xpose.msra.mxu0 0.0
    %2381 = vmatprep.subr.mxu0 0.0
    %2382 = vmatpush1.xpose.msra.mxu0 0.0
    %2383 = vmatprep.subr.mxu0 0.0
    %2384 = vmatpush1.xpose.msra.mxu0 0.0
    %2385 = vmatprep.subr.mxu0 0.0
    %2386 = vmatpush1.xpose.msra.mxu0 0.0
    %2387 = vmatprep.subr.mxu0 0.0
    %2388 = vmatpush1.xpose.msra.mxu0 0.0
    %2389 = vmatprep.mubr.f32.mxu0 0.0
    %2390 = vmatmul.mubr.f32.gmra.mrb[0].mxu0 %v2321
    %v2391 = vpop.f32.mrb[0].mxu0
    %v2392 = vadd.f32 0.0, %v2391
    %v2393 = vpop.f32.mrb[0].mxu0
    %2394 = vdwg.mxu0
    %2395 = vrot.lane.b32.xlu0 %v2074, 96
    %v2396 = vpop.permute.xlu0 %2395
    %v2397 = vsel %vm374, %v2074, 0
    %v2399 = vsel %vm374, %v2396, 0
    %2401 = vmatprep.subr.mxu0 0.0
    %2402 = vmatpush1.xpose.msra.mxu0 %v2399
    %2403 = vmatprep.subr.mxu0 0.0
    %2404 = vmatpush1.xpose.msra.mxu0 0.0
    %2405 = vmatprep.subr.mxu0 0.0
    %2406 = vmatpush1.xpose.msra.mxu0 0.0
    %2407 = vmatprep.subr.mxu0 0.0
    %2408 = vmatpush1.xpose.msra.mxu0 0.0
    %2409 = vmatprep.subr.mxu0 0.0
    %2410 = vmatpush1.xpose.msra.mxu0 0.0
    %2411 = vmatprep.subr.mxu0 0.0
    %2412 = vmatpush1.xpose.msra.mxu0 0.0
    %2413 = vmatprep.subr.mxu0 0.0
    %2414 = vmatpush1.xpose.msra.mxu0 0.0
    %2415 = vmatprep.subr.mxu0 0.0
    %2416 = vmatpush1.xpose.msra.mxu0 0.0
    %2417 = vmatprep.subr.mxu0 0.0
    %2418 = vmatpush1.xpose.msra.mxu0 0.0
    %2419 = vmatprep.subr.mxu0 0.0
    %2420 = vmatpush1.xpose.msra.mxu0 0.0
    %2421 = vmatprep.subr.mxu0 0.0
    %2422 = vmatpush1.xpose.msra.mxu0 0.0
    %2423 = vmatprep.subr.mxu0 0.0
    %2424 = vmatpush1.xpose.msra.mxu0 0.0
    %2425 = vmatprep.subr.mxu0 0.0
    %2426 = vmatpush1.xpose.msra.mxu0 0.0
    %2427 = vmatprep.subr.mxu0 0.0
    %2428 = vmatpush1.xpose.msra.mxu0 0.0
    %2429 = vmatprep.subr.mxu0 0.0
    %2430 = vmatpush1.xpose.msra.mxu0 0.0
    %2431 = vmatprep.subr.mxu0 0.0
    %2432 = vmatpush1.xpose.msra.mxu0 0.0
    %2433 = vmatprep.subr.mxu0 0.0
    %2434 = vmatpush1.xpose.msra.mxu0 0.0
    %2435 = vmatprep.subr.mxu0 0.0
    %2436 = vmatpush1.xpose.msra.mxu0 0.0
    %2437 = vmatprep.subr.mxu0 0.0
    %2438 = vmatpush1.xpose.msra.mxu0 0.0
    %2439 = vmatprep.subr.mxu0 0.0
    %2440 = vmatpush1.xpose.msra.mxu0 0.0
    %2441 = vmatprep.subr.mxu0 0.0
    %2442 = vmatpush1.xpose.msra.mxu0 0.0
    %2443 = vmatprep.subr.mxu0 0.0
    %2444 = vmatpush1.xpose.msra.mxu0 0.0
    %2445 = vmatprep.subr.mxu0 0.0
    %2446 = vmatpush1.xpose.msra.mxu0 0.0
    %2447 = vmatprep.subr.mxu0 0.0
    %2448 = vmatpush1.xpose.msra.mxu0 0.0
    %2449 = vmatprep.subr.mxu0 0.0
    %2450 = vmatpush1.xpose.msra.mxu0 0.0
    %2451 = vmatprep.subr.mxu0 0.0
    %2452 = vmatpush1.xpose.msra.mxu0 0.0
    %2453 = vmatprep.subr.mxu0 0.0
    %2454 = vmatpush1.xpose.msra.mxu0 0.0
    %2455 = vmatprep.subr.mxu0 0.0
    %2456 = vmatpush1.xpose.msra.mxu0 0.0
    %2457 = vmatprep.subr.mxu0 0.0
    %2458 = vmatpush1.xpose.msra.mxu0 0.0
    %2459 = vmatprep.subr.mxu0 0.0
    %2460 = vmatpush1.xpose.msra.mxu0 0.0
    %2461 = vmatprep.subr.mxu0 0.0
    %2462 = vmatpush1.xpose.msra.mxu0 0.0
    %2463 = vmatprep.subr.mxu0 0.0
    %2464 = vmatpush1.xpose.msra.mxu0 0.0
    %2465 = vmatprep.mubr.f32.mxu0 0.0
    %2466 = vmatmul.mubr.f32.gmra.mrb[0].mxu0 %v2397
    %v2467 = vpop.f32.mrb[0].mxu0
    %v2468 = vadd.f32 0.0, %v2467
    %v2469 = vpop.f32.mrb[0].mxu0
    %2470 = vdwg.mxu0
    %2471 = vrot.lane.b32.xlu0 %v2076, 96
    %v2472 = vpop.permute.xlu0 %2471
    %v2473 = vsel %vm374, %v2076, 0
    %v2475 = vsel %vm374, %v2472, 0
    %2477 = vmatprep.subr.mxu0 0.0
    %2478 = vmatpush1.xpose.msra.mxu0 %v2475
    %2479 = vmatprep.subr.mxu0 0.0
    %2480 = vmatpush1.xpose.msra.mxu0 0.0
    %2481 = vmatprep.subr.mxu0 0.0
    %2482 = vmatpush1.xpose.msra.mxu0 0.0
    %2483 = vmatprep.subr.mxu0 0.0
    %2484 = vmatpush1.xpose.msra.mxu0 0.0
    %2485 = vmatprep.subr.mxu0 0.0
    %2486 = vmatpush1.xpose.msra.mxu0 0.0
    %2487 = vmatprep.subr.mxu0 0.0
    %2488 = vmatpush1.xpose.msra.mxu0 0.0
    %2489 = vmatprep.subr.mxu0 0.0
    %2490 = vmatpush1.xpose.msra.mxu0 0.0
    %2491 = vmatprep.subr.mxu0 0.0
    %2492 = vmatpush1.xpose.msra.mxu0 0.0
    %2493 = vmatprep.subr.mxu0 0.0
    %2494 = vmatpush1.xpose.msra.mxu0 0.0
    %2495 = vmatprep.subr.mxu0 0.0
    %2496 = vmatpush1.xpose.msra.mxu0 0.0
    %2497 = vmatprep.subr.mxu0 0.0
    %2498 = vmatpush1.xpose.msra.mxu0 0.0
    %2499 = vmatprep.subr.mxu0 0.0
    %2500 = vmatpush1.xpose.msra.mxu0 0.0
    %2501 = vmatprep.subr.mxu0 0.0
    %2502 = vmatpush1.xpose.msra.mxu0 0.0
    %2503 = vmatprep.subr.mxu0 0.0
    %2504 = vmatpush1.xpose.msra.mxu0 0.0
    %2505 = vmatprep.subr.mxu0 0.0
    %2506 = vmatpush1.xpose.msra.mxu0 0.0
    %2507 = vmatprep.subr.mxu0 0.0
    %2508 = vmatpush1.xpose.msra.mxu0 0.0
    %2509 = vmatprep.subr.mxu0 0.0
    %2510 = vmatpush1.xpose.msra.mxu0 0.0
    %2511 = vmatprep.subr.mxu0 0.0
    %2512 = vmatpush1.xpose.msra.mxu0 0.0
    %2513 = vmatprep.subr.mxu0 0.0
    %2514 = vmatpush1.xpose.msra.mxu0 0.0
    %2515 = vmatprep.subr.mxu0 0.0
    %2516 = vmatpush1.xpose.msra.mxu0 0.0
    %2517 = vmatprep.subr.mxu0 0.0
    %2518 = vmatpush1.xpose.msra.mxu0 0.0
    %2519 = vmatprep.subr.mxu0 0.0
    %2520 = vmatpush1.xpose.msra.mxu0 0.0
    %2521 = vmatprep.subr.mxu0 0.0
    %2522 = vmatpush1.xpose.msra.mxu0 0.0
    %2523 = vmatprep.subr.mxu0 0.0
    %2524 = vmatpush1.xpose.msra.mxu0 0.0
    %2525 = vmatprep.subr.mxu0 0.0
    %2526 = vmatpush1.xpose.msra.mxu0 0.0
    %2527 = vmatprep.subr.mxu0 0.0
    %2528 = vmatpush1.xpose.msra.mxu0 0.0
    %2529 = vmatprep.subr.mxu0 0.0
    %2530 = vmatpush1.xpose.msra.mxu0 0.0
    %2531 = vmatprep.subr.mxu0 0.0
    %2532 = vmatpush1.xpose.msra.mxu0 0.0
    %2533 = vmatprep.subr.mxu0 0.0
    %2534 = vmatpush1.xpose.msra.mxu0 0.0
    %2535 = vmatprep.subr.mxu0 0.0
    %2536 = vmatpush1.xpose.msra.mxu0 0.0
    %2537 = vmatprep.subr.mxu0 0.0
    %2538 = vmatpush1.xpose.msra.mxu0 0.0
    %2539 = vmatprep.subr.mxu0 0.0
    %2540 = vmatpush1.xpose.msra.mxu0 0.0
    %2541 = vmatprep.mubr.f32.mxu0 0.0
    %2542 = vmatmul.mubr.f32.gmra.mrb[0].mxu0 %v2473
    %v2543 = vpop.f32.mrb[0].mxu0
    %v2544 = vadd.f32 0.0, %v2543
    %v2545 = vpop.f32.mrb[0].mxu0
    %2546 = vdwg.mxu0
    %2547 = vrot.lane.b32.xlu0 %v2078, 96
    %v2548 = vpop.permute.xlu0 %2547
    %v2549 = vsel %vm374, %v2078, 0
    %v2551 = vsel %vm374, %v2548, 0
    %2553 = vmatprep.subr.mxu0 0.0
    %2554 = vmatpush1.xpose.msra.mxu0 %v2551
    %2555 = vmatprep.subr.mxu0 0.0
    %2556 = vmatpush1.xpose.msra.mxu0 0.0
    %2557 = vmatprep.subr.mxu0 0.0
    %2558 = vmatpush1.xpose.msra.mxu0 0.0
    %2559 = vmatprep.subr.mxu0 0.0
    %2560 = vmatpush1.xpose.msra.mxu0 0.0
    %2561 = vmatprep.subr.mxu0 0.0
    %2562 = vmatpush1.xpose.msra.mxu0 0.0
    %2563 = vmatprep.subr.mxu0 0.0
    %2564 = vmatpush1.xpose.msra.mxu0 0.0
    %2565 = vmatprep.subr.mxu0 0.0
    %2566 = vmatpush1.xpose.msra.mxu0 0.0
    %2567 = vmatprep.subr.mxu0 0.0
    %2568 = vmatpush1.xpose.msra.mxu0 0.0
    %2569 = vmatprep.subr.mxu0 0.0
    %2570 = vmatpush1.xpose.msra.mxu0 0.0
    %2571 = vmatprep.subr.mxu0 0.0
    %2572 = vmatpush1.xpose.msra.mxu0 0.0
    %2573 = vmatprep.subr.mxu0 0.0
    %2574 = vmatpush1.xpose.msra.mxu0 0.0
    %2575 = vmatprep.subr.mxu0 0.0
    %2576 = vmatpush1.xpose.msra.mxu0 0.0
    %2577 = vmatprep.subr.mxu0 0.0
    %2578 = vmatpush1.xpose.msra.mxu0 0.0
    %2579 = vmatprep.subr.mxu0 0.0
    %2580 = vmatpush1.xpose.msra.mxu0 0.0
    %2581 = vmatprep.subr.mxu0 0.0
    %2582 = vmatpush1.xpose.msra.mxu0 0.0
    %2583 = vmatprep.subr.mxu0 0.0
    %2584 = vmatpush1.xpose.msra.mxu0 0.0
    %2585 = vmatprep.subr.mxu0 0.0
    %2586 = vmatpush1.xpose.msra.mxu0 0.0
    %2587 = vmatprep.subr.mxu0 0.0
    %2588 = vmatpush1.xpose.msra.mxu0 0.0
    %2589 = vmatprep.subr.mxu0 0.0
    %2590 = vmatpush1.xpose.msra.mxu0 0.0
    %2591 = vmatprep.subr.mxu0 0.0
    %2592 = vmatpush1.xpose.msra.mxu0 0.0
    %2593 = vmatprep.subr.mxu0 0.0
    %2594 = vmatpush1.xpose.msra.mxu0 0.0
    %2595 = vmatprep.subr.mxu0 0.0
    %2596 = vmatpush1.xpose.msra.mxu0 0.0
    %2597 = vmatprep.subr.mxu0 0.0
    %2598 = vmatpush1.xpose.msra.mxu0 0.0
    %2599 = vmatprep.subr.mxu0 0.0
    %2600 = vmatpush1.xpose.msra.mxu0 0.0
    %2601 = vmatprep.subr.mxu0 0.0
    %2602 = vmatpush1.xpose.msra.mxu0 0.0
    %2603 = vmatprep.subr.mxu0 0.0
    %2604 = vmatpush1.xpose.msra.mxu0 0.0
    %2605 = vmatprep.subr.mxu0 0.0
    %2606 = vmatpush1.xpose.msra.mxu0 0.0
    %2607 = vmatprep.subr.mxu0 0.0
    %2608 = vmatpush1.xpose.msra.mxu0 0.0
    %2609 = vmatprep.subr.mxu0 0.0
    %2610 = vmatpush1.xpose.msra.mxu0 0.0
    %2611 = vmatprep.subr.mxu0 0.0
    %2612 = vmatpush1.xpose.msra.mxu0 0.0
    %2613 = vmatprep.subr.mxu0 0.0
    %2614 = vmatpush1.xpose.msra.mxu0 0.0
    %2615 = vmatprep.subr.mxu0 0.0
    %2616 = vmatpush1.xpose.msra.mxu0 0.0
    %2617 = vmatprep.mubr.f32.mxu0 0.0
    %2618 = vmatmul.mubr.f32.gmra.mrb[0].mxu0 %v2549
    %v2619 = vpop.f32.mrb[0].mxu0
    %v2620 = vadd.f32 0.0, %v2619
    %v2621 = vpop.f32.mrb[0].mxu0
    %2622 = vdwg.mxu0
    %2623 = vrot.lane.b32.xlu0 %v2080, 96
    %v2624 = vpop.permute.xlu0 %2623
    %v2625 = vsel %vm374, %v2080, 0
    %v2627 = vsel %vm374, %v2624, 0
    %2629 = vmatprep.subr.mxu0 0.0
    %2630 = vmatpush1.xpose.msra.mxu0 %v2627
    %2631 = vmatprep.subr.mxu0 0.0
    %2632 = vmatpush1.xpose.msra.mxu0 0.0
    %2633 = vmatprep.subr.mxu0 0.0
    %2634 = vmatpush1.xpose.msra.mxu0 0.0
    %2635 = vmatprep.subr.mxu0 0.0
    %2636 = vmatpush1.xpose.msra.mxu0 0.0
    %2637 = vmatprep.subr.mxu0 0.0
    %2638 = vmatpush1.xpose.msra.mxu0 0.0
    %2639 = vmatprep.subr.mxu0 0.0
    %2640 = vmatpush1.xpose.msra.mxu0 0.0
    %2641 = vmatprep.subr.mxu0 0.0
    %2642 = vmatpush1.xpose.msra.mxu0 0.0
    %2643 = vmatprep.subr.mxu0 0.0
    %2644 = vmatpush1.xpose.msra.mxu0 0.0
    %2645 = vmatprep.subr.mxu0 0.0
    %2646 = vmatpush1.xpose.msra.mxu0 0.0
    %2647 = vmatprep.subr.mxu0 0.0
    %2648 = vmatpush1.xpose.msra.mxu0 0.0
    %2649 = vmatprep.subr.mxu0 0.0
    %2650 = vmatpush1.xpose.msra.mxu0 0.0
    %2651 = vmatprep.subr.mxu0 0.0
    %2652 = vmatpush1.xpose.msra.mxu0 0.0
    %2653 = vmatprep.subr.mxu0 0.0
    %2654 = vmatpush1.xpose.msra.mxu0 0.0
    %2655 = vmatprep.subr.mxu0 0.0
    %2656 = vmatpush1.xpose.msra.mxu0 0.0
    %2657 = vmatprep.subr.mxu0 0.0
    %2658 = vmatpush1.xpose.msra.mxu0 0.0
    %2659 = vmatprep.subr.mxu0 0.0
    %2660 = vmatpush1.xpose.msra.mxu0 0.0
    %2661 = vmatprep.subr.mxu0 0.0
    %2662 = vmatpush1.xpose.msra.mxu0 0.0
    %2663 = vmatprep.subr.mxu0 0.0
    %2664 = vmatpush1.xpose.msra.mxu0 0.0
    %2665 = vmatprep.subr.mxu0 0.0
    %2666 = vmatpush1.xpose.msra.mxu0 0.0
    %2667 = vmatprep.subr.mxu0 0.0
    %2668 = vmatpush1.xpose.msra.mxu0 0.0
    %2669 = vmatprep.subr.mxu0 0.0
    %2670 = vmatpush1.xpose.msra.mxu0 0.0
    %2671 = vmatprep.subr.mxu0 0.0
    %2672 = vmatpush1.xpose.msra.mxu0 0.0
    %2673 = vmatprep.subr.mxu0 0.0
    %2674 = vmatpush1.xpose.msra.mxu0 0.0
    %2675 = vmatprep.subr.mxu0 0.0
    %2676 = vmatpush1.xpose.msra.mxu0 0.0
    %2677 = vmatprep.subr.mxu0 0.0
    %2678 = vmatpush1.xpose.msra.mxu0 0.0
    %2679 = vmatprep.subr.mxu0 0.0
    %2680 = vmatpush1.xpose.msra.mxu0 0.0
    %2681 = vmatprep.subr.mxu0 0.0
    %2682 = vmatpush1.xpose.msra.mxu0 0.0
    %2683 = vmatprep.subr.mxu0 0.0
    %2684 = vmatpush1.xpose.msra.mxu0 0.0
    %2685 = vmatprep.subr.mxu0 0.0
    %2686 = vmatpush1.xpose.msra.mxu0 0.0
    %2687 = vmatprep.subr.mxu0 0.0
    %2688 = vmatpush1.xpose.msra.mxu0 0.0
    %2689 = vmatprep.subr.mxu0 0.0
    %2690 = vmatpush1.xpose.msra.mxu0 0.0
    %2691 = vmatprep.subr.mxu0 0.0
    %2692 = vmatpush1.xpose.msra.mxu0 0.0
    %2693 = vmatprep.mubr.f32.mxu0 0.0
    %2694 = vmatmul.mubr.f32.gmra.mrb[0].mxu0 %v2625
    %v2695 = vpop.f32.mrb[0].mxu0
    %v2696 = vadd.f32 0.0, %v2695
    %v2697 = vpop.f32.mrb[0].mxu0
    %2698 = vdwg.mxu0
    %v2699 = vmul.f32 %v2166, 0.35355338
    %v2700 = vmul.f32 %v2240, 0.35355338
    %v2701 = vmul.f32 %v2316, 0.35355338
    %v2702 = vmul.f32 %v2392, 0.35355338
    %v2703 = vmul.f32 %v2468, 0.35355338
    %v2704 = vmul.f32 %v2544, 0.35355338
    %v2705 = vmul.f32 %v2620, 0.35355338
    %v2706 = vmul.f32 %v2696, 0.35355338
    %v2707 = vsel %vm374, %v2699, -inf
    %2708 = vmax.xlane.f32.xlu0 %v2707
    %v2709 = vpop.xlane.xlu0 %2708
    %v2710 = vsel %vm374, %v2700, -inf
    %2711 = vmax.xlane.f32.xlu0 %v2710
    %v2712 = vpop.xlane.xlu0 %2711
    %v2713 = vsel %vm374, %v2701, -inf
    %2714 = vmax.xlane.f32.xlu0 %v2713
    %v2715 = vpop.xlane.xlu0 %2714
    %v2716 = vsel %vm374, %v2702, -inf
    %2717 = vmax.xlane.f32.xlu0 %v2716
    %v2718 = vpop.xlane.xlu0 %2717
    %v2719 = vsel %vm374, %v2703, -inf
    %2720 = vmax.xlane.f32.xlu0 %v2719
    %v2721 = vpop.xlane.xlu0 %2720
    %v2722 = vsel %vm374, %v2704, -inf
    %2723 = vmax.xlane.f32.xlu0 %v2722
    %v2724 = vpop.xlane.xlu0 %2723
    %v2725 = vsel %vm374, %v2705, -inf
    %2726 = vmax.xlane.f32.xlu0 %v2725
    %v2727 = vpop.xlane.xlu0 %2726
    %v2728 = vsel %vm374, %v2706, -inf
    %2729 = vmax.xlane.f32.xlu0 %v2728
    %v2730 = vpop.xlane.xlu0 %2729
    %v2731 = vsub.f32 %v2699, %v2709
    %v2732 = vsub.f32 %v2700, %v2712
    %v2733 = vsub.f32 %v2701, %v2715
    %v2734 = vsub.f32 %v2702, %v2718
    %v2735 = vsub.f32 %v2703, %v2721
    %v2736 = vsub.f32 %v2704, %v2724
    %v2737 = vsub.f32 %v2705, %v2727
    %v2738 = vsub.f32 %v2706, %v2730
    %v2739 = vmul.f32 %v2731, 1.442695
    %v2740 = vpow.pop %v2739
    %v2741 = vmul.f32 %v2732, 1.442695
    %v2742 = vpow.pop %v2741
    %v2743 = vmul.f32 %v2733, 1.442695
    %v2744 = vpow.pop %v2743
    %v2745 = vmul.f32 %v2734, 1.442695
    %v2746 = vpow.pop %v2745
    %v2747 = vmul.f32 %v2735, 1.442695
    %v2748 = vpow.pop %v2747
    %v2749 = vmul.f32 %v2736, 1.442695
    %v2750 = vpow.pop %v2749
    %v2751 = vmul.f32 %v2737, 1.442695
    %v2752 = vpow.pop %v2751
    %v2753 = vmul.f32 %v2738, 1.442695
    %v2754 = vpow.pop %v2753
    %v2755 = vsel %vm374, %v2740, 0.0
    %2756 = vadd.xlane.f32.xlu0 %v2755
    %v2757 = vpop.xlane.xlu0 %2756
    %v2758 = vsel %vm374, %v2742, 0.0
    %2759 = vadd.xlane.f32.xlu0 %v2758
    %v2760 = vpop.xlane.xlu0 %2759
    %v2761 = vsel %vm374, %v2744, 0.0
    %2762 = vadd.xlane.f32.xlu0 %v2761
    %v2763 = vpop.xlane.xlu0 %2762
    %v2764 = vsel %vm374, %v2746, 0.0
    %2765 = vadd.xlane.f32.xlu0 %v2764
    %v2766 = vpop.xlane.xlu0 %2765
    %v2767 = vsel %vm374, %v2748, 0.0
    %2768 = vadd.xlane.f32.xlu0 %v2767
    %v2769 = vpop.xlane.xlu0 %2768
    %v2770 = vsel %vm374, %v2750, 0.0
    %2771 = vadd.xlane.f32.xlu0 %v2770
    %v2772 = vpop.xlane.xlu0 %2771
    %v2773 = vsel %vm374, %v2752, 0.0
    %2774 = vadd.xlane.f32.xlu0 %v2773
    %v2775 = vpop.xlane.xlu0 %2774
    %v2776 = vsel %vm374, %v2754, 0.0
    %2777 = vadd.xlane.f32.xlu0 %v2776
    %v2778 = vpop.xlane.xlu0 %2777
    %v2779 = vrcp.pop %v2757
    %v2780 = vmul.f32 %v2740, %v2779
    %v2781 = vrcp.pop %v2760
    %v2782 = vmul.f32 %v2742, %v2781
    %v2783 = vrcp.pop %v2763
    %v2784 = vmul.f32 %v2744, %v2783
    %v2785 = vrcp.pop %v2766
    %v2786 = vmul.f32 %v2746, %v2785
    %v2787 = vrcp.pop %v2769
    %v2788 = vmul.f32 %v2748, %v2787
    %v2789 = vrcp.pop %v2772
    %v2790 = vmul.f32 %v2750, %v2789
    %v2791 = vrcp.pop %v2775
    %v2792 = vmul.f32 %v2752, %v2791
    %v2793 = vrcp.pop %v2778
    %v2794 = vmul.f32 %v2754, %v2793
    %2795 = vrot.lane.b32.xlu0 %v2057, 64
    %v2796 = vpop.permute.xlu0 %2795
    %v2799 = vsel %vm374, %v2780, 0
    %2801 = vmatprep.subr.mxu0 0.0
    %2802 = vmatpush1.msra.mxu0 %v2796
    %2803 = vmatprep.subr.mxu0 0.0
    %2804 = vmatpush1.msra.mxu0 0.0
    %2805 = vmatprep.subr.mxu0 0.0
    %2806 = vmatpush1.msra.mxu0 0.0
    %2807 = vmatprep.subr.mxu0 0.0
    %2808 = vmatpush1.msra.mxu0 0.0
    %2809 = vmatprep.subr.mxu0 0.0
    %2810 = vmatpush1.msra.mxu0 0.0
    %2811 = vmatprep.subr.mxu0 0.0
    %2812 = vmatpush1.msra.mxu0 0.0
    %2813 = vmatprep.subr.mxu0 0.0
    %2814 = vmatpush1.msra.mxu0 0.0
    %2815 = vmatprep.subr.mxu0 0.0
    %2816 = vmatpush1.msra.mxu0 0.0
    %2817 = vmatprep.subr.mxu0 0.0
    %2818 = vmatpush1.msra.mxu0 0.0
    %2819 = vmatprep.subr.mxu0 0.0
    %2820 = vmatpush1.msra.mxu0 0.0
    %2821 = vmatprep.subr.mxu0 0.0
    %2822 = vmatpush1.msra.mxu0 0.0
    %2823 = vmatprep.subr.mxu0 0.0
    %2824 = vmatpush1.msra.mxu0 0.0
    %2825 = vmatprep.subr.mxu0 0.0
    %2826 = vmatpush1.msra.mxu0 0.0
    %2827 = vmatprep.subr.mxu0 0.0
    %2828 = vmatpush1.msra.mxu0 0.0
    %2829 = vmatprep.subr.mxu0 0.0
    %2830 = vmatpush1.msra.mxu0 0.0
    %2831 = vmatprep.subr.mxu0 0.0
    %2832 = vmatpush1.msra.mxu0 0.0
    %2833 = vmatprep.subr.mxu0 0.0
    %2834 = vmatpush1.msra.mxu0 0.0
    %2835 = vmatprep.subr.mxu0 0.0
    %2836 = vmatpush1.msra.mxu0 0.0
    %2837 = vmatprep.subr.mxu0 0.0
    %2838 = vmatpush1.msra.mxu0 0.0
    %2839 = vmatprep.subr.mxu0 0.0
    %2840 = vmatpush1.msra.mxu0 0.0
    %2841 = vmatprep.subr.mxu0 0.0
    %2842 = vmatpush1.msra.mxu0 0.0
    %2843 = vmatprep.subr.mxu0 0.0
    %2844 = vmatpush1.msra.mxu0 0.0
    %2845 = vmatprep.subr.mxu0 0.0
    %2846 = vmatpush1.msra.mxu0 0.0
    %2847 = vmatprep.subr.mxu0 0.0
    %2848 = vmatpush1.msra.mxu0 0.0
    %2849 = vmatprep.subr.mxu0 0.0
    %2850 = vmatpush1.msra.mxu0 0.0
    %2851 = vmatprep.subr.mxu0 0.0
    %2852 = vmatpush1.msra.mxu0 0.0
    %2853 = vmatprep.subr.mxu0 0.0
    %2854 = vmatpush1.msra.mxu0 0.0
    %2855 = vmatprep.subr.mxu0 0.0
    %2856 = vmatpush1.msra.mxu0 0.0
    %2857 = vmatprep.subr.mxu0 0.0
    %2858 = vmatpush1.msra.mxu0 0.0
    %2859 = vmatprep.subr.mxu0 0.0
    %2860 = vmatpush1.msra.mxu0 0.0
    %2861 = vmatprep.subr.mxu0 0.0
    %2862 = vmatpush1.msra.mxu0 0.0
    %2863 = vmatprep.subr.mxu0 0.0
    %2864 = vmatpush1.msra.mxu0 0.0
    %2865 = vmatprep.mubr.f32.mxu0 0.0
    %2866 = vmatmul.mubr.f32.gmra.mrb[0].mxu0 %v2799
    %v2867 = vpop.f32.mrb[0].mxu0
    %v2868 = vadd.f32 0.0, %v2867
    %v2869 = vpop.f32.mrb[0].mxu0
    %2870 = vdwg.mxu0
    %2871 = vrot.lane.b32.xlu0 %v2063, 64
    %v2872 = vpop.permute.xlu0 %2871
    %v2875 = vsel %vm374, %v2782, 0
    %2877 = vmatprep.subr.mxu0 0.0
    %2878 = vmatpush1.msra.mxu0 %v2872
    %2879 = vmatprep.subr.mxu0 0.0
    %2880 = vmatpush1.msra.mxu0 0.0
    %2881 = vmatprep.subr.mxu0 0.0
    %2882 = vmatpush1.msra.mxu0 0.0
    %2883 = vmatprep.subr.mxu0 0.0
    %2884 = vmatpush1.msra.mxu0 0.0
    %2885 = vmatprep.subr.mxu0 0.0
    %2886 = vmatpush1.msra.mxu0 0.0
    %2887 = vmatprep.subr.mxu0 0.0
    %2888 = vmatpush1.msra.mxu0 0.0
    %2889 = vmatprep.subr.mxu0 0.0
    %2890 = vmatpush1.msra.mxu0 0.0
    %2891 = vmatprep.subr.mxu0 0.0
    %2892 = vmatpush1.msra.mxu0 0.0
    %2893 = vmatprep.subr.mxu0 0.0
    %2894 = vmatpush1.msra.mxu0 0.0
    %2895 = vmatprep.subr.mxu0 0.0
    %2896 = vmatpush1.msra.mxu0 0.0
    %2897 = vmatprep.subr.mxu0 0.0
    %2898 = vmatpush1.msra.mxu0 0.0
    %2899 = vmatprep.subr.mxu0 0.0
    %2900 = vmatpush1.msra.mxu0 0.0
    %2901 = vmatprep.subr.mxu0 0.0
    %2902 = vmatpush1.msra.mxu0 0.0
    %2903 = vmatprep.subr.mxu0 0.0
    %2904 = vmatpush1.msra.mxu0 0.0
    %2905 = vmatprep.subr.mxu0 0.0
    %2906 = vmatpush1.msra.mxu0 0.0
    %2907 = vmatprep.subr.mxu0 0.0
    %2908 = vmatpush1.msra.mxu0 0.0
    %2909 = vmatprep.subr.mxu0 0.0
    %2910 = vmatpush1.msra.mxu0 0.0
    %2911 = vmatprep.subr.mxu0 0.0
    %2912 = vmatpush1.msra.mxu0 0.0
    %2913 = vmatprep.subr.mxu0 0.0
    %2914 = vmatpush1.msra.mxu0 0.0
    %2915 = vmatprep.subr.mxu0 0.0
    %2916 = vmatpush1.msra.mxu0 0.0
    %2917 = vmatprep.subr.mxu0 0.0
    %2918 = vmatpush1.msra.mxu0 0.0
    %2919 = vmatprep.subr.mxu0 0.0
    %2920 = vmatpush1.msra.mxu0 0.0
    %2921 = vmatprep.subr.mxu0 0.0
    %2922 = vmatpush1.msra.mxu0 0.0
    %2923 = vmatprep.subr.mxu0 0.0
    %2924 = vmatpush1.msra.mxu0 0.0
    %2925 = vmatprep.subr.mxu0 0.0
    %2926 = vmatpush1.msra.mxu0 0.0
    %2927 = vmatprep.subr.mxu0 0.0
    %2928 = vmatpush1.msra.mxu0 0.0
    %2929 = vmatprep.subr.mxu0 0.0
    %2930 = vmatpush1.msra.mxu0 0.0
    %2931 = vmatprep.subr.mxu0 0.0
    %2932 = vmatpush1.msra.mxu0 0.0
    %2933 = vmatprep.subr.mxu0 0.0
    %2934 = vmatpush1.msra.mxu0 0.0
    %2935 = vmatprep.subr.mxu0 0.0
    %2936 = vmatpush1.msra.mxu0 0.0
    %2937 = vmatprep.subr.mxu0 0.0
    %2938 = vmatpush1.msra.mxu0 0.0
    %2939 = vmatprep.subr.mxu0 0.0
    %2940 = vmatpush1.msra.mxu0 0.0
    %2941 = vmatprep.mubr.f32.mxu0 0.0
    %2942 = vmatmul.mubr.f32.gmra.mrb[0].mxu0 %v2875
    %v2943 = vpop.f32.mrb[0].mxu0
    %v2944 = vadd.f32 0.0, %v2943
    %v2945 = vpop.f32.mrb[0].mxu0
    %2946 = vdwg.mxu0
    %2947 = vrot.lane.b32.xlu0 %v2082, 64
    %v2948 = vpop.permute.xlu0 %2947
    %v2951 = vsel %vm374, %v2784, 0
    %2953 = vmatprep.subr.mxu0 0.0
    %2954 = vmatpush1.msra.mxu0 %v2948
    %2955 = vmatprep.subr.mxu0 0.0
    %2956 = vmatpush1.msra.mxu0 0.0
    %2957 = vmatprep.subr.mxu0 0.0
    %2958 = vmatpush1.msra.mxu0 0.0
    %2959 = vmatprep.subr.mxu0 0.0
    %2960 = vmatpush1.msra.mxu0 0.0
    %2961 = vmatprep.subr.mxu0 0.0
    %2962 = vmatpush1.msra.mxu0 0.0
    %2963 = vmatprep.subr.mxu0 0.0
    %2964 = vmatpush1.msra.mxu0 0.0
    %2965 = vmatprep.subr.mxu0 0.0
    %2966 = vmatpush1.msra.mxu0 0.0
    %2967 = vmatprep.subr.mxu0 0.0
    %2968 = vmatpush1.msra.mxu0 0.0
    %2969 = vmatprep.subr.mxu0 0.0
    %2970 = vmatpush1.msra.mxu0 0.0
    %2971 = vmatprep.subr.mxu0 0.0
    %2972 = vmatpush1.msra.mxu0 0.0
    %2973 = vmatprep.subr.mxu0 0.0
    %2974 = vmatpush1.msra.mxu0 0.0
    %2975 = vmatprep.subr.mxu0 0.0
    %2976 = vmatpush1.msra.mxu0 0.0
    %2977 = vmatprep.subr.mxu0 0.0
    %2978 = vmatpush1.msra.mxu0 0.0
    %2979 = vmatprep.subr.mxu0 0.0
    %2980 = vmatpush1.msra.mxu0 0.0
    %2981 = vmatprep.subr.mxu0 0.0
    %2982 = vmatpush1.msra.mxu0 0.0
    %2983 = vmatprep.subr.mxu0 0.0
    %2984 = vmatpush1.msra.mxu0 0.0
    %2985 = vmatprep.subr.mxu0 0.0
    %2986 = vmatpush1.msra.mxu0 0.0
    %2987 = vmatprep.subr.mxu0 0.0
    %2988 = vmatpush1.msra.mxu0 0.0
    %2989 = vmatprep.subr.mxu0 0.0
    %2990 = vmatpush1.msra.mxu0 0.0
    %2991 = vmatprep.subr.mxu0 0.0
    %2992 = vmatpush1.msra.mxu0 0.0
    %2993 = vmatprep.subr.mxu0 0.0
    %2994 = vmatpush1.msra.mxu0 0.0
    %2995 = vmatprep.subr.mxu0 0.0
    %2996 = vmatpush1.msra.mxu0 0.0
    %2997 = vmatprep.subr.mxu0 0.0
    %2998 = vmatpush1.msra.mxu0 0.0
    %2999 = vmatprep.subr.mxu0 0.0
    %3000 = vmatpush1.msra.mxu0 0.0
    %3001 = vmatprep.subr.mxu0 0.0
    %3002 = vmatpush1.msra.mxu0 0.0
    %3003 = vmatprep.subr.mxu0 0.0
    %3004 = vmatpush1.msra.mxu0 0.0
    %3005 = vmatprep.subr.mxu0 0.0
    %3006 = vmatpush1.msra.mxu0 0.0
    %3007 = vmatprep.subr.mxu0 0.0
    %3008 = vmatpush1.msra.mxu0 0.0
    %3009 = vmatprep.subr.mxu0 0.0
    %3010 = vmatpush1.msra.mxu0 0.0
    %3011 = vmatprep.subr.mxu0 0.0
    %3012 = vmatpush1.msra.mxu0 0.0
    %3013 = vmatprep.subr.mxu0 0.0
    %3014 = vmatpush1.msra.mxu0 0.0
    %3015 = vmatprep.subr.mxu0 0.0
    %3016 = vmatpush1.msra.mxu0 0.0
    %3017 = vmatprep.mubr.f32.mxu0 0.0
    %3018 = vmatmul.mubr.f32.gmra.mrb[0].mxu0 %v2951
    %v3019 = vpop.f32.mrb[0].mxu0
    %v3020 = vadd.f32 0.0, %v3019
    %v3021 = vpop.f32.mrb[0].mxu0
    %3022 = vdwg.mxu0
    %3023 = vrot.lane.b32.xlu0 %v2084, 64
    %v3024 = vpop.permute.xlu0 %3023
    %v3027 = vsel %vm374, %v2786, 0
    %3029 = vmatprep.subr.mxu0 0.0
    %3030 = vmatpush1.msra.mxu0 %v3024
    %3031 = vmatprep.subr.mxu0 0.0
    %3032 = vmatpush1.msra.mxu0 0.0
    %3033 = vmatprep.subr.mxu0 0.0
    %3034 = vmatpush1.msra.mxu0 0.0
    %3035 = vmatprep.subr.mxu0 0.0
    %3036 = vmatpush1.msra.mxu0 0.0
    %3037 = vmatprep.subr.mxu0 0.0
    %3038 = vmatpush1.msra.mxu0 0.0
    %3039 = vmatprep.subr.mxu0 0.0
    %3040 = vmatpush1.msra.mxu0 0.0
    %3041 = vmatprep.subr.mxu0 0.0
    %3042 = vmatpush1.msra.mxu0 0.0
    %3043 = vmatprep.subr.mxu0 0.0
    %3044 = vmatpush1.msra.mxu0 0.0
    %3045 = vmatprep.subr.mxu0 0.0
    %3046 = vmatpush1.msra.mxu0 0.0
    %3047 = vmatprep.subr.mxu0 0.0
    %3048 = vmatpush1.msra.mxu0 0.0
    %3049 = vmatprep.subr.mxu0 0.0
    %3050 = vmatpush1.msra.mxu0 0.0
    %3051 = vmatprep.subr.mxu0 0.0
    %3052 = vmatpush1.msra.mxu0 0.0
    %3053 = vmatprep.subr.mxu0 0.0
    %3054 = vmatpush1.msra.mxu0 0.0
    %3055 = vmatprep.subr.mxu0 0.0
    %3056 = vmatpush1.msra.mxu0 0.0
    %3057 = vmatprep.subr.mxu0 0.0
    %3058 = vmatpush1.msra.mxu0 0.0
    %3059 = vmatprep.subr.mxu0 0.0
    %3060 = vmatpush1.msra.mxu0 0.0
    %3061 = vmatprep.subr.mxu0 0.0
    %3062 = vmatpush1.msra.mxu0 0.0
    %3063 = vmatprep.subr.mxu0 0.0
    %3064 = vmatpush1.msra.mxu0 0.0
    %3065 = vmatprep.subr.mxu0 0.0
    %3066 = vmatpush1.msra.mxu0 0.0
    %3067 = vmatprep.subr.mxu0 0.0
    %3068 = vmatpush1.msra.mxu0 0.0
    %3069 = vmatprep.subr.mxu0 0.0
    %3070 = vmatpush1.msra.mxu0 0.0
    %3071 = vmatprep.subr.mxu0 0.0
    %3072 = vmatpush1.msra.mxu0 0.0
    %3073 = vmatprep.subr.mxu0 0.0
    %3074 = vmatpush1.msra.mxu0 0.0
    %3075 = vmatprep.subr.mxu0 0.0
    %3076 = vmatpush1.msra.mxu0 0.0
    %3077 = vmatprep.subr.mxu0 0.0
    %3078 = vmatpush1.msra.mxu0 0.0
    %3079 = vmatprep.subr.mxu0 0.0
    %3080 = vmatpush1.msra.mxu0 0.0
    %3081 = vmatprep.subr.mxu0 0.0
    %3082 = vmatpush1.msra.mxu0 0.0
    %3083 = vmatprep.subr.mxu0 0.0
    %3084 = vmatpush1.msra.mxu0 0.0
    %3085 = vmatprep.subr.mxu0 0.0
    %3086 = vmatpush1.msra.mxu0 0.0
    %3087 = vmatprep.subr.mxu0 0.0
    %3088 = vmatpush1.msra.mxu0 0.0
    %3089 = vmatprep.subr.mxu0 0.0
    %3090 = vmatpush1.msra.mxu0 0.0
    %3091 = vmatprep.subr.mxu0 0.0
    %3092 = vmatpush1.msra.mxu0 0.0
    %3093 = vmatprep.mubr.f32.mxu0 0.0
    %3094 = vmatmul.mubr.f32.gmra.mrb[0].mxu0 %v3027
    %v3095 = vpop.f32.mrb[0].mxu0
    %v3096 = vadd.f32 0.0, %v3095
    %v3097 = vpop.f32.mrb[0].mxu0
    %3098 = vdwg.mxu0
    %3099 = vrot.lane.b32.xlu0 %v2088, 64
    %v3100 = vpop.permute.xlu0 %3099
    %v3103 = vsel %vm374, %v2788, 0
    %3105 = vmatprep.subr.mxu0 0.0
    %3106 = vmatpush1.msra.mxu0 %v3100
    %3107 = vmatprep.subr.mxu0 0.0
    %3108 = vmatpush1.msra.mxu0 0.0
    %3109 = vmatprep.subr.mxu0 0.0
    %3110 = vmatpush1.msra.mxu0 0.0
    %3111 = vmatprep.subr.mxu0 0.0
    %3112 = vmatpush1.msra.mxu0 0.0
    %3113 = vmatprep.subr.mxu0 0.0
    %3114 = vmatpush1.msra.mxu0 0.0
    %3115 = vmatprep.subr.mxu0 0.0
    %3116 = vmatpush1.msra.mxu0 0.0
    %3117 = vmatprep.subr.mxu0 0.0
    %3118 = vmatpush1.msra.mxu0 0.0
    %3119 = vmatprep.subr.mxu0 0.0
    %3120 = vmatpush1.msra.mxu0 0.0
    %3121 = vmatprep.subr.mxu0 0.0
    %3122 = vmatpush1.msra.mxu0 0.0
    %3123 = vmatprep.subr.mxu0 0.0
    %3124 = vmatpush1.msra.mxu0 0.0
    %3125 = vmatprep.subr.mxu0 0.0
    %3126 = vmatpush1.msra.mxu0 0.0
    %3127 = vmatprep.subr.mxu0 0.0
    %3128 = vmatpush1.msra.mxu0 0.0
    %3129 = vmatprep.subr.mxu0 0.0
    %3130 = vmatpush1.msra.mxu0 0.0
    %3131 = vmatprep.subr.mxu0 0.0
    %3132 = vmatpush1.msra.mxu0 0.0
    %3133 = vmatprep.subr.mxu0 0.0
    %3134 = vmatpush1.msra.mxu0 0.0
    %3135 = vmatprep.subr.mxu0 0.0
    %3136 = vmatpush1.msra.mxu0 0.0
    %3137 = vmatprep.subr.mxu0 0.0
    %3138 = vmatpush1.msra.mxu0 0.0
    %3139 = vmatprep.subr.mxu0 0.0
    %3140 = vmatpush1.msra.mxu0 0.0
    %3141 = vmatprep.subr.mxu0 0.0
    %3142 = vmatpush1.msra.mxu0 0.0
    %3143 = vmatprep.subr.mxu0 0.0
    %3144 = vmatpush1.msra.mxu0 0.0
    %3145 = vmatprep.subr.mxu0 0.0
    %3146 = vmatpush1.msra.mxu0 0.0
    %3147 = vmatprep.subr.mxu0 0.0
    %3148 = vmatpush1.msra.mxu0 0.0
    %3149 = vmatprep.subr.mxu0 0.0
    %3150 = vmatpush1.msra.mxu0 0.0
    %3151 = vmatprep.subr.mxu0 0.0
    %3152 = vmatpush1.msra.mxu0 0.0
    %3153 = vmatprep.subr.mxu0 0.0
    %3154 = vmatpush1.msra.mxu0 0.0
    %3155 = vmatprep.subr.mxu0 0.0
    %3156 = vmatpush1.msra.mxu0 0.0
    %3157 = vmatprep.subr.mxu0 0.0
    %3158 = vmatpush1.msra.mxu0 0.0
    %3159 = vmatprep.subr.mxu0 0.0
    %3160 = vmatpush1.msra.mxu0 0.0
    %3161 = vmatprep.subr.mxu0 0.0
    %3162 = vmatpush1.msra.mxu0 0.0
    %3163 = vmatprep.subr.mxu0 0.0
    %3164 = vmatpush1.msra.mxu0 0.0
    %3165 = vmatprep.subr.mxu0 0.0
    %3166 = vmatpush1.msra.mxu0 0.0
    %3167 = vmatprep.subr.mxu0 0.0
    %3168 = vmatpush1.msra.mxu0 0.0
    %3169 = vmatprep.mubr.f32.mxu0 0.0
    %3170 = vmatmul.mubr.f32.gmra.mrb[0].mxu0 %v3103
    %v3171 = vpop.f32.mrb[0].mxu0
    %v3172 = vadd.f32 0.0, %v3171
    %v3173 = vpop.f32.mrb[0].mxu0
    %3174 = vdwg.mxu0
    %3175 = vrot.lane.b32.xlu0 %v2090, 64
    %v3176 = vpop.permute.xlu0 %3175
    %v3179 = vsel %vm374, %v2790, 0
    %3181 = vmatprep.subr.mxu0 0.0
    %3182 = vmatpush1.msra.mxu0 %v3176
    %3183 = vmatprep.subr.mxu0 0.0
    %3184 = vmatpush1.msra.mxu0 0.0
    %3185 = vmatprep.subr.mxu0 0.0
    %3186 = vmatpush1.msra.mxu0 0.0
    %3187 = vmatprep.subr.mxu0 0.0
    %3188 = vmatpush1.msra.mxu0 0.0
    %3189 = vmatprep.subr.mxu0 0.0
    %3190 = vmatpush1.msra.mxu0 0.0
    %3191 = vmatprep.subr.mxu0 0.0
    %3192 = vmatpush1.msra.mxu0 0.0
    %3193 = vmatprep.subr.mxu0 0.0
    %3194 = vmatpush1.msra.mxu0 0.0
    %3195 = vmatprep.subr.mxu0 0.0
    %3196 = vmatpush1.msra.mxu0 0.0
    %3197 = vmatprep.subr.mxu0 0.0
    %3198 = vmatpush1.msra.mxu0 0.0
    %3199 = vmatprep.subr.mxu0 0.0
    %3200 = vmatpush1.msra.mxu0 0.0
    %3201 = vmatprep.subr.mxu0 0.0
    %3202 = vmatpush1.msra.mxu0 0.0
    %3203 = vmatprep.subr.mxu0 0.0
    %3204 = vmatpush1.msra.mxu0 0.0
    %3205 = vmatprep.subr.mxu0 0.0
    %3206 = vmatpush1.msra.mxu0 0.0
    %3207 = vmatprep.subr.mxu0 0.0
    %3208 = vmatpush1.msra.mxu0 0.0
    %3209 = vmatprep.subr.mxu0 0.0
    %3210 = vmatpush1.msra.mxu0 0.0
    %3211 = vmatprep.subr.mxu0 0.0
    %3212 = vmatpush1.msra.mxu0 0.0
    %3213 = vmatprep.subr.mxu0 0.0
    %3214 = vmatpush1.msra.mxu0 0.0
    %3215 = vmatprep.subr.mxu0 0.0
    %3216 = vmatpush1.msra.mxu0 0.0
    %3217 = vmatprep.subr.mxu0 0.0
    %3218 = vmatpush1.msra.mxu0 0.0
    %3219 = vmatprep.subr.mxu0 0.0
    %3220 = vmatpush1.msra.mxu0 0.0
    %3221 = vmatprep.subr.mxu0 0.0
    %3222 = vmatpush1.msra.mxu0 0.0
    %3223 = vmatprep.subr.mxu0 0.0
    %3224 = vmatpush1.msra.mxu0 0.0
    %3225 = vmatprep.subr.mxu0 0.0
    %3226 = vmatpush1.msra.mxu0 0.0
    %3227 = vmatprep.subr.mxu0 0.0
    %3228 = vmatpush1.msra.mxu0 0.0
    %3229 = vmatprep.subr.mxu0 0.0
    %3230 = vmatpush1.msra.mxu0 0.0
    %3231 = vmatprep.subr.mxu0 0.0
    %3232 = vmatpush1.msra.mxu0 0.0
    %3233 = vmatprep.subr.mxu0 0.0
    %3234 = vmatpush1.msra.mxu0 0.0
    %3235 = vmatprep.subr.mxu0 0.0
    %3236 = vmatpush1.msra.mxu0 0.0
    %3237 = vmatprep.subr.mxu0 0.0
    %3238 = vmatpush1.msra.mxu0 0.0
    %3239 = vmatprep.subr.mxu0 0.0
    %3240 = vmatpush1.msra.mxu0 0.0
    %3241 = vmatprep.subr.mxu0 0.0
    %3242 = vmatpush1.msra.mxu0 0.0
    %3243 = vmatprep.subr.mxu0 0.0
    %3244 = vmatpush1.msra.mxu0 0.0
    %3245 = vmatprep.mubr.f32.mxu0 0.0
    %3246 = vmatmul.mubr.f32.gmra.mrb[0].mxu0 %v3179
    %v3247 = vpop.f32.mrb[0].mxu0
    %v3248 = vadd.f32 0.0, %v3247
    %v3249 = vpop.f32.mrb[0].mxu0
    %3250 = vdwg.mxu0
    %3251 = vrot.lane.b32.xlu0 %v2092, 64
    %v3252 = vpop.permute.xlu0 %3251
    %v3255 = vsel %vm374, %v2792, 0
    %3257 = vmatprep.subr.mxu0 0.0
    %3258 = vmatpush1.msra.mxu0 %v3252
    %3259 = vmatprep.subr.mxu0 0.0
    %3260 = vmatpush1.msra.mxu0 0.0
    %3261 = vmatprep.subr.mxu0 0.0
    %3262 = vmatpush1.msra.mxu0 0.0
    %3263 = vmatprep.subr.mxu0 0.0
    %3264 = vmatpush1.msra.mxu0 0.0
    %3265 = vmatprep.subr.mxu0 0.0
    %3266 = vmatpush1.msra.mxu0 0.0
    %3267 = vmatprep.subr.mxu0 0.0
    %3268 = vmatpush1.msra.mxu0 0.0
    %3269 = vmatprep.subr.mxu0 0.0
    %3270 = vmatpush1.msra.mxu0 0.0
    %3271 = vmatprep.subr.mxu0 0.0
    %3272 = vmatpush1.msra.mxu0 0.0
    %3273 = vmatprep.subr.mxu0 0.0
    %3274 = vmatpush1.msra.mxu0 0.0
    %3275 = vmatprep.subr.mxu0 0.0
    %3276 = vmatpush1.msra.mxu0 0.0
    %3277 = vmatprep.subr.mxu0 0.0
    %3278 = vmatpush1.msra.mxu0 0.0
    %3279 = vmatprep.subr.mxu0 0.0
    %3280 = vmatpush1.msra.mxu0 0.0
    %3281 = vmatprep.subr.mxu0 0.0
    %3282 = vmatpush1.msra.mxu0 0.0
    %3283 = vmatprep.subr.mxu0 0.0
    %3284 = vmatpush1.msra.mxu0 0.0
    %3285 = vmatprep.subr.mxu0 0.0
    %3286 = vmatpush1.msra.mxu0 0.0
    %3287 = vmatprep.subr.mxu0 0.0
    %3288 = vmatpush1.msra.mxu0 0.0
    %3289 = vmatprep.subr.mxu0 0.0
    %3290 = vmatpush1.msra.mxu0 0.0
    %3291 = vmatprep.subr.mxu0 0.0
    %3292 = vmatpush1.msra.mxu0 0.0
    %3293 = vmatprep.subr.mxu0 0.0
    %3294 = vmatpush1.msra.mxu0 0.0
    %3295 = vmatprep.subr.mxu0 0.0
    %3296 = vmatpush1.msra.mxu0 0.0
    %3297 = vmatprep.subr.mxu0 0.0
    %3298 = vmatpush1.msra.mxu0 0.0
    %3299 = vmatprep.subr.mxu0 0.0
    %3300 = vmatpush1.msra.mxu0 0.0
    %3301 = vmatprep.subr.mxu0 0.0
    %3302 = vmatpush1.msra.mxu0 0.0
    %3303 = vmatprep.subr.mxu0 0.0
    %3304 = vmatpush1.msra.mxu0 0.0
    %3305 = vmatprep.subr.mxu0 0.0
    %3306 = vmatpush1.msra.mxu0 0.0
    %3307 = vmatprep.subr.mxu0 0.0
    %3308 = vmatpush1.msra.mxu0 0.0
    %3309 = vmatprep.subr.mxu0 0.0
    %3310 = vmatpush1.msra.mxu0 0.0
    %3311 = vmatprep.subr.mxu0 0.0
    %3312 = vmatpush1.msra.mxu0 0.0
    %3313 = vmatprep.subr.mxu0 0.0
    %3314 = vmatpush1.msra.mxu0 0.0
    %3315 = vmatprep.subr.mxu0 0.0
    %3316 = vmatpush1.msra.mxu0 0.0
    %3317 = vmatprep.subr.mxu0 0.0
    %3318 = vmatpush1.msra.mxu0 0.0
    %3319 = vmatprep.subr.mxu0 0.0
    %3320 = vmatpush1.msra.mxu0 0.0
    %3321 = vmatprep.mubr.f32.mxu0 0.0
    %3322 = vmatmul.mubr.f32.gmra.mrb[0].mxu0 %v3255
    %v3323 = vpop.f32.mrb[0].mxu0
    %v3324 = vadd.f32 0.0, %v3323
    %v3325 = vpop.f32.mrb[0].mxu0
    %3326 = vdwg.mxu0
    %3327 = vrot.lane.b32.xlu0 %v2094, 64
    %v3328 = vpop.permute.xlu0 %3327
    %v3331 = vsel %vm374, %v2794, 0
    %3333 = vmatprep.subr.mxu0 0.0
    %3334 = vmatpush1.msra.mxu0 %v3328
    %3335 = vmatprep.subr.mxu0 0.0
    %3336 = vmatpush1.msra.mxu0 0.0
    %3337 = vmatprep.subr.mxu0 0.0
    %3338 = vmatpush1.msra.mxu0 0.0
    %3339 = vmatprep.subr.mxu0 0.0
    %3340 = vmatpush1.msra.mxu0 0.0
    %3341 = vmatprep.subr.mxu0 0.0
    %3342 = vmatpush1.msra.mxu0 0.0
    %3343 = vmatprep.subr.mxu0 0.0
    %3344 = vmatpush1.msra.mxu0 0.0
    %3345 = vmatprep.subr.mxu0 0.0
    %3346 = vmatpush1.msra.mxu0 0.0
    %3347 = vmatprep.subr.mxu0 0.0
    %3348 = vmatpush1.msra.mxu0 0.0
    %3349 = vmatprep.subr.mxu0 0.0
    %3350 = vmatpush1.msra.mxu0 0.0
    %3351 = vmatprep.subr.mxu0 0.0
    %3352 = vmatpush1.msra.mxu0 0.0
    %3353 = vmatprep.subr.mxu0 0.0
    %3354 = vmatpush1.msra.mxu0 0.0
    %3355 = vmatprep.subr.mxu0 0.0
    %3356 = vmatpush1.msra.mxu0 0.0
    %3357 = vmatprep.subr.mxu0 0.0
    %3358 = vmatpush1.msra.mxu0 0.0
    %3359 = vmatprep.subr.mxu0 0.0
    %3360 = vmatpush1.msra.mxu0 0.0
    %3361 = vmatprep.subr.mxu0 0.0
    %3362 = vmatpush1.msra.mxu0 0.0
    %3363 = vmatprep.subr.mxu0 0.0
    %3364 = vmatpush1.msra.mxu0 0.0
    %3365 = vmatprep.subr.mxu0 0.0
    %3366 = vmatpush1.msra.mxu0 0.0
    %3367 = vmatprep.subr.mxu0 0.0
    %3368 = vmatpush1.msra.mxu0 0.0
    %3369 = vmatprep.subr.mxu0 0.0
    %3370 = vmatpush1.msra.mxu0 0.0
    %3371 = vmatprep.subr.mxu0 0.0
    %3372 = vmatpush1.msra.mxu0 0.0
    %3373 = vmatprep.subr.mxu0 0.0
    %3374 = vmatpush1.msra.mxu0 0.0
    %3375 = vmatprep.subr.mxu0 0.0
    %3376 = vmatpush1.msra.mxu0 0.0
    %3377 = vmatprep.subr.mxu0 0.0
    %3378 = vmatpush1.msra.mxu0 0.0
    %3379 = vmatprep.subr.mxu0 0.0
    %3380 = vmatpush1.msra.mxu0 0.0
    %3381 = vmatprep.subr.mxu0 0.0
    %3382 = vmatpush1.msra.mxu0 0.0
    %3383 = vmatprep.subr.mxu0 0.0
    %3384 = vmatpush1.msra.mxu0 0.0
    %3385 = vmatprep.subr.mxu0 0.0
    %3386 = vmatpush1.msra.mxu0 0.0
    %3387 = vmatprep.subr.mxu0 0.0
    %3388 = vmatpush1.msra.mxu0 0.0
    %3389 = vmatprep.subr.mxu0 0.0
    %3390 = vmatpush1.msra.mxu0 0.0
    %3391 = vmatprep.subr.mxu0 0.0
    %3392 = vmatpush1.msra.mxu0 0.0
    %3393 = vmatprep.subr.mxu0 0.0
    %3394 = vmatpush1.msra.mxu0 0.0
    %3395 = vmatprep.subr.mxu0 0.0
    %3396 = vmatpush1.msra.mxu0 0.0
    %3397 = vmatprep.mubr.f32.mxu0 0.0
    %3398 = vmatmul.mubr.f32.gmra.mrb[0].mxu0 %v3331
    %v3399 = vpop.f32.mrb[0].mxu0
    %v3400 = vadd.f32 0.0, %v3399
    %v3401 = vpop.f32.mrb[0].mxu0
    %3402 = vdwg.mxu0
    %v3403 = vadd.f32 %v2868, %v3020
    %v3404 = vadd.f32 %v2944, %v3096
    %v3405 = vadd.f32 %v3403, %v3172
    %v3406 = vadd.f32 %v3404, %v3248
    %v3407 = vadd.f32 %v3405, %v3324
    %v3408 = vadd.f32 %v3406, %v3400
    %v3409 = vld [vmem:[#allocation11 + $0xa] sm:$0x1]
    %v3410 = vlaneseq
    %v3411 = vshrl.u32 %v3410, 7
    %v3412 = vsub.s32 0, %v3411
    %v3413 = vrot.slane %v3409, %v3412
    %v3414 = vadd.f32 %v3407, %v3413
    %v3415 = vadd.f32 %v3408, %v3413
    %v3416 = vadd.f32 %v1960, %v3414
    %v3417 = vadd.f32 %v1961, %v3415
    %v3418 = vld [vmem:[#allocation11 + $0xd] sm:$0x1]
    %v3419 = vld [vmem:[#allocation11 + $0xe] sm:$0x1]
    %v3420 = vsel %vm120, %v3416, 0.0
    %3421 = vadd.xlane.f32.xlu0 %v3420
    %v3422 = vpop.xlane.xlu0 %3421
    %v3423 = vsel %vm120, %v3417, 0.0
    %3424 = vadd.xlane.f32.xlu0 %v3423
    %v3425 = vpop.xlane.xlu0 %3424
    %v3426 = vmul.f32 %v3422, %v210
    %v3427 = vmul.f32 %v3425, %v210
    %v3428 = vsub.f32 %v3416, %v3426
    %v3429 = vsub.f32 %v3417, %v3427
    %v3430 = vmul.f32 %v3428, %v3428
    %v3431 = vmul.f32 %v3429, %v3429
    %v3432 = vsel %vm120, %v3430, 0.0
    %3433 = vadd.xlane.f32.xlu0 %v3432
    %v3434 = vpop.xlane.xlu0 %3433
    %v3435 = vsel %vm120, %v3431, 0.0
    %3436 = vadd.xlane.f32.xlu0 %v3435
    %v3437 = vpop.xlane.xlu0 %3436
    %v3438 = vmul.f32 %v3434, %v210
    %v3439 = vmul.f32 %v3437, %v210
    %v3440 = vadd.f32 %v3438, 1e-05
    %v3441 = vadd.f32 %v3439, 1e-05
    %v3442 = vrsqrt.pop %v3440
    %v3443 = vrsqrt.pop %v3441
    %v3444 = vmul.f32 %v3428, %v3442
    %v3445 = vmul.f32 %v3429, %v3443
    %v3446 = vlaneseq
    %v3447 = vshrl.u32 %v3446, 7
    %v3448 = vsub.s32 0, %v3447
    %v3449 = vrot.slane %v3418, %v3448
    %v3450 = vmul.f32 %v3444, %v3449
    %v3451 = vmul.f32 %v3445, %v3449
    %v3452 = vlaneseq
    %v3453 = vshrl.u32 %v3452, 7
    %v3454 = vsub.s32 0, %v3453
    %v3455 = vrot.slane %v3419, %v3454
    %v3456 = vadd.f32 %v3450, %v3455
    %v3457 = vadd.f32 %v3451, %v3455
    %s3458 = scalar_lea.vmem [#allocation8], 32
    %v3459 = vld [vmem:[%s3458] sm:$0xff]
    %v3460 = vld [vmem:[%s3458 + $0x8] sm:$0xff]
    %v3461 = vld [vmem:[%s3458 + $0x10] sm:$0xff]
    %v3462 = vld [vmem:[%s3458 + $0x18] sm:$0xff]
    %v3463 = vld [vmem:[#allocation11 + $0xb] sm:$0x1]
    %v3464 = vlaneseq
    %v3465 = vshrl.u32 %v3464, 7
    %v3466 = vsub.s32 0, %v3465
    %v3467 = vrot.slane %v3463, %v3466
    %v3469 = vsel %vm120, %v3456, 0
    %v3472 = vsel %vm120, %v3457, 0
    %3474 = vmatprep.subr.mxu0 0.0
    %3475 = vmatpush1.msra.mxu0 %v3459
    %3476 = vmatprep.subr.mxu0 0.0
    %3477 = vmatpush1.msra.mxu0 %v3460
    %3478 = vmatprep.subr.mxu0 0.0
    %3479 = vmatpush1.msra.mxu0 %v3461
    %3480 = vmatprep.subr.mxu0 0.0
    %3481 = vmatpush1.msra.mxu0 %v3462
    %3482 = vmatprep.subr.mxu0 0.0
    %3483 = vmatpush1.msra.mxu0 0.0
    %3484 = vmatprep.subr.mxu0 0.0
    %3485 = vmatpush1.msra.mxu0 0.0
    %3486 = vmatprep.subr.mxu0 0.0
    %3487 = vmatpush1.msra.mxu0 0.0
    %3488 = vmatprep.subr.mxu0 0.0
    %3489 = vmatpush1.msra.mxu0 0.0
    %3490 = vmatprep.subr.mxu0 0.0
    %3491 = vmatpush1.msra.mxu0 0.0
    %3492 = vmatprep.subr.mxu0 0.0
    %3493 = vmatpush1.msra.mxu0 0.0
    %3494 = vmatprep.subr.mxu0 0.0
    %3495 = vmatpush1.msra.mxu0 0.0
    %3496 = vmatprep.subr.mxu0 0.0
    %3497 = vmatpush1.msra.mxu0 0.0
    %3498 = vmatprep.subr.mxu0 0.0
    %3499 = vmatpush1.msra.mxu0 0.0
    %3500 = vmatprep.subr.mxu0 0.0
    %3501 = vmatpush1.msra.mxu0 0.0
    %3502 = vmatprep.subr.mxu0 0.0
    %3503 = vmatpush1.msra.mxu0 0.0
    %3504 = vmatprep.subr.mxu0 0.0
    %3505 = vmatpush1.msra.mxu0 0.0
    %3506 = vmatprep.subr.mxu0 0.0
    %3507 = vmatpush1.msra.mxu0 0.0
    %3508 = vmatprep.subr.mxu0 0.0
    %3509 = vmatpush1.msra.mxu0 0.0
    %3510 = vmatprep.subr.mxu0 0.0
    %3511 = vmatpush1.msra.mxu0 0.0
    %3512 = vmatprep.subr.mxu0 0.0
    %3513 = vmatpush1.msra.mxu0 0.0
    %3514 = vmatprep.subr.mxu0 0.0
    %3515 = vmatpush1.msra.mxu0 0.0
    %3516 = vmatprep.subr.mxu0 0.0
    %3517 = vmatpush1.msra.mxu0 0.0
    %3518 = vmatprep.subr.mxu0 0.0
    %3519 = vmatpush1.msra.mxu0 0.0
    %3520 = vmatprep.subr.mxu0 0.0
    %3521 = vmatpush1.msra.mxu0 0.0
    %3522 = vmatprep.subr.mxu0 0.0
    %3523 = vmatpush1.msra.mxu0 0.0
    %3524 = vmatprep.subr.mxu0 0.0
    %3525 = vmatpush1.msra.mxu0 0.0
    %3526 = vmatprep.subr.mxu0 0.0
    %3527 = vmatpush1.msra.mxu0 0.0
    %3528 = vmatprep.subr.mxu0 0.0
    %3529 = vmatpush1.msra.mxu0 0.0
    %3530 = vmatprep.subr.mxu0 0.0
    %3531 = vmatpush1.msra.mxu0 0.0
    %3532 = vmatprep.subr.mxu0 0.0
    %3533 = vmatpush1.msra.mxu0 0.0
    %3534 = vmatprep.subr.mxu0 0.0
    %3535 = vmatpush1.msra.mxu0 0.0
    %3536 = vmatprep.subr.mxu0 0.0
    %3537 = vmatpush1.msra.mxu0 0.0
    %3538 = vmatprep.mubr.f32.mxu0 0.0
    %3539 = vmatmul.mubr.f32.gmra.mrb[0].mxu0 %v3469
    %v3540 = vpop.f32.mrb[0].mxu0
    %v3541 = vadd.f32 %v3467, %v3540
    %v3542 = vpop.f32.mrb[0].mxu0
    %3543 = vmatprep.mubr.f32.mxu0 0.0
    %3544 = vmatmul.mubr.f32.gmra.mrb[0].mxu0 %v3472
    %v3545 = vpop.f32.mrb[0].mxu0
    %v3546 = vadd.f32 %v3467, %v3545
    %v3547 = vpop.f32.mrb[0].mxu0
    %3548 = vdwg.mxu0
    %v3549 = vmax.f32 %v3541, 0.0
    %v3550 = vmax.f32 %v3546, 0.0
    %s3551 = scalar_lea.vmem [#allocation10], 32
    %v3552 = vld [vmem:[%s3551] sm:$0xff]
    %v3553 = vld [vmem:[%s3551 + $0x8] sm:$0xff]
    %v3554 = vld [vmem:[%s3551 + $0x10] sm:$0xff]
    %v3555 = vld [vmem:[%s3551 + $0x18] sm:$0xff]
    %v3556 = vld [vmem:[#allocation11 + $0xc] sm:$0x1]
    %v3557 = vlaneseq
    %v3558 = vshrl.u32 %v3557, 7
    %v3559 = vsub.s32 0, %v3558
    %v3560 = vrot.slane %v3556, %v3559
    %v3562 = vsel %vm120, %v3549, 0
    %v3565 = vsel %vm120, %v3550, 0
    %3567 = vmatprep.subr.mxu0 0.0
    %3568 = vmatpush1.msra.mxu0 %v3552
    %3569 = vmatprep.subr.mxu0 0.0
    %3570 = vmatpush1.msra.mxu0 %v3553
    %3571 = vmatprep.subr.mxu0 0.0
    %3572 = vmatpush1.msra.mxu0 %v3554
    %3573 = vmatprep.subr.mxu0 0.0
    %3574 = vmatpush1.msra.mxu0 %v3555
    %3575 = vmatprep.subr.mxu0 0.0
    %3576 = vmatpush1.msra.mxu0 0.0
    %3577 = vmatprep.subr.mxu0 0.0
    %3578 = vmatpush1.msra.mxu0 0.0
    %3579 = vmatprep.subr.mxu0 0.0
    %3580 = vmatpush1.msra.mxu0 0.0
    %3581 = vmatprep.subr.mxu0 0.0
    %3582 = vmatpush1.msra.mxu0 0.0
    %3583 = vmatprep.subr.mxu0 0.0
    %3584 = vmatpush1.msra.mxu0 0.0
    %3585 = vmatprep.subr.mxu0 0.0
    %3586 = vmatpush1.msra.mxu0 0.0
    %3587 = vmatprep.subr.mxu0 0.0
    %3588 = vmatpush1.msra.mxu0 0.0
    %3589 = vmatprep.subr.mxu0 0.0
    %3590 = vmatpush1.msra.mxu0 0.0
    %3591 = vmatprep.subr.mxu0 0.0
    %3592 = vmatpush1.msra.mxu0 0.0
    %3593 = vmatprep.subr.mxu0 0.0
    %3594 = vmatpush1.msra.mxu0 0.0
    %3595 = vmatprep.subr.mxu0 0.0
    %3596 = vmatpush1.msra.mxu0 0.0
    %3597 = vmatprep.subr.mxu0 0.0
    %3598 = vmatpush1.msra.mxu0 0.0
    %3599 = vmatprep.subr.mxu0 0.0
    %3600 = vmatpush1.msra.mxu0 0.0
    %3601 = vmatprep.subr.mxu0 0.0
    %3602 = vmatpush1.msra.mxu0 0.0
    %3603 = vmatprep.subr.mxu0 0.0
    %3604 = vmatpush1.msra.mxu0 0.0
    %3605 = vmatprep.subr.mxu0 0.0
    %3606 = vmatpush1.msra.mxu0 0.0
    %3607 = vmatprep.subr.mxu0 0.0
    %3608 = vmatpush1.msra.mxu0 0.0
    %3609 = vmatprep.subr.mxu0 0.0
    %3610 = vmatpush1.msra.mxu0 0.0
    %3611 = vmatprep.subr.mxu0 0.0
    %3612 = vmatpush1.msra.mxu0 0.0
    %3613 = vmatprep.subr.mxu0 0.0
    %3614 = vmatpush1.msra.mxu0 0.0
    %3615 = vmatprep.subr.mxu0 0.0
    %3616 = vmatpush1.msra.mxu0 0.0
    %3617 = vmatprep.subr.mxu0 0.0
    %3618 = vmatpush1.msra.mxu0 0.0
    %3619 = vmatprep.subr.mxu0 0.0
    %3620 = vmatpush1.msra.mxu0 0.0
    %3621 = vmatprep.subr.mxu0 0.0
    %3622 = vmatpush1.msra.mxu0 0.0
    %3623 = vmatprep.subr.mxu0 0.0
    %3624 = vmatpush1.msra.mxu0 0.0
    %3625 = vmatprep.subr.mxu0 0.0
    %3626 = vmatpush1.msra.mxu0 0.0
    %3627 = vmatprep.subr.mxu0 0.0
    %3628 = vmatpush1.msra.mxu0 0.0
    %3629 = vmatprep.subr.mxu0 0.0
    %3630 = vmatpush1.msra.mxu0 0.0
    %3631 = vmatprep.mubr.f32.mxu0 0.0
    %3632 = vmatmul.mubr.f32.gmra.mrb[0].mxu0 %v3562
    %v3633 = vpop.f32.mrb[0].mxu0
    %v3634 = vadd.f32 %v3560, %v3633
    %v3635 = vpop.f32.mrb[0].mxu0
    %3636 = vmatprep.mubr.f32.mxu0 0.0
    %3637 = vmatmul.mubr.f32.gmra.mrb[0].mxu0 %v3565
    %v3638 = vpop.f32.mrb[0].mxu0
    %v3639 = vadd.f32 %v3560, %v3638
    %v3640 = vpop.f32.mrb[0].mxu0
    %3641 = vdwg.mxu0
    %v3642 = vadd.f32 %v3456, %v3634
    %v3643 = vadd.f32 %v3457, %v3639
    %v3644 = vld [vmem:[#allocation11 + $0xf] sm:$0x1]
    %v3645 = vld [vmem:[#allocation11 + $0x10] sm:$0x1]
    %v3646 = vsel %vm120, %v3642, 0.0
    %3647 = vadd.xlane.f32.xlu0 %v3646
    %v3648 = vpop.xlane.xlu0 %3647
    %v3649 = vsel %vm120, %v3643, 0.0
    %3650 = vadd.xlane.f32.xlu0 %v3649
    %v3651 = vpop.xlane.xlu0 %3650
    %v3652 = vmul.f32 %v3648, %v210
    %v3653 = vmul.f32 %v3651, %v210
    %v3654 = vsub.f32 %v3642, %v3652
    %v3655 = vsub.f32 %v3643, %v3653
    %v3656 = vmul.f32 %v3654, %v3654
    %v3657 = vmul.f32 %v3655, %v3655
    %v3658 = vsel %vm120, %v3656, 0.0
    %3659 = vadd.xlane.f32.xlu0 %v3658
    %v3660 = vpop.xlane.xlu0 %3659
    %v3661 = vsel %vm120, %v3657, 0.0
    %3662 = vadd.xlane.f32.xlu0 %v3661
    %v3663 = vpop.xlane.xlu0 %3662
    %v3664 = vmul.f32 %v3660, %v210
    %v3665 = vmul.f32 %v3663, %v210
    %v3666 = vadd.f32 %v3664, 1e-05
    %v3667 = vadd.f32 %v3665, 1e-05
    %v3668 = vrsqrt.pop %v3666
    %v3669 = vrsqrt.pop %v3667
    %v3670 = vmul.f32 %v3654, %v3668
    %v3671 = vmul.f32 %v3655, %v3669
    %v3672 = vlaneseq
    %v3673 = vshrl.u32 %v3672, 7
    %v3674 = vsub.s32 0, %v3673
    %v3675 = vrot.slane %v3644, %v3674
    %v3676 = vmul.f32 %v3670, %v3675
    %v3677 = vmul.f32 %v3671, %v3675
    %v3678 = vlaneseq
    %v3679 = vshrl.u32 %v3678, 7
    %v3680 = vsub.s32 0, %v3679
    %v3681 = vrot.slane %v3645, %v3680
    %v3682 = vadd.f32 %v3676, %v3681
    %v3683 = vadd.f32 %v3677, %v3681
    %v3684 = vsel %vm120, %v3682, 0.0
    %v3685 = vrot.slane %v3684, 4
    %v3686 = vadd.f32 %v3684, %v3685
    %v3687 = vrot.slane %v3686, 2
    %v3688 = vadd.f32 %v3686, %v3687
    %v3689 = vrot.slane %v3688, 1
    %v3690 = vadd.f32 %v3688, %v3689
    %v3691 = vsel %vm120, %v3683, 0.0
    %v3692 = vrot.slane %v3691, 4
    %v3693 = vadd.f32 %v3691, %v3692
    %v3694 = vrot.slane %v3693, 2
    %v3695 = vadd.f32 %v3693, %v3694
    %v3696 = vrot.slane %v3695, 1
    %v3697 = vadd.f32 %v3695, %v3696
    %v3698 = vrcp.pop 8.0
    %v3699 = vmul.f32 %v3690, %v3698
    %v3700 = vmul.f32 %v3697, %v3698
    %vm3703 = vcmask 1041409
    %v3704 = vsel %vm3703, %v3700, %v3699
    %vm3706 = vcmask 254976
    %3707 = vst.msk [vmem:[#allocation13] sm:$0x3] %vm3706, %v3704
    // Predicated region
    $region54: #{tpu_custom_call.1} parent=1 // pred_check
      _
    $region55: #{tpu_custom_call.1} parent=1 // pred_check_branch
      %3709 = sbr.rel (0) target = $region57
    $region56: #{tpu_custom_call.1} parent=1 // pred_region
      %s3711 = ssub.s32 32, 32
      %3712 = vsyncadd [#allocation4], %s3711
      %s3714 = sshll.u32 [#allocation13], 4
      %s3715 = int_to_ptr.vmem [resolvable:$true] %s3714
      %3717 = dma.vmem_to_hbm [thread:$0]  %s3715, 32, %s7, [#allocation4]
    $region57: #{tpu_custom_call.1} parent=1 // pred_fallthru
      _
    // Predicated region
    $region58: #{tpu_custom_call.1} parent=1 // pred_check
      _
    $region59: #{tpu_custom_call.1} parent=1 // pred_check_branch
      %3719 = sbr.rel (0) target = $region61
    $region60: #{tpu_custom_call.1} parent=1 // pred_region
      %3720 = dma.done [#allocation4], 32
    $region61: #{tpu_custom_call.1} parent=1 // pred_fallthru
      _
    %3721 = vsyncpa [#allocation3], 1
    %3722 = vsyncpa [#allocation6], 1
    %3723 = vsyncpa [#allocation9], 1
    %3724 = vsyncpa [#allocation12], 1
    %3725 = vsyncpa [#allocation4], 1

</llo_original>
